<compile_context>
chip_gen: v7x
topology: tpu7x:2x2x1
jax: 0.10.0
libtpu: 0.0.40
codegen_flags: <defaults>
</compile_context>

<pallas_src>
import math
import jax
import jax.numpy as jnp
import numpy as np
from jax.experimental import pallas as pl
from jax.experimental.pallas import tpu as pltpu

# ----------------------- small, GPT-consistent config -----------------------
VOCAB     = 128
MAX_POS   = 64
HIDDEN    = 64
NUM_HEADS = 4
DEPTH     = 2
MLP_RATIO = 4.0
LN_EPS    = 1e-5
BATCH     = 2
SEQ       = 16
HEAD_DIM  = HIDDEN // NUM_HEADS
MLP_DIM   = int(HIDDEN * MLP_RATIO)
BNS       = BATCH * NUM_HEADS * SEQ              # flattened (batch*head*seq) rows = 128
NEG_INF   = -10000.0

LOG2_S = SEQ.bit_length() - 1
assert (1 << LOG2_S) == SEQ, "SEQ must be a power of two (flattened-attention mask uses shifts)"
assert NUM_HEADS & (NUM_HEADS - 1) == 0, "NUM_HEADS must be a power of two"


# ----------------------------- shared math -----------------------------------
def _layernorm(x, g, b, eps):
    mu = jnp.mean(x, axis=-1, keepdims=True)
    var = jnp.mean((x - mu) ** 2, axis=-1, keepdims=True)
    return (x - mu) * jax.lax.rsqrt(var + eps) * g + b


def _gelu(x):
    # exact (erf) GELU, matching torch.nn.functional.gelu default
    return 0.5 * x * (1.0 + jax.lax.erf(x * (1.0 / math.sqrt(2.0))))


# ----------------------------- fused Pallas kernel ----------------------------
def gpt_fused_kernel(ids_ref, mask_ref, wte_ref, wpe_ref,
                     ln1_g, ln1_b, wqkv, bqkv, wproj, bproj,
                     ln2_g, ln2_b, w1, b1, w2, b2,
                     lnf_g, lnf_b, wte_t,
                     out_ref,
                     x_sc, bias_sc):
    """One transformer layer per grid step; embedding/bias built at step 0,
    final LN + tied LM head at the last step. Activations live in VMEM scratch."""
    B, S, H, NH, HD = BATCH, SEQ, HIDDEN, NUM_HEADS, HEAD_DIM
    d = pl.program_id(0)

    # ---- step 0: fused embedding (one-hot matmul) + positional add, and the
    #      (B*NH*S, B*NH*S) additive attention bias, built once and kept in VMEM.
    @pl.when(d == 0)
    def _init():
        ids = ids_ref[...]                                                # (B*S, 1) int32
        vocab_iota = jax.lax.broadcasted_iota(jnp.int32, (B * S, VOCAB), 1)
        one_hot = (ids == vocab_iota).astype(jnp.float32)                 # (B*S, V)
        emb = jnp.dot(one_hot, wte_ref[...],
                      preferred_element_type=jnp.float32)                 # (B*S, H)
        pos = wpe_ref[0:S, :]                                             # (S, H)
        x_sc[...] = (emb.reshape(B, S, H) + pos[None, :, :]).reshape(B * S, H)

        rows = jax.lax.broadcasted_iota(jnp.int32, (BNS, BNS), 0)
        cols = jax.lax.broadcasted_iota(jnp.int32, (BNS, BNS), 1)
        same_block = (rows >> LOG2_S) == (cols >> LOG2_S)                 # same (batch, head)
        causal = (cols & (S - 1)) <= (rows & (S - 1))
        # key-padding bias per flattened column: each batch row repeated NUM_HEADS times
        kb_parts = []
        for b in range(B):
            kb_b = (1.0 - mask_ref[b:b + 1, :]) * NEG_INF                 # (1, S)
            kb_parts.extend([kb_b] * NH)
        kb_row = jnp.concatenate(kb_parts, axis=1)                        # (1, BNS)
        # in-block causal: key-pad bias; everything else: -1e4 (exp underflows to 0)
        bias_sc[...] = jnp.where(same_block & causal, kb_row, NEG_INF)

    x = x_sc[...]                                                         # (B*S, H)
    scale = 1.0 / math.sqrt(HD)

    # ------------------------- attention branch (pre-LN) -------------------------
    h = _layernorm(x, ln1_g[...], ln1_b[...], LN_EPS)
    qkv = jnp.dot(h, wqkv[...], preferred_element_type=jnp.float32) + bqkv[...]   # (B*S, 3H)

    def heads_to_rows(off):
        # (B*S, NH*HD) slab at lane offset `off` -> (B*NH*S, HD), rows ordered (b, h, s)
        parts = [qkv[:, off + hh * HD: off + (hh + 1) * HD].reshape(B, 1, S, HD)
                 for hh in range(NH)]
        return jnp.concatenate(parts, axis=1).reshape(BNS, HD)

    qf = heads_to_rows(0)
    kf = heads_to_rows(H)
    vf = heads_to_rows(2 * H)

    # one lane-dense (128,128) score matmul per layer
    s = jax.lax.dot_general(qf, kf, (((1,), (1,)), ((), ())),
                            preferred_element_type=jnp.float32) * scale   # (BNS, BNS)
    s = s + bias_sc[...]
    s = s - jnp.max(s, axis=-1, keepdims=True)
    p = jnp.exp(s)
    p = p * pl.reciprocal(jnp.sum(p, axis=-1, keepdims=True), approx=True)
    o = jnp.dot(p, vf, preferred_element_type=jnp.float32)                # (BNS, HD)

    o4 = o.reshape(B, NH, S, HD)
    attn = jnp.concatenate([o4[:, hh] for hh in range(NH)], axis=-1)      # (B, S, H)
    attn = attn.reshape(B * S, H)
    attn = jnp.dot(attn, wproj[...], preferred_element_type=jnp.float32) + bproj[...]
    x = x + attn

    # ----------------------------- MLP branch (pre-LN) ---------------------------
    h2 = _layernorm(x, ln2_g[...], ln2_b[...], LN_EPS)
    m = jnp.dot(h2, w1[...], preferred_element_type=jnp.float32) + b1[...]
    m = _gelu(m)
    m = jnp.dot(m, w2[...], preferred_element_type=jnp.float32) + b2[...]
    x = x + m
    x_sc[...] = x                                                         # carry to next layer

    # -------- final LayerNorm + tied LM head (lane-dense output: VOCAB == 128) ---
    @pl.when(d == DEPTH - 1)
    def _final():
        hf = _layernorm(x, lnf_g[...], lnf_b[...], LN_EPS)
        logits = jnp.dot(hf, wte_t[...], preferred_element_type=jnp.float32)  # (B*S, V)
        out_ref[...] = logits.reshape(B, S, VOCAB)


# ----------------------------- pallas_call wrapper ----------------------------
def _full_spec(shape):
    nd = len(shape)
    return pl.BlockSpec(shape, lambda d: (0,) * nd)


def _layer_spec(shape):
    nd = len(shape)
    return pl.BlockSpec((None,) + shape, lambda d: (d,) + (0,) * nd)


@jax.jit
def gpt_forward(input_ids, attention_mask, params):
    B, S = input_ids.shape
    ids_col = input_ids.reshape(B * S, 1).astype(jnp.int32)     # bitcast-style reshape only

    in_specs = [
        _full_spec((B * S, 1)),                   # input_ids (column vector)
        _full_spec((B, S)),                       # attention_mask
        _full_spec((VOCAB, HIDDEN)),              # wte
        _full_spec((MAX_POS, HIDDEN)),            # wpe
        _layer_spec((1, HIDDEN)),                 # ln1_g
        _layer_spec((1, HIDDEN)),                 # ln1_b
        _layer_spec((HIDDEN, 3 * HIDDEN)),        # wqkv
        _layer_spec((1, 3 * HIDDEN)),             # bqkv
        _layer_spec((HIDDEN, HIDDEN)),            # wproj
        _layer_spec((1, HIDDEN)),                 # bproj
        _layer_spec((1, HIDDEN)),                 # ln2_g
        _layer_spec((1, HIDDEN)),                 # ln2_b
        _layer_spec((HIDDEN, MLP_DIM)),           # w1
        _layer_spec((1, MLP_DIM)),                # b1
        _layer_spec((MLP_DIM, HIDDEN)),           # w2
        _layer_spec((1, HIDDEN)),                 # b2
        _full_spec((1, HIDDEN)),                  # ln_f_g
        _full_spec((1, HIDDEN)),                  # ln_f_b
        _full_spec((HIDDEN, VOCAB)),              # wte_t (tied LM head, pre-transposed)
    ]
    out_spec = pl.BlockSpec((B, S, VOCAB), lambda d: (0, 0, 0))

    return pl.pallas_call(
        gpt_fused_kernel,
        out_shape=jax.ShapeDtypeStruct((B, S, VOCAB), jnp.float32),
        grid_spec=pltpu.PrefetchScalarGridSpec(
            num_scalar_prefetch=0,
            grid=(DEPTH,),
            in_specs=in_specs,
            out_specs=out_spec,
            scratch_shapes=[
                pltpu.VMEM((B * S, HIDDEN), jnp.float32),    # resident activations
                pltpu.VMEM((BNS, BNS), jnp.float32),         # additive attention bias
            ],
        ),
        compiler_params=pltpu.CompilerParams(
            dimension_semantics=("arbitrary",)),
    )(ids_col, attention_mask,
      params['wte'], params['wpe'],
      params['ln1_g'], params['ln1_b'], params['wqkv'], params['bqkv'],
      params['wproj'], params['bproj'],
      params['ln2_g'], params['ln2_b'], params['w1'], params['b1'],
      params['w2'], params['b2'],
      params['ln_f_g'], params['ln_f_b'], params['wte_t'])


# ----------------------------- pure-JAX reference ----------------------------
def ref_forward(input_ids, attention_mask, params):
    B, S = input_ids.shape
    x = params['wte'][input_ids] + params['wpe'][jnp.arange(S)][None, :, :]
    bias = ((1.0 - attention_mask.astype(jnp.float32)) * -10000.0)[:, None, None, :]
    causal = (jnp.arange(S)[None, :] <= jnp.arange(S)[:, None])
    for d in range(DEPTH):
        h = _layernorm(x, params['ln1_g'][d], params['ln1_b'][d], LN_EPS)
        qkv = h @ params['wqkv'][d] + params['bqkv'][d]
        q, k, v = jnp.split(qkv, 3, axis=-1)
        sp = lambda t: t.reshape(B, S, NUM_HEADS, HEAD_DIM).transpose(0, 2, 1, 3)
        q, k, v = sp(q), sp(k), sp(v)
        s = jnp.einsum('bhqd,bhkd->bhqk', q, k) / math.sqrt(HEAD_DIM)
        s = jnp.where(causal[None, None], s, -10000.0) + bias
        pa = jax.nn.softmax(s, axis=-1)
        o = jnp.einsum('bhqk,bhkd->bhqd', pa, v).transpose(0, 2, 1, 3).reshape(B, S, HIDDEN)
        x = x + (o @ params['wproj'][d] + params['bproj'][d])
        h2 = _layernorm(x, params['ln2_g'][d], params['ln2_b'][d], LN_EPS)
        x = x + (_gelu(h2 @ params['w1'][d] + params['b1'][d]) @ params['w2'][d]
                 + params['b2'][d])
    h = _layernorm(x, params['ln_f_g'], params['ln_f_b'], LN_EPS)
    return h @ params['wte'].T


# ----------------------------- parameter init --------------------------------
def init_params(key):
    def nrm(k, shape, std=0.02):
        return (std * jax.random.normal(k, shape)).astype(jnp.float32)

    keys = jax.random.split(key, 2 + DEPTH)
    wte = nrm(keys[0], (VOCAB, HIDDEN))
    params = {
        'wte': wte,
        'wte_t': wte.T,                                   # tied LM head, transposed ONCE at init
        'wpe': nrm(keys[1], (MAX_POS, HIDDEN)),
        'ln_f_g': jnp.ones((1, HIDDEN), jnp.float32),
        'ln_f_b': jnp.zeros((1, HIDDEN), jnp.float32),
    }
    blocks = []
    for d in range(DEPTH):
        bk = jax.random.split(keys[2 + d], 8)
        blocks.append({
            'ln1_g': jnp.ones((1, HIDDEN), jnp.float32),
            'ln1_b': jnp.zeros((1, HIDDEN), jnp.float32),
            'wqkv': nrm(bk[0], (HIDDEN, 3 * HIDDEN)),
            'bqkv': nrm(bk[1], (1, 3 * HIDDEN)),
            'wproj': nrm(bk[2], (HIDDEN, HIDDEN)),
            'bproj': nrm(bk[3], (1, HIDDEN)),
            'ln2_g': jnp.ones((1, HIDDEN), jnp.float32),
            'ln2_b': jnp.zeros((1, HIDDEN), jnp.float32),
            'w1': nrm(bk[4], (HIDDEN, MLP_DIM)),
            'b1': nrm(bk[5], (1, MLP_DIM)),
            'w2': nrm(bk[6], (MLP_DIM, HIDDEN)),
            'b2': nrm(bk[7], (1, HIDDEN)),
        })
    # Per-layer weights pre-stacked along a leading DEPTH axis (hoisted out of the
    # per-call path; the DEPTH grid streams one layer slice per step).
    for name in blocks[0]:
        params[name] = jnp.stack([blk[name] for blk in blocks], axis=0)
    return params


# ----------------------------------- main -------------------------------------
if __name__ == "__main__":
    root = jax.random.PRNGKey(0)
    k_params, k_ids = jax.random.split(root)
    params = init_params(k_params)

    input_ids = jax.random.randint(k_ids, (BATCH, SEQ), 0, VOCAB, dtype=jnp.int32)
    # attention_mask: second sequence has its last 4 tokens padded out.
    attention_mask = jnp.stack([
        jnp.ones((SEQ,), jnp.float32),
        (jnp.arange(SEQ) < SEQ - 4).astype(jnp.float32),
    ], axis=0)

    logits = gpt_forward(input_ids, attention_mask, params)
    jax.block_until_ready(logits)
    assert logits.shape == (BATCH, SEQ, VOCAB) and logits.dtype == jnp.float32

    ref = ref_forward(input_ids, attention_mask, params)
    np.testing.assert_allclose(np.asarray(logits), np.asarray(ref),
                               rtol=1e-2, atol=1e-2)
    print("KERNEL_OK")
</pallas_src>

<mosaic_0001>
module attributes {stable_mosaic.version = 11 : i64} {
  func.func @gpt_fused_kernel(%arg0: i32, %arg1: memref<32x1xi32, #tpu.memory_space<vmem>>, %arg2: memref<2x16xf32, #tpu.memory_space<vmem>>, %arg3: memref<128x64xf32, #tpu.memory_space<vmem>>, %arg4: memref<64x64xf32, #tpu.memory_space<vmem>>, %arg5: memref<1x1x64xf32, #tpu.memory_space<vmem>>, %arg6: memref<1x1x64xf32, #tpu.memory_space<vmem>>, %arg7: memref<1x64x192xf32, #tpu.memory_space<vmem>>, %arg8: memref<1x1x192xf32, #tpu.memory_space<vmem>>, %arg9: memref<1x64x64xf32, #tpu.memory_space<vmem>>, %arg10: memref<1x1x64xf32, #tpu.memory_space<vmem>>, %arg11: memref<1x1x64xf32, #tpu.memory_space<vmem>>, %arg12: memref<1x1x64xf32, #tpu.memory_space<vmem>>, %arg13: memref<1x64x256xf32, #tpu.memory_space<vmem>>, %arg14: memref<1x1x256xf32, #tpu.memory_space<vmem>>, %arg15: memref<1x256x64xf32, #tpu.memory_space<vmem>>, %arg16: memref<1x1x64xf32, #tpu.memory_space<vmem>>, %arg17: memref<1x64xf32, #tpu.memory_space<vmem>>, %arg18: memref<1x64xf32, #tpu.memory_space<vmem>>, %arg19: memref<64x128xf32, #tpu.memory_space<vmem>>, %arg20: memref<2x16x128xf32, #tpu.memory_space<vmem>>, %arg21: memref<32x64xf32, #tpu.memory_space<vmem>>, %arg22: memref<128x128xf32, #tpu.memory_space<vmem>>) attributes {dimension_semantics = [#tpu.dimension_semantics<arbitrary>], iteration_bounds = array<i64: 2>, scalar_prefetch = 0 : i64, scratch_operands = 2 : i64, tpu.core_type = #tpu.core_type<tc>, window_params = [{pipeline_mode = #tpu.pipeline_mode<synchronous>, transform_indices = @transform_0, window_bounds = array<i64: 32, 1>}, {pipeline_mode = #tpu.pipeline_mode<synchronous>, transform_indices = @transform_1, window_bounds = array<i64: 2, 16>}, {pipeline_mode = #tpu.pipeline_mode<synchronous>, transform_indices = @transform_2, window_bounds = array<i64: 128, 64>}, {pipeline_mode = #tpu.pipeline_mode<synchronous>, transform_indices = @transform_3, window_bounds = array<i64: 64, 64>}, {transform_indices = @transform_4, window_bounds = array<i64: 1, 1, 64>}, {transform_indices = @transform_5, window_bounds = array<i64: 1, 1, 64>}, {transform_indices = @transform_6, window_bounds = array<i64: 1, 64, 192>}, {transform_indices = @transform_7, window_bounds = array<i64: 1, 1, 192>}, {transform_indices = @transform_8, window_bounds = array<i64: 1, 64, 64>}, {transform_indices = @transform_9, window_bounds = array<i64: 1, 1, 64>}, {transform_indices = @transform_10, window_bounds = array<i64: 1, 1, 64>}, {transform_indices = @transform_11, window_bounds = array<i64: 1, 1, 64>}, {transform_indices = @transform_12, window_bounds = array<i64: 1, 64, 256>}, {transform_indices = @transform_13, window_bounds = array<i64: 1, 1, 256>}, {transform_indices = @transform_14, window_bounds = array<i64: 1, 256, 64>}, {transform_indices = @transform_15, window_bounds = array<i64: 1, 1, 64>}, {pipeline_mode = #tpu.pipeline_mode<synchronous>, transform_indices = @transform_16, window_bounds = array<i64: 1, 64>}, {pipeline_mode = #tpu.pipeline_mode<synchronous>, transform_indices = @transform_17, window_bounds = array<i64: 1, 64>}, {pipeline_mode = #tpu.pipeline_mode<synchronous>, transform_indices = @transform_18, window_bounds = array<i64: 64, 128>}, {pipeline_mode = #tpu.pipeline_mode<synchronous>, transform_indices = @transform_19, window_bounds = array<i64: 2, 16, 128>}]} {
    %c0_i32 = arith.constant 0 : i32
    %0 = arith.cmpi eq, %arg0, %c0_i32 : i32
    %1 = arith.extui %0 : i1 to i32
    %c0_i32_0 = arith.constant 0 : i32
    %2 = arith.cmpi ne, %1, %c0_i32_0 : i32
    scf.if %2 {
      %c0_64 = arith.constant 0 : index
      %c0_65 = arith.constant 0 : index
      %155 = vector.load %arg1[%c0_64, %c0_65] : memref<32x1xi32, #tpu.memory_space<vmem>>, vector<32x1xi32>
      %156 = tpu.iota {dimensions = array<i32: 1>} : vector<32x128xi32>
      %157 = vector.broadcast %155 : vector<32x1xi32> to vector<32x128xi32>
      %158 = arith.cmpi eq, %157, %156 : vector<32x128xi32>
      %159 = arith.extui %158 : vector<32x128xi1> to vector<32x128xi32>
      %160 = arith.sitofp %159 : vector<32x128xi32> to vector<32x128xf32>
      %c0_66 = arith.constant 0 : index
      %c0_67 = arith.constant 0 : index
      %161 = vector.load %arg3[%c0_66, %c0_67] : memref<128x64xf32, #tpu.memory_space<vmem>>, vector<128x64xf32>
      %cst_68 = arith.constant dense<0.000000e+00> : vector<32x64xf32>
      %162 = tpu.matmul %160, %161, %cst_68 {dimension_numbers = #tpu.dot_dimension_numbers<[1], [0], [0], [1], [0, 0, 1, 1], [], []>} : vector<32x128xf32>, vector<128x64xf32>, vector<32x64xf32> -> vector<32x64xf32>
      %c0_69 = arith.constant 0 : index
      %c0_70 = arith.constant 0 : index
      %163 = vector.load %arg4[%c0_69, %c0_70] : memref<64x64xf32, #tpu.memory_space<vmem>>, vector<16x64xf32>
      %164 = vector.shape_cast %162 : vector<32x64xf32> to vector<2x16x64xf32>
      %165 = vector.shape_cast %163 : vector<16x64xf32> to vector<1x16x64xf32>
      %166 = vector.broadcast %165 : vector<1x16x64xf32> to vector<2x16x64xf32>
      %167 = arith.addf %164, %166 : vector<2x16x64xf32>
      %168 = vector.shape_cast %167 : vector<2x16x64xf32> to vector<32x64xf32>
      %c0_71 = arith.constant 0 : index
      %c0_72 = arith.constant 0 : index
      %169 = vector.load %arg21[%c0_71, %c0_72] : memref<32x64xf32, #tpu.memory_space<vmem>>, vector<32x64xf32>
      tpu.vector_store %arg21[%c0_71, %c0_72], %168 {strides = array<i32>} : memref<32x64xf32, #tpu.memory_space<vmem>>, vector<32x64xf32>,
      %170 = tpu.iota {dimensions = array<i32: 0>} : vector<128x128xi32>
      %171 = tpu.iota {dimensions = array<i32: 1>} : vector<128x128xi32>
      %c4_i32 = arith.constant 4 : i32
      %172 = vector.broadcast %c4_i32 : i32 to vector<128x128xi32>
      %173 = arith.shrsi %170, %172 : vector<128x128xi32>
      %c4_i32_73 = arith.constant 4 : i32
      %174 = vector.broadcast %c4_i32_73 : i32 to vector<128x128xi32>
      %175 = arith.shrsi %171, %174 : vector<128x128xi32>
      %176 = arith.cmpi eq, %173, %175 : vector<128x128xi32>
      %c15_i32 = arith.constant 15 : i32
      %177 = vector.broadcast %c15_i32 : i32 to vector<128x128xi32>
      %178 = arith.andi %171, %177 : vector<128x128xi32>
      %c15_i32_74 = arith.constant 15 : i32
      %179 = vector.broadcast %c15_i32_74 : i32 to vector<128x128xi32>
      %180 = arith.andi %170, %179 : vector<128x128xi32>
      %181 = arith.cmpi sle, %178, %180 : vector<128x128xi32>
      %c0_75 = arith.constant 0 : index
      %c0_76 = arith.constant 0 : index
      %182 = vector.load %arg2[%c0_75, %c0_76] : memref<2x16xf32, #tpu.memory_space<vmem>>, vector<1x16xf32>
      %cst_77 = arith.constant 1.000000e+00 : f32
      %183 = vector.broadcast %cst_77 : f32 to vector<1x16xf32>
      %184 = arith.subf %183, %182 : vector<1x16xf32>
      %cst_78 = arith.constant -1.000000e+04 : f32
      %185 = vector.broadcast %cst_78 : f32 to vector<1x16xf32>
      %186 = arith.mulf %184, %185 : vector<1x16xf32>
      %c1 = arith.constant 1 : index
      %c0_79 = arith.constant 0 : index
      %187 = vector.load %arg2[%c1, %c0_79] : memref<2x16xf32, #tpu.memory_space<vmem>>, vector<1x16xf32>
      %cst_80 = arith.constant 1.000000e+00 : f32
      %188 = vector.broadcast %cst_80 : f32 to vector<1x16xf32>
      %189 = arith.subf %188, %187 : vector<1x16xf32>
      %cst_81 = arith.constant -1.000000e+04 : f32
      %190 = vector.broadcast %cst_81 : f32 to vector<1x16xf32>
      %191 = arith.mulf %189, %190 : vector<1x16xf32>
      %192 = tpu.concatenate %186, %186, %186, %186, %191, %191, %191, %191 in 1 : vector<1x16xf32>, vector<1x16xf32>, vector<1x16xf32>, vector<1x16xf32>, vector<1x16xf32>, vector<1x16xf32>, vector<1x16xf32>, vector<1x16xf32> -> vector<1x128xf32>
      %193 = arith.andi %176, %181 : vector<128x128xi1>
      %cst_82 = arith.constant -1.000000e+04 : f32
      %194 = vector.shape_cast %192 : vector<1x128xf32> to vector<1x128xf32>
      %195 = vector.broadcast %194 : vector<1x128xf32> to vector<128x128xf32>
      %196 = vector.broadcast %cst_82 : f32 to vector<128x128xf32>
      %197 = arith.select %193, %195, %196 : vector<128x128xi1>, vector<128x128xf32>
      %c0_83 = arith.constant 0 : index
      %c0_84 = arith.constant 0 : index
      %198 = vector.load %arg22[%c0_83, %c0_84] : memref<128x128xf32, #tpu.memory_space<vmem>>, vector<128x128xf32>
      tpu.vector_store %arg22[%c0_83, %c0_84], %197 {strides = array<i32>} : memref<128x128xf32, #tpu.memory_space<vmem>>, vector<128x128xf32>,
    } else {
    }
    %c0 = arith.constant 0 : index
    %c0_1 = arith.constant 0 : index
    %3 = vector.load %arg21[%c0, %c0_1] : memref<32x64xf32, #tpu.memory_space<vmem>>, vector<32x64xf32>
    %c0_2 = arith.constant 0 : index
    %c0_3 = arith.constant 0 : index
    %c0_4 = arith.constant 0 : index
    %4 = vector.load %arg5[%c0_2, %c0_3, %c0_4] : memref<1x1x64xf32, #tpu.memory_space<vmem>>, vector<1x1x64xf32>
    %5 = vector.shape_cast %4 : vector<1x1x64xf32> to vector<1x64xf32>
    %c0_5 = arith.constant 0 : index
    %c0_6 = arith.constant 0 : index
    %c0_7 = arith.constant 0 : index
    %6 = vector.load %arg6[%c0_5, %c0_6, %c0_7] : memref<1x1x64xf32, #tpu.memory_space<vmem>>, vector<1x1x64xf32>
    %7 = vector.shape_cast %6 : vector<1x1x64xf32> to vector<1x64xf32>
    %cst = arith.constant dense<0.000000e+00> : vector<32xf32>
    %8 = vector.multi_reduction <add>, %3, %cst [1] : vector<32x64xf32> to vector<32xf32>
    %9 = vector.shape_cast %8 : vector<32xf32> to vector<32x1xf32>
    %cst_8 = arith.constant 6.400000e+01 : f32
    %10 = vector.broadcast %cst_8 : f32 to vector<32x1xf32>
    %11 = arith.divf %9, %10 : vector<32x1xf32>
    %12 = vector.broadcast %11 : vector<32x1xf32> to vector<32x64xf32>
    %13 = arith.subf %3, %12 : vector<32x64xf32>
    %14 = arith.mulf %13, %13 : vector<32x64xf32>
    %cst_9 = arith.constant dense<0.000000e+00> : vector<32xf32>
    %15 = vector.multi_reduction <add>, %14, %cst_9 [1] : vector<32x64xf32> to vector<32xf32>
    %16 = vector.shape_cast %15 : vector<32xf32> to vector<32x1xf32>
    %cst_10 = arith.constant 6.400000e+01 : f32
    %17 = vector.broadcast %cst_10 : f32 to vector<32x1xf32>
    %18 = arith.divf %16, %17 : vector<32x1xf32>
    %19 = vector.broadcast %11 : vector<32x1xf32> to vector<32x64xf32>
    %20 = arith.subf %3, %19 : vector<32x64xf32>
    %cst_11 = arith.constant 9.99999974E-6 : f32
    %21 = vector.broadcast %cst_11 : f32 to vector<32x1xf32>
    %22 = arith.addf %18, %21 : vector<32x1xf32>
    %23 = math.rsqrt %22 : vector<32x1xf32>
    %24 = vector.broadcast %23 : vector<32x1xf32> to vector<32x64xf32>
    %25 = arith.mulf %20, %24 : vector<32x64xf32>
    %26 = vector.broadcast %5 : vector<1x64xf32> to vector<32x64xf32>
    %27 = arith.mulf %25, %26 : vector<32x64xf32>
    %28 = vector.broadcast %7 : vector<1x64xf32> to vector<32x64xf32>
    %29 = arith.addf %27, %28 : vector<32x64xf32>
    %c0_12 = arith.constant 0 : index
    %c0_13 = arith.constant 0 : index
    %c0_14 = arith.constant 0 : index
    %30 = vector.load %arg7[%c0_12, %c0_13, %c0_14] : memref<1x64x192xf32, #tpu.memory_space<vmem>>, vector<1x64x192xf32>
    %31 = vector.shape_cast %30 : vector<1x64x192xf32> to vector<64x192xf32>
    %cst_15 = arith.constant dense<0.000000e+00> : vector<32x192xf32>
    %32 = tpu.matmul %29, %31, %cst_15 {dimension_numbers = #tpu.dot_dimension_numbers<[1], [0], [0], [1], [0, 0, 1, 1], [], []>} : vector<32x64xf32>, vector<64x192xf32>, vector<32x192xf32> -> vector<32x192xf32>
    %c0_16 = arith.constant 0 : index
    %c0_17 = arith.constant 0 : index
    %c0_18 = arith.constant 0 : index
    %33 = vector.load %arg8[%c0_16, %c0_17, %c0_18] : memref<1x1x192xf32, #tpu.memory_space<vmem>>, vector<1x1x192xf32>
    %34 = vector.shape_cast %33 : vector<1x1x192xf32> to vector<1x192xf32>
    %35 = vector.broadcast %34 : vector<1x192xf32> to vector<32x192xf32>
    %36 = arith.addf %32, %35 : vector<32x192xf32>
    %37 = vector.extract_strided_slice %36 {offsets = [0, 0], sizes = [32, 16], strides = [1, 1]} : vector<32x192xf32> to vector<32x16xf32>
    %38 = vector.shape_cast %37 : vector<32x16xf32> to vector<2x1x16x16xf32>
    %39 = vector.extract_strided_slice %36 {offsets = [0, 16], sizes = [32, 16], strides = [1, 1]} : vector<32x192xf32> to vector<32x16xf32>
    %40 = vector.shape_cast %39 : vector<32x16xf32> to vector<2x1x16x16xf32>
    %41 = vector.extract_strided_slice %36 {offsets = [0, 32], sizes = [32, 16], strides = [1, 1]} : vector<32x192xf32> to vector<32x16xf32>
    %42 = vector.shape_cast %41 : vector<32x16xf32> to vector<2x1x16x16xf32>
    %43 = vector.extract_strided_slice %36 {offsets = [0, 48], sizes = [32, 16], strides = [1, 1]} : vector<32x192xf32> to vector<32x16xf32>
    %44 = vector.shape_cast %43 : vector<32x16xf32> to vector<2x1x16x16xf32>
    %45 = tpu.concatenate %38, %40, %42, %44 in 1 : vector<2x1x16x16xf32>, vector<2x1x16x16xf32>, vector<2x1x16x16xf32>, vector<2x1x16x16xf32> -> vector<2x4x16x16xf32>
    %46 = vector.shape_cast %45 : vector<2x4x16x16xf32> to vector<128x16xf32>
    %47 = vector.extract_strided_slice %36 {offsets = [0, 64], sizes = [32, 16], strides = [1, 1]} : vector<32x192xf32> to vector<32x16xf32>
    %48 = vector.shape_cast %47 : vector<32x16xf32> to vector<2x1x16x16xf32>
    %49 = vector.extract_strided_slice %36 {offsets = [0, 80], sizes = [32, 16], strides = [1, 1]} : vector<32x192xf32> to vector<32x16xf32>
    %50 = vector.shape_cast %49 : vector<32x16xf32> to vector<2x1x16x16xf32>
    %51 = vector.extract_strided_slice %36 {offsets = [0, 96], sizes = [32, 16], strides = [1, 1]} : vector<32x192xf32> to vector<32x16xf32>
    %52 = vector.shape_cast %51 : vector<32x16xf32> to vector<2x1x16x16xf32>
    %53 = vector.extract_strided_slice %36 {offsets = [0, 112], sizes = [32, 16], strides = [1, 1]} : vector<32x192xf32> to vector<32x16xf32>
    %54 = vector.shape_cast %53 : vector<32x16xf32> to vector<2x1x16x16xf32>
    %55 = tpu.concatenate %48, %50, %52, %54 in 1 : vector<2x1x16x16xf32>, vector<2x1x16x16xf32>, vector<2x1x16x16xf32>, vector<2x1x16x16xf32> -> vector<2x4x16x16xf32>
    %56 = vector.shape_cast %55 : vector<2x4x16x16xf32> to vector<128x16xf32>
    %57 = vector.extract_strided_slice %36 {offsets = [0, 128], sizes = [32, 16], strides = [1, 1]} : vector<32x192xf32> to vector<32x16xf32>
    %58 = vector.shape_cast %57 : vector<32x16xf32> to vector<2x1x16x16xf32>
    %59 = vector.extract_strided_slice %36 {offsets = [0, 144], sizes = [32, 16], strides = [1, 1]} : vector<32x192xf32> to vector<32x16xf32>
    %60 = vector.shape_cast %59 : vector<32x16xf32> to vector<2x1x16x16xf32>
    %61 = vector.extract_strided_slice %36 {offsets = [0, 160], sizes = [32, 16], strides = [1, 1]} : vector<32x192xf32> to vector<32x16xf32>
    %62 = vector.shape_cast %61 : vector<32x16xf32> to vector<2x1x16x16xf32>
    %63 = vector.extract_strided_slice %36 {offsets = [0, 176], sizes = [32, 16], strides = [1, 1]} : vector<32x192xf32> to vector<32x16xf32>
    %64 = vector.shape_cast %63 : vector<32x16xf32> to vector<2x1x16x16xf32>
    %65 = tpu.concatenate %58, %60, %62, %64 in 1 : vector<2x1x16x16xf32>, vector<2x1x16x16xf32>, vector<2x1x16x16xf32>, vector<2x1x16x16xf32> -> vector<2x4x16x16xf32>
    %66 = vector.shape_cast %65 : vector<2x4x16x16xf32> to vector<128x16xf32>
    %cst_19 = arith.constant dense<0.000000e+00> : vector<128x128xf32>
    %67 = tpu.matmul %46, %56, %cst_19 {dimension_numbers = #tpu.dot_dimension_numbers<[1], [1], [0], [0], [0, 0, 1, 0], [], []>} : vector<128x16xf32>, vector<128x16xf32>, vector<128x128xf32> -> vector<128x128xf32>
    %cst_20 = arith.constant 2.500000e-01 : f32
    %68 = vector.broadcast %cst_20 : f32 to vector<128x128xf32>
    %69 = arith.mulf %67, %68 : vector<128x128xf32>
    %c0_21 = arith.constant 0 : index
    %c0_22 = arith.constant 0 : index
    %70 = vector.load %arg22[%c0_21, %c0_22] : memref<128x128xf32, #tpu.memory_space<vmem>>, vector<128x128xf32>
    %71 = arith.addf %69, %70 : vector<128x128xf32>
    %cst_23 = arith.constant dense<0xFF800000> : vector<128xf32>
    %72 = vector.multi_reduction <maximumf>, %71, %cst_23 [1] : vector<128x128xf32> to vector<128xf32>
    %73 = vector.shape_cast %72 : vector<128xf32> to vector<128x1xf32>
    %74 = vector.broadcast %73 : vector<128x1xf32> to vector<128x128xf32>
    %75 = arith.subf %71, %74 : vector<128x128xf32>
    %76 = math.exp %75 : vector<128x128xf32>
    %cst_24 = arith.constant dense<0.000000e+00> : vector<128xf32>
    %77 = vector.multi_reduction <add>, %76, %cst_24 [1] : vector<128x128xf32> to vector<128xf32>
    %78 = vector.shape_cast %77 : vector<128xf32> to vector<128x1xf32>
    %79 = tpu.reciprocal %78 {approx = true} : vector<128x1xf32> -> vector<128x1xf32>
    %80 = vector.broadcast %79 : vector<128x1xf32> to vector<128x128xf32>
    %81 = arith.mulf %76, %80 : vector<128x128xf32>
    %cst_25 = arith.constant dense<0.000000e+00> : vector<128x16xf32>
    %82 = tpu.matmul %81, %66, %cst_25 {dimension_numbers = #tpu.dot_dimension_numbers<[1], [0], [0], [1], [0, 0, 1, 1], [], []>} : vector<128x128xf32>, vector<128x16xf32>, vector<128x16xf32> -> vector<128x16xf32>
    %83 = vector.shape_cast %82 : vector<128x16xf32> to vector<2x4x16x16xf32>
    %84 = vector.extract_strided_slice %83 {offsets = [0, 0, 0, 0], sizes = [2, 1, 16, 16], strides = [1, 1, 1, 1]} : vector<2x4x16x16xf32> to vector<2x1x16x16xf32>
    %85 = vector.shape_cast %84 : vector<2x1x16x16xf32> to vector<2x16x16xf32>
    %86 = vector.extract_strided_slice %83 {offsets = [0, 1, 0, 0], sizes = [2, 1, 16, 16], strides = [1, 1, 1, 1]} : vector<2x4x16x16xf32> to vector<2x1x16x16xf32>
    %87 = vector.shape_cast %86 : vector<2x1x16x16xf32> to vector<2x16x16xf32>
    %88 = vector.extract_strided_slice %83 {offsets = [0, 2, 0, 0], sizes = [2, 1, 16, 16], strides = [1, 1, 1, 1]} : vector<2x4x16x16xf32> to vector<2x1x16x16xf32>
    %89 = vector.shape_cast %88 : vector<2x1x16x16xf32> to vector<2x16x16xf32>
    %90 = vector.extract_strided_slice %83 {offsets = [0, 3, 0, 0], sizes = [2, 1, 16, 16], strides = [1, 1, 1, 1]} : vector<2x4x16x16xf32> to vector<2x1x16x16xf32>
    %91 = vector.shape_cast %90 : vector<2x1x16x16xf32> to vector<2x16x16xf32>
    %92 = tpu.concatenate %85, %87, %89, %91 in 2 : vector<2x16x16xf32>, vector<2x16x16xf32>, vector<2x16x16xf32>, vector<2x16x16xf32> -> vector<2x16x64xf32>
    %93 = vector.shape_cast %92 : vector<2x16x64xf32> to vector<32x64xf32>
    %c0_26 = arith.constant 0 : index
    %c0_27 = arith.constant 0 : index
    %c0_28 = arith.constant 0 : index
    %94 = vector.load %arg9[%c0_26, %c0_27, %c0_28] : memref<1x64x64xf32, #tpu.memory_space<vmem>>, vector<1x64x64xf32>
    %95 = vector.shape_cast %94 : vector<1x64x64xf32> to vector<64x64xf32>
    %cst_29 = arith.constant dense<0.000000e+00> : vector<32x64xf32>
    %96 = tpu.matmul %93, %95, %cst_29 {dimension_numbers = #tpu.dot_dimension_numbers<[1], [0], [0], [1], [0, 0, 1, 1], [], []>} : vector<32x64xf32>, vector<64x64xf32>, vector<32x64xf32> -> vector<32x64xf32>
    %c0_30 = arith.constant 0 : index
    %c0_31 = arith.constant 0 : index
    %c0_32 = arith.constant 0 : index
    %97 = vector.load %arg10[%c0_30, %c0_31, %c0_32] : memref<1x1x64xf32, #tpu.memory_space<vmem>>, vector<1x1x64xf32>
    %98 = vector.shape_cast %97 : vector<1x1x64xf32> to vector<1x64xf32>
    %99 = vector.broadcast %98 : vector<1x64xf32> to vector<32x64xf32>
    %100 = arith.addf %96, %99 : vector<32x64xf32>
    %101 = arith.addf %3, %100 : vector<32x64xf32>
    %c0_33 = arith.constant 0 : index
    %c0_34 = arith.constant 0 : index
    %c0_35 = arith.constant 0 : index
    %102 = vector.load %arg11[%c0_33, %c0_34, %c0_35] : memref<1x1x64xf32, #tpu.memory_space<vmem>>, vector<1x1x64xf32>
    %103 = vector.shape_cast %102 : vector<1x1x64xf32> to vector<1x64xf32>
    %c0_36 = arith.constant 0 : index
    %c0_37 = arith.constant 0 : index
    %c0_38 = arith.constant 0 : index
    %104 = vector.load %arg12[%c0_36, %c0_37, %c0_38] : memref<1x1x64xf32, #tpu.memory_space<vmem>>, vector<1x1x64xf32>
    %105 = vector.shape_cast %104 : vector<1x1x64xf32> to vector<1x64xf32>
    %cst_39 = arith.constant dense<0.000000e+00> : vector<32xf32>
    %106 = vector.multi_reduction <add>, %101, %cst_39 [1] : vector<32x64xf32> to vector<32xf32>
    %107 = vector.shape_cast %106 : vector<32xf32> to vector<32x1xf32>
    %cst_40 = arith.constant 6.400000e+01 : f32
    %108 = vector.broadcast %cst_40 : f32 to vector<32x1xf32>
    %109 = arith.divf %107, %108 : vector<32x1xf32>
    %110 = vector.broadcast %109 : vector<32x1xf32> to vector<32x64xf32>
    %111 = arith.subf %101, %110 : vector<32x64xf32>
    %112 = arith.mulf %111, %111 : vector<32x64xf32>
    %cst_41 = arith.constant dense<0.000000e+00> : vector<32xf32>
    %113 = vector.multi_reduction <add>, %112, %cst_41 [1] : vector<32x64xf32> to vector<32xf32>
    %114 = vector.shape_cast %113 : vector<32xf32> to vector<32x1xf32>
    %cst_42 = arith.constant 6.400000e+01 : f32
    %115 = vector.broadcast %cst_42 : f32 to vector<32x1xf32>
    %116 = arith.divf %114, %115 : vector<32x1xf32>
    %117 = vector.broadcast %109 : vector<32x1xf32> to vector<32x64xf32>
    %118 = arith.subf %101, %117 : vector<32x64xf32>
    %cst_43 = arith.constant 9.99999974E-6 : f32
    %119 = vector.broadcast %cst_43 : f32 to vector<32x1xf32>
    %120 = arith.addf %116, %119 : vector<32x1xf32>
    %121 = math.rsqrt %120 : vector<32x1xf32>
    %122 = vector.broadcast %121 : vector<32x1xf32> to vector<32x64xf32>
    %123 = arith.mulf %118, %122 : vector<32x64xf32>
    %124 = vector.broadcast %103 : vector<1x64xf32> to vector<32x64xf32>
    %125 = arith.mulf %123, %124 : vector<32x64xf32>
    %126 = vector.broadcast %105 : vector<1x64xf32> to vector<32x64xf32>
    %127 = arith.addf %125, %126 : vector<32x64xf32>
    %c0_44 = arith.constant 0 : index
    %c0_45 = arith.constant 0 : index
    %c0_46 = arith.constant 0 : index
    %128 = vector.load %arg13[%c0_44, %c0_45, %c0_46] : memref<1x64x256xf32, #tpu.memory_space<vmem>>, vector<1x64x256xf32>
    %129 = vector.shape_cast %128 : vector<1x64x256xf32> to vector<64x256xf32>
    %cst_47 = arith.constant dense<0.000000e+00> : vector<32x256xf32>
    %130 = tpu.matmul %127, %129, %cst_47 {dimension_numbers = #tpu.dot_dimension_numbers<[1], [0], [0], [1], [0, 0, 1, 1], [], []>} : vector<32x64xf32>, vector<64x256xf32>, vector<32x256xf32> -> vector<32x256xf32>
    %c0_48 = arith.constant 0 : index
    %c0_49 = arith.constant 0 : index
    %c0_50 = arith.constant 0 : index
    %131 = vector.load %arg14[%c0_48, %c0_49, %c0_50] : memref<1x1x256xf32, #tpu.memory_space<vmem>>, vector<1x1x256xf32>
    %132 = vector.shape_cast %131 : vector<1x1x256xf32> to vector<1x256xf32>
    %133 = vector.broadcast %132 : vector<1x256xf32> to vector<32x256xf32>
    %134 = arith.addf %130, %133 : vector<32x256xf32>
    %cst_51 = arith.constant 5.000000e-01 : f32
    %135 = vector.broadcast %cst_51 : f32 to vector<32x256xf32>
    %136 = arith.mulf %135, %134 : vector<32x256xf32>
    %cst_52 = arith.constant 0.707106769 : f32
    %137 = vector.broadcast %cst_52 : f32 to vector<32x256xf32>
    %138 = arith.mulf %134, %137 : vector<32x256xf32>
    %139 = math.erf %138 : vector<32x256xf32>
    %cst_53 = arith.constant 1.000000e+00 : f32
    %140 = vector.broadcast %cst_53 : f32 to vector<32x256xf32>
    %141 = arith.addf %140, %139 : vector<32x256xf32>
    %142 = arith.mulf %136, %141 : vector<32x256xf32>
    %c0_54 = arith.constant 0 : index
    %c0_55 = arith.constant 0 : index
    %c0_56 = arith.constant 0 : index
    %143 = vector.load %arg15[%c0_54, %c0_55, %c0_56] : memref<1x256x64xf32, #tpu.memory_space<vmem>>, vector<1x256x64xf32>
    %144 = vector.shape_cast %143 : vector<1x256x64xf32> to vector<256x64xf32>
    %cst_57 = arith.constant dense<0.000000e+00> : vector<32x64xf32>
    %145 = tpu.matmul %142, %144, %cst_57 {dimension_numbers = #tpu.dot_dimension_numbers<[1], [0], [0], [1], [0, 0, 1, 1], [], []>} : vector<32x256xf32>, vector<256x64xf32>, vector<32x64xf32> -> vector<32x64xf32>
    %c0_58 = arith.constant 0 : index
    %c0_59 = arith.constant 0 : index
    %c0_60 = arith.constant 0 : index
    %146 = vector.load %arg16[%c0_58, %c0_59, %c0_60] : memref<1x1x64xf32, #tpu.memory_space<vmem>>, vector<1x1x64xf32>
    %147 = vector.shape_cast %146 : vector<1x1x64xf32> to vector<1x64xf32>
    %148 = vector.broadcast %147 : vector<1x64xf32> to vector<32x64xf32>
    %149 = arith.addf %145, %148 : vector<32x64xf32>
    %150 = arith.addf %101, %149 : vector<32x64xf32>
    %c0_61 = arith.constant 0 : index
    %c0_62 = arith.constant 0 : index
    %151 = vector.load %arg21[%c0_61, %c0_62] : memref<32x64xf32, #tpu.memory_space<vmem>>, vector<32x64xf32>
    tpu.vector_store %arg21[%c0_61, %c0_62], %150 {strides = array<i32>} : memref<32x64xf32, #tpu.memory_space<vmem>>, vector<32x64xf32>,
    %c1_i32 = arith.constant 1 : i32
    %152 = arith.cmpi eq, %arg0, %c1_i32 : i32
    %153 = arith.extui %152 : i1 to i32
    %c0_i32_63 = arith.constant 0 : i32
    %154 = arith.cmpi ne, %153, %c0_i32_63 : i32
    scf.if %154 {
      %c0_64 = arith.constant 0 : index
      %c0_65 = arith.constant 0 : index
      %155 = vector.load %arg17[%c0_64, %c0_65] : memref<1x64xf32, #tpu.memory_space<vmem>>, vector<1x64xf32>
      %c0_66 = arith.constant 0 : index
      %c0_67 = arith.constant 0 : index
      %156 = vector.load %arg18[%c0_66, %c0_67] : memref<1x64xf32, #tpu.memory_space<vmem>>, vector<1x64xf32>
      %cst_68 = arith.constant dense<0.000000e+00> : vector<32xf32>
      %157 = vector.multi_reduction <add>, %150, %cst_68 [1] : vector<32x64xf32> to vector<32xf32>
      %158 = vector.shape_cast %157 : vector<32xf32> to vector<32x1xf32>
      %cst_69 = arith.constant 6.400000e+01 : f32
      %159 = vector.broadcast %cst_69 : f32 to vector<32x1xf32>
      %160 = arith.divf %158, %159 : vector<32x1xf32>
      %161 = vector.broadcast %160 : vector<32x1xf32> to vector<32x64xf32>
      %162 = arith.subf %150, %161 : vector<32x64xf32>
      %163 = arith.mulf %162, %162 : vector<32x64xf32>
      %cst_70 = arith.constant dense<0.000000e+00> : vector<32xf32>
      %164 = vector.multi_reduction <add>, %163, %cst_70 [1] : vector<32x64xf32> to vector<32xf32>
      %165 = vector.shape_cast %164 : vector<32xf32> to vector<32x1xf32>
      %cst_71 = arith.constant 6.400000e+01 : f32
      %166 = vector.broadcast %cst_71 : f32 to vector<32x1xf32>
      %167 = arith.divf %165, %166 : vector<32x1xf32>
      %168 = vector.broadcast %160 : vector<32x1xf32> to vector<32x64xf32>
      %169 = arith.subf %150, %168 : vector<32x64xf32>
      %cst_72 = arith.constant 9.99999974E-6 : f32
      %170 = vector.broadcast %cst_72 : f32 to vector<32x1xf32>
      %171 = arith.addf %167, %170 : vector<32x1xf32>
      %172 = math.rsqrt %171 : vector<32x1xf32>
      %173 = vector.broadcast %172 : vector<32x1xf32> to vector<32x64xf32>
      %174 = arith.mulf %169, %173 : vector<32x64xf32>
      %175 = vector.broadcast %155 : vector<1x64xf32> to vector<32x64xf32>
      %176 = arith.mulf %174, %175 : vector<32x64xf32>
      %177 = vector.broadcast %156 : vector<1x64xf32> to vector<32x64xf32>
      %178 = arith.addf %176, %177 : vector<32x64xf32>
      %c0_73 = arith.constant 0 : index
      %c0_74 = arith.constant 0 : index
      %179 = vector.load %arg19[%c0_73, %c0_74] : memref<64x128xf32, #tpu.memory_space<vmem>>, vector<64x128xf32>
      %cst_75 = arith.constant dense<0.000000e+00> : vector<32x128xf32>
      %180 = tpu.matmul %178, %179, %cst_75 {dimension_numbers = #tpu.dot_dimension_numbers<[1], [0], [0], [1], [0, 0, 1, 1], [], []>} : vector<32x64xf32>, vector<64x128xf32>, vector<32x128xf32> -> vector<32x128xf32>
      %181 = vector.shape_cast %180 : vector<32x128xf32> to vector<2x16x128xf32>
      %c0_76 = arith.constant 0 : index
      %c0_77 = arith.constant 0 : index
      %c0_78 = arith.constant 0 : index
      %182 = vector.load %arg20[%c0_76, %c0_77, %c0_78] : memref<2x16x128xf32, #tpu.memory_space<vmem>>, vector<2x16x128xf32>
      tpu.vector_store %arg20[%c0_76, %c0_77, %c0_78], %181 {strides = array<i32>} : memref<2x16x128xf32, #tpu.memory_space<vmem>>, vector<2x16x128xf32>,
    } else {
    }
    return
  }
  func.func @transform_0(%arg0: i32) -> (i32, i32) {
    %c0_i32 = arith.constant 0 : i32
    %c0_i32_0 = arith.constant 0 : i32
    %c0_i32_1 = arith.constant 0 : i32
    return %c0_i32, %c0_i32_0 : i32, i32
  }
  func.func @transform_1(%arg0: i32) -> (i32, i32) {
    %c0_i32 = arith.constant 0 : i32
    %c0_i32_0 = arith.constant 0 : i32
    %c0_i32_1 = arith.constant 0 : i32
    return %c0_i32, %c0_i32_0 : i32, i32
  }
  func.func @transform_2(%arg0: i32) -> (i32, i32) {
    %c0_i32 = arith.constant 0 : i32
    %c0_i32_0 = arith.constant 0 : i32
    %c0_i32_1 = arith.constant 0 : i32
    return %c0_i32, %c0_i32_0 : i32, i32
  }
  func.func @transform_3(%arg0: i32) -> (i32, i32) {
    %c0_i32 = arith.constant 0 : i32
    %c0_i32_0 = arith.constant 0 : i32
    %c0_i32_1 = arith.constant 0 : i32
    return %c0_i32, %c0_i32_0 : i32, i32
  }
  func.func @transform_4(%arg0: i32) -> (i32, i32, i32) {
    %c0_i32 = arith.constant 0 : i32
    %c0_i32_0 = arith.constant 0 : i32
    %c0_i32_1 = arith.constant 0 : i32
    return %arg0, %c0_i32, %c0_i32_0 : i32, i32, i32
  }
  func.func @transform_5(%arg0: i32) -> (i32, i32, i32) {
    %c0_i32 = arith.constant 0 : i32
    %c0_i32_0 = arith.constant 0 : i32
    %c0_i32_1 = arith.constant 0 : i32
    return %arg0, %c0_i32, %c0_i32_0 : i32, i32, i32
  }
  func.func @transform_6(%arg0: i32) -> (i32, i32, i32) {
    %c0_i32 = arith.constant 0 : i32
    %c0_i32_0 = arith.constant 0 : i32
    %c0_i32_1 = arith.constant 0 : i32
    return %arg0, %c0_i32, %c0_i32_0 : i32, i32, i32
  }
  func.func @transform_7(%arg0: i32) -> (i32, i32, i32) {
    %c0_i32 = arith.constant 0 : i32
    %c0_i32_0 = arith.constant 0 : i32
    %c0_i32_1 = arith.constant 0 : i32
    return %arg0, %c0_i32, %c0_i32_0 : i32, i32, i32
  }
  func.func @transform_8(%arg0: i32) -> (i32, i32, i32) {
    %c0_i32 = arith.constant 0 : i32
    %c0_i32_0 = arith.constant 0 : i32
    %c0_i32_1 = arith.constant 0 : i32
    return %arg0, %c0_i32, %c0_i32_0 : i32, i32, i32
  }
  func.func @transform_9(%arg0: i32) -> (i32, i32, i32) {
    %c0_i32 = arith.constant 0 : i32
    %c0_i32_0 = arith.constant 0 : i32
    %c0_i32_1 = arith.constant 0 : i32
    return %arg0, %c0_i32, %c0_i32_0 : i32, i32, i32
  }
  func.func @transform_10(%arg0: i32) -> (i32, i32, i32) {
    %c0_i32 = arith.constant 0 : i32
    %c0_i32_0 = arith.constant 0 : i32
    %c0_i32_1 = arith.constant 0 : i32
    return %arg0, %c0_i32, %c0_i32_0 : i32, i32, i32
  }
  func.func @transform_11(%arg0: i32) -> (i32, i32, i32) {
    %c0_i32 = arith.constant 0 : i32
    %c0_i32_0 = arith.constant 0 : i32
    %c0_i32_1 = arith.constant 0 : i32
    return %arg0, %c0_i32, %c0_i32_0 : i32, i32, i32
  }
  func.func @transform_12(%arg0: i32) -> (i32, i32, i32) {
    %c0_i32 = arith.constant 0 : i32
    %c0_i32_0 = arith.constant 0 : i32
    %c0_i32_1 = arith.constant 0 : i32
    return %arg0, %c0_i32, %c0_i32_0 : i32, i32, i32
  }
  func.func @transform_13(%arg0: i32) -> (i32, i32, i32) {
    %c0_i32 = arith.constant 0 : i32
    %c0_i32_0 = arith.constant 0 : i32
    %c0_i32_1 = arith.constant 0 : i32
    return %arg0, %c0_i32, %c0_i32_0 : i32, i32, i32
  }
  func.func @transform_14(%arg0: i32) -> (i32, i32, i32) {
    %c0_i32 = arith.constant 0 : i32
    %c0_i32_0 = arith.constant 0 : i32
    %c0_i32_1 = arith.constant 0 : i32
    return %arg0, %c0_i32, %c0_i32_0 : i32, i32, i32
  }
  func.func @transform_15(%arg0: i32) -> (i32, i32, i32) {
    %c0_i32 = arith.constant 0 : i32
    %c0_i32_0 = arith.constant 0 : i32
    %c0_i32_1 = arith.constant 0 : i32
    return %arg0, %c0_i32, %c0_i32_0 : i32, i32, i32
  }
  func.func @transform_16(%arg0: i32) -> (i32, i32) {
    %c0_i32 = arith.constant 0 : i32
    %c0_i32_0 = arith.constant 0 : i32
    %c0_i32_1 = arith.constant 0 : i32
    return %c0_i32, %c0_i32_0 : i32, i32
  }
  func.func @transform_17(%arg0: i32) -> (i32, i32) {
    %c0_i32 = arith.constant 0 : i32
    %c0_i32_0 = arith.constant 0 : i32
    %c0_i32_1 = arith.constant 0 : i32
    return %c0_i32, %c0_i32_0 : i32, i32
  }
  func.func @transform_18(%arg0: i32) -> (i32, i32) {
    %c0_i32 = arith.constant 0 : i32
    %c0_i32_0 = arith.constant 0 : i32
    %c0_i32_1 = arith.constant 0 : i32
    return %c0_i32, %c0_i32_0 : i32, i32
  }
  func.func @transform_19(%arg0: i32) -> (i32, i32, i32) {
    %c0_i32 = arith.constant 0 : i32
    %c0_i32_0 = arith.constant 0 : i32
    %c0_i32_1 = arith.constant 0 : i32
    %c0_i32_2 = arith.constant 0 : i32
    return %c0_i32, %c0_i32_0, %c0_i32_1 : i32, i32, i32
  }
}

</mosaic_0001>

<llo_original>
// kernel: gpt_forward.1
$region0: #{gpt_forward.1}
  #allocation0 [shape = 'u32[]', space=smem, size = 0x4, offset = 0x4, fixed_abs, tag = 'smem constant byte address 0x4 - core index']
  #allocation1 [shape = 'u32[144,128]{1,0:T(1,128)}', space=vmem, size = 0x12000, scoped, tag = 'internal scratch']
  #allocation2 [shape = 'f32[32,64]{1,0:T(8,128)}', space=vmem, size = 0x4000, scoped, tag = 'scratch operand']
  #allocation3 [shape = 'f32[128,128]{1,0:T(8,128)}', space=vmem, size = 0x10000, scoped, tag = 'scratch operand']
  %s0 = inlined_call_operand.vmem [shape: s32[32,1], index: 0, kind: input, shape index: {}]
  %s1 = inlined_call_operand.vmem [shape: f32[2,16], index: 1, kind: input, shape index: {}]
  %s2 = inlined_call_operand.vmem [shape: f32[128,64], index: 2, kind: input, shape index: {}]
  %s3 = inlined_call_operand.vmem [shape: f32[64,64], index: 3, kind: input, shape index: {}]
  %s4 = inlined_call_operand.vmem [shape: f32[2,1,64], index: 4, kind: input, shape index: {}]
  %s5 = inlined_call_operand.vmem [shape: f32[2,1,64], index: 5, kind: input, shape index: {}]
  %s6 = inlined_call_operand.vmem [shape: f32[2,64,192], index: 6, kind: input, shape index: {}]
  %s7 = inlined_call_operand.vmem [shape: f32[2,1,192], index: 7, kind: input, shape index: {}]
  %s8 = inlined_call_operand.vmem [shape: f32[2,64,64], index: 8, kind: input, shape index: {}]
  %s9 = inlined_call_operand.vmem [shape: f32[2,1,64], index: 9, kind: input, shape index: {}]
  %s10 = inlined_call_operand.vmem [shape: f32[2,1,64], index: 10, kind: input, shape index: {}]
  %s11 = inlined_call_operand.hbm [shape: f32[2,1,64], index: 11, kind: input, shape index: {}]
  %s12 = inlined_call_operand.vmem [shape: f32[2,64,256], index: 12, kind: input, shape index: {}]
  %s13 = inlined_call_operand.vmem [shape: f32[2,1,256], index: 13, kind: input, shape index: {}]
  %s14 = inlined_call_operand.vmem [shape: f32[2,256,64], index: 14, kind: input, shape index: {}]
  %s15 = inlined_call_operand.hbm [shape: f32[2,1,64], index: 15, kind: input, shape index: {}]
  %s16 = inlined_call_operand.vmem [shape: f32[1,64], index: 16, kind: input, shape index: {}]
  %s17 = inlined_call_operand.hbm [shape: f32[1,64], index: 17, kind: input, shape index: {}]
  %s18 = inlined_call_operand.vmem [shape: f32[64,128], index: 18, kind: input, shape index: {}]
  %s19 = inlined_call_operand.hbm [shape: f32[2,16,128], index: 19, kind: output, shape index: {}]
  %s20 = sld [smem:[#allocation0]]
  $region129: #{gpt_forward.1} parent=0
    _
  %s22 = ssub.s32 1, %s20
  %s23 = scalar_select 0, %s22, %s20
  $region1: #{gpt_forward.1} parent=0
    #allocation4 [shape = 'u8[1024]{0}', space=vmem, size = 0x400, scoped, tag = 'input window, operand 11']
    #allocation5 [shape = 's32[2]{0}', space=sflag, size = 0x8, scoped, tag = 'scoped memory for gpt_forward.1']
    #allocation6 [shape = 's32[2]{0}', space=sflag, size = 0x8, scoped, tag = 'scoped memory for gpt_forward.1']
    #allocation7 [shape = 'u8[1024]{0}', space=vmem, size = 0x400, scoped, tag = 'input window, operand 15']
    #allocation8 [shape = 's32[2]{0}', space=sflag, size = 0x8, scoped, tag = 'scoped memory for gpt_forward.1']
    #allocation9 [shape = 'u8[512]{0}', space=vmem, size = 0x400, scoped, tag = 'input window, operand 17, single buffered']
    #allocation10 [shape = 'u8[16384]{0}', space=vmem, size = 0x4000, scoped, tag = 'output window, operand 0, single buffered']
    %24 = vsyncpa [#allocation5], 0
    %s25 = scalar_lea.sflag [#allocation5], 1
    %26 = vsyncpa %s25, 0
    %27 = vsyncpa [#allocation8], 0
    %s28 = scalar_lea.sflag [#allocation8], 1
    %29 = vsyncpa %s28, 0
    %30 = vsyncpa [#allocation6], 0
    loop: start=0, step=1, limit=4
    $region2: #{gpt_forward.1} parent=1 // loop_pre_header
      _
    $region3: #{gpt_forward.1} parent=1 // loop_header
      %s32 = sphi 0, %s36
      %p33 = scmp.ge.s32.totalorder %s32, 4
      %s40 = sphi 0, %s40
      %s42 = sphi 0, %s40
      %s43 = sphi 0, %s42
      %s57 = sphi 0, %s43
      %s61 = sphi 0, %s61
      %s63 = sphi 0, %s61
      %s64 = sphi 0, %s63
      %s78 = sphi 0, %s64
      %s82 = sphi 0, %s82
      %s84 = sphi 0, %s82
      %s85 = sphi 0, %s84
      %s99 = sphi 0, %s85
      %s103 = sphi 0, %s103
      %s105 = sphi 0, %s103
      %s106 = sphi 0, %s105
      %s120 = sphi 0, %s106
      %s126 = sphi 0, %s128
      %s129 = sphi 0, %s126
      %s130 = sphi 0, %s129
      %s146 = sphi 0, %s130
      %s152 = sphi 0, %s154
      %s155 = sphi 0, %s152
      %s156 = sphi 0, %s155
      %s172 = sphi 0, %s156
      %s178 = sphi 0, %s180
      %s181 = sphi 0, %s178
      %s182 = sphi 0, %s181
      %s198 = sphi 0, %s182
      %s204 = sphi 0, %s206
      %s207 = sphi 0, %s204
      %s208 = sphi 0, %s207
      %s224 = sphi 0, %s208
      %s230 = sphi 0, %s232
      %s233 = sphi 0, %s230
      %s234 = sphi 0, %s233
      %s250 = sphi 0, %s234
      %s256 = sphi 0, %s258
      %s259 = sphi 0, %s256
      %s260 = sphi 0, %s259
      %s276 = sphi 0, %s260
      %s282 = sphi 0, %s284
      %s285 = sphi 0, %s282
      %s286 = sphi 0, %s285
      %s302 = sphi 0, %s286
      %s308 = sphi 0, %s310
      %s311 = sphi 0, %s308
      %s312 = sphi 0, %s311
      %s328 = sphi 0, %s312
      %s334 = sphi 0, %s336
      %s337 = sphi 0, %s334
      %s338 = sphi 0, %s337
      %s354 = sphi 0, %s338
      %s360 = sphi 0, %s362
      %s363 = sphi 0, %s360
      %s364 = sphi 0, %s363
      %s380 = sphi 0, %s364
      %s386 = sphi 0, %s388
      %s389 = sphi 0, %s386
      %s390 = sphi 0, %s389
      %s406 = sphi 0, %s390
      %s412 = sphi 0, %s414
      %s415 = sphi 0, %s412
      %s416 = sphi 0, %s415
      %s432 = sphi 0, %s416
      %s436 = sphi 0, %s436
      %s438 = sphi 0, %s436
      %s439 = sphi 0, %s438
      %s453 = sphi 0, %s439
      %s457 = sphi 0, %s457
      %s459 = sphi 0, %s457
      %s460 = sphi 0, %s459
      %s474 = sphi 0, %s460
      %s478 = sphi 0, %s478
      %s480 = sphi 0, %s478
      %s481 = sphi 0, %s480
      %s495 = sphi 0, %s481
      %s499 = sphi 0, %s499
      %s501 = sphi 0, %s499
      %s502 = sphi 0, %s501
      %s516 = sphi 0, %s502
    $region4: #{gpt_forward.1} parent=1 // loop_header_branch
      %35 = sbr.rel (%p33) target = $region8
    $region5: #{gpt_forward.1} parent=1 // loop_body
      %s37 = ssub.s32 %s32, 1
      %s38 = ssub.s32 %s32, 2
      %s39 = sadd.s32 %s32, 1
      %s41 = sadd.s32 %s40, 1
      %p44 = scmp.eq.s32.totalorder %s32, 1
      %p45 = scmp.ne.s32.totalorder %s40, %s42
      %p46 = scmp.eq.s32.totalorder %s32, 0
      %p47 = por %p45, %p46
      %p48 = scmp.ne.s32.totalorder %s40, %s42
      %p49 = scmp.eq.s32.totalorder %s37, 1
      %p50 = por %p48, %p49
      %p51 = scmp.ne.s32.totalorder %s42, %s43
      %p52 = scmp.eq.s32.totalorder %s37, 0
      %p53 = por %p51, %p52
      %p54 = scmp.ne.s32.totalorder %s42, %s43
      %p55 = scmp.eq.s32.totalorder %s38, 1
      %p56 = por %p54, %p55
      %p58 = scmp.ne.s32.totalorder %s43, %s57
      %p59 = scmp.eq.s32.totalorder %s38, 0
      %p60 = por %p58, %p59
      %s62 = sadd.s32 %s61, 1
      %p65 = scmp.eq.s32.totalorder %s32, 1
      %p66 = scmp.ne.s32.totalorder %s61, %s63
      %p67 = scmp.eq.s32.totalorder %s32, 0
      %p68 = por %p66, %p67
      %p69 = scmp.ne.s32.totalorder %s61, %s63
      %p70 = scmp.eq.s32.totalorder %s37, 1
      %p71 = por %p69, %p70
      %p72 = scmp.ne.s32.totalorder %s63, %s64
      %p73 = scmp.eq.s32.totalorder %s37, 0
      %p74 = por %p72, %p73
      %p75 = scmp.ne.s32.totalorder %s63, %s64
      %p76 = scmp.eq.s32.totalorder %s38, 1
      %p77 = por %p75, %p76
      %p79 = scmp.ne.s32.totalorder %s64, %s78
      %p80 = scmp.eq.s32.totalorder %s38, 0
      %p81 = por %p79, %p80
      %s83 = sadd.s32 %s82, 1
      %p86 = scmp.eq.s32.totalorder %s32, 1
      %p87 = scmp.ne.s32.totalorder %s82, %s84
      %p88 = scmp.eq.s32.totalorder %s32, 0
      %p89 = por %p87, %p88
      %p90 = scmp.ne.s32.totalorder %s82, %s84
      %p91 = scmp.eq.s32.totalorder %s37, 1
      %p92 = por %p90, %p91
      %p93 = scmp.ne.s32.totalorder %s84, %s85
      %p94 = scmp.eq.s32.totalorder %s37, 0
      %p95 = por %p93, %p94
      %p96 = scmp.ne.s32.totalorder %s84, %s85
      %p97 = scmp.eq.s32.totalorder %s38, 1
      %p98 = por %p96, %p97
      %p100 = scmp.ne.s32.totalorder %s85, %s99
      %p101 = scmp.eq.s32.totalorder %s38, 0
      %p102 = por %p100, %p101
      %s104 = sadd.s32 %s103, 1
      %p107 = scmp.eq.s32.totalorder %s32, 1
      %p108 = scmp.ne.s32.totalorder %s103, %s105
      %p109 = scmp.eq.s32.totalorder %s32, 0
      %p110 = por %p108, %p109
      %p111 = scmp.ne.s32.totalorder %s103, %s105
      %p112 = scmp.eq.s32.totalorder %s37, 1
      %p113 = por %p111, %p112
      %p114 = scmp.ne.s32.totalorder %s105, %s106
      %p115 = scmp.eq.s32.totalorder %s37, 0
      %p116 = por %p114, %p115
      %p117 = scmp.ne.s32.totalorder %s105, %s106
      %p118 = scmp.eq.s32.totalorder %s38, 1
      %p119 = por %p117, %p118
      %p121 = scmp.ne.s32.totalorder %s106, %s120
      %p122 = scmp.eq.s32.totalorder %s38, 0
      %p123 = por %p121, %p122
      %s124 = ssub.s32 %s32, %s39
      %p125 = scmp.eq.s32.totalorder %s124, 0
      %s127 = sadd.s32 %s126, 1
      %s128 = scalar_select %p125, %s126, %s127
      %p131 = pneg %p125
      %p132 = scmp.eq.s32.totalorder %s32, 1
      %p133 = por %p131, %p132
      %p134 = scmp.ne.s32.totalorder %s126, %s129
      %p135 = scmp.eq.s32.totalorder %s32, 0
      %p136 = por %p134, %p135
      %p137 = scmp.ne.s32.totalorder %s126, %s129
      %p138 = scmp.eq.s32.totalorder %s37, 1
      %p139 = por %p137, %p138
      %p140 = scmp.ne.s32.totalorder %s129, %s130
      %p141 = scmp.eq.s32.totalorder %s37, 0
      %p142 = por %p140, %p141
      %p143 = scmp.ne.s32.totalorder %s129, %s130
      %p144 = scmp.eq.s32.totalorder %s38, 1
      %p145 = por %p143, %p144
      %p147 = scmp.ne.s32.totalorder %s130, %s146
      %p148 = scmp.eq.s32.totalorder %s38, 0
      %p149 = por %p147, %p148
      %s150 = ssub.s32 %s32, %s39
      %p151 = scmp.eq.s32.totalorder %s150, 0
      %s153 = sadd.s32 %s152, 1
      %s154 = scalar_select %p151, %s152, %s153
      %p157 = pneg %p151
      %p158 = scmp.eq.s32.totalorder %s32, 1
      %p159 = por %p157, %p158
      %p160 = scmp.ne.s32.totalorder %s152, %s155
      %p161 = scmp.eq.s32.totalorder %s32, 0
      %p162 = por %p160, %p161
      %p163 = scmp.ne.s32.totalorder %s152, %s155
      %p164 = scmp.eq.s32.totalorder %s37, 1
      %p165 = por %p163, %p164
      %p166 = scmp.ne.s32.totalorder %s155, %s156
      %p167 = scmp.eq.s32.totalorder %s37, 0
      %p168 = por %p166, %p167
      %p169 = scmp.ne.s32.totalorder %s155, %s156
      %p170 = scmp.eq.s32.totalorder %s38, 1
      %p171 = por %p169, %p170
      %p173 = scmp.ne.s32.totalorder %s156, %s172
      %p174 = scmp.eq.s32.totalorder %s38, 0
      %p175 = por %p173, %p174
      %s176 = ssub.s32 %s32, %s39
      %p177 = scmp.eq.s32.totalorder %s176, 0
      %s179 = sadd.s32 %s178, 1
      %s180 = scalar_select %p177, %s178, %s179
      %p183 = pneg %p177
      %p184 = scmp.eq.s32.totalorder %s32, 1
      %p185 = por %p183, %p184
      %p186 = scmp.ne.s32.totalorder %s178, %s181
      %p187 = scmp.eq.s32.totalorder %s32, 0
      %p188 = por %p186, %p187
      %p189 = scmp.ne.s32.totalorder %s178, %s181
      %p190 = scmp.eq.s32.totalorder %s37, 1
      %p191 = por %p189, %p190
      %p192 = scmp.ne.s32.totalorder %s181, %s182
      %p193 = scmp.eq.s32.totalorder %s37, 0
      %p194 = por %p192, %p193
      %p195 = scmp.ne.s32.totalorder %s181, %s182
      %p196 = scmp.eq.s32.totalorder %s38, 1
      %p197 = por %p195, %p196
      %p199 = scmp.ne.s32.totalorder %s182, %s198
      %p200 = scmp.eq.s32.totalorder %s38, 0
      %p201 = por %p199, %p200
      %s202 = ssub.s32 %s32, %s39
      %p203 = scmp.eq.s32.totalorder %s202, 0
      %s205 = sadd.s32 %s204, 1
      %s206 = scalar_select %p203, %s204, %s205
      %p209 = pneg %p203
      %p210 = scmp.eq.s32.totalorder %s32, 1
      %p211 = por %p209, %p210
      %p212 = scmp.ne.s32.totalorder %s204, %s207
      %p213 = scmp.eq.s32.totalorder %s32, 0
      %p214 = por %p212, %p213
      %p215 = scmp.ne.s32.totalorder %s204, %s207
      %p216 = scmp.eq.s32.totalorder %s37, 1
      %p217 = por %p215, %p216
      %p218 = scmp.ne.s32.totalorder %s207, %s208
      %p219 = scmp.eq.s32.totalorder %s37, 0
      %p220 = por %p218, %p219
      %p221 = scmp.ne.s32.totalorder %s207, %s208
      %p222 = scmp.eq.s32.totalorder %s38, 1
      %p223 = por %p221, %p222
      %p225 = scmp.ne.s32.totalorder %s208, %s224
      %p226 = scmp.eq.s32.totalorder %s38, 0
      %p227 = por %p225, %p226
      %s228 = ssub.s32 %s32, %s39
      %p229 = scmp.eq.s32.totalorder %s228, 0
      %s231 = sadd.s32 %s230, 1
      %s232 = scalar_select %p229, %s230, %s231
      %p235 = pneg %p229
      %p236 = scmp.eq.s32.totalorder %s32, 1
      %p237 = por %p235, %p236
      %p238 = scmp.ne.s32.totalorder %s230, %s233
      %p239 = scmp.eq.s32.totalorder %s32, 0
      %p240 = por %p238, %p239
      %p241 = scmp.ne.s32.totalorder %s230, %s233
      %p242 = scmp.eq.s32.totalorder %s37, 1
      %p243 = por %p241, %p242
      %p244 = scmp.ne.s32.totalorder %s233, %s234
      %p245 = scmp.eq.s32.totalorder %s37, 0
      %p246 = por %p244, %p245
      %p247 = scmp.ne.s32.totalorder %s233, %s234
      %p248 = scmp.eq.s32.totalorder %s38, 1
      %p249 = por %p247, %p248
      %p251 = scmp.ne.s32.totalorder %s234, %s250
      %p252 = scmp.eq.s32.totalorder %s38, 0
      %p253 = por %p251, %p252
      %s254 = ssub.s32 %s32, %s39
      %p255 = scmp.eq.s32.totalorder %s254, 0
      %s257 = sadd.s32 %s256, 1
      %s258 = scalar_select %p255, %s256, %s257
      %p261 = pneg %p255
      %p262 = scmp.eq.s32.totalorder %s32, 1
      %p263 = por %p261, %p262
      %p264 = scmp.ne.s32.totalorder %s256, %s259
      %p265 = scmp.eq.s32.totalorder %s32, 0
      %p266 = por %p264, %p265
      %p267 = scmp.ne.s32.totalorder %s256, %s259
      %p268 = scmp.eq.s32.totalorder %s37, 1
      %p269 = por %p267, %p268
      %p270 = scmp.ne.s32.totalorder %s259, %s260
      %p271 = scmp.eq.s32.totalorder %s37, 0
      %p272 = por %p270, %p271
      %p273 = scmp.ne.s32.totalorder %s259, %s260
      %p274 = scmp.eq.s32.totalorder %s38, 1
      %p275 = por %p273, %p274
      %p277 = scmp.ne.s32.totalorder %s260, %s276
      %p278 = scmp.eq.s32.totalorder %s38, 0
      %p279 = por %p277, %p278
      %s280 = ssub.s32 %s32, %s39
      %p281 = scmp.eq.s32.totalorder %s280, 0
      %s283 = sadd.s32 %s282, 1
      %s284 = scalar_select %p281, %s282, %s283
      %p287 = pneg %p281
      %p288 = scmp.eq.s32.totalorder %s32, 1
      %p289 = por %p287, %p288
      %p290 = scmp.ne.s32.totalorder %s282, %s285
      %p291 = scmp.eq.s32.totalorder %s32, 0
      %p292 = por %p290, %p291
      %p293 = scmp.ne.s32.totalorder %s282, %s285
      %p294 = scmp.eq.s32.totalorder %s37, 1
      %p295 = por %p293, %p294
      %p296 = scmp.ne.s32.totalorder %s285, %s286
      %p297 = scmp.eq.s32.totalorder %s37, 0
      %p298 = por %p296, %p297
      %p299 = scmp.ne.s32.totalorder %s285, %s286
      %p300 = scmp.eq.s32.totalorder %s38, 1
      %p301 = por %p299, %p300
      %p303 = scmp.ne.s32.totalorder %s286, %s302
      %p304 = scmp.eq.s32.totalorder %s38, 0
      %p305 = por %p303, %p304
      %s306 = ssub.s32 %s32, %s39
      %p307 = scmp.eq.s32.totalorder %s306, 0
      %s309 = sadd.s32 %s308, 1
      %s310 = scalar_select %p307, %s308, %s309
      %p313 = pneg %p307
      %p314 = scmp.eq.s32.totalorder %s32, 1
      %p315 = por %p313, %p314
      %p316 = scmp.ne.s32.totalorder %s308, %s311
      %p317 = scmp.eq.s32.totalorder %s32, 0
      %p318 = por %p316, %p317
      %p319 = scmp.ne.s32.totalorder %s308, %s311
      %p320 = scmp.eq.s32.totalorder %s37, 1
      %p321 = por %p319, %p320
      %p322 = scmp.ne.s32.totalorder %s311, %s312
      %p323 = scmp.eq.s32.totalorder %s37, 0
      %p324 = por %p322, %p323
      %p325 = scmp.ne.s32.totalorder %s311, %s312
      %p326 = scmp.eq.s32.totalorder %s38, 1
      %p327 = por %p325, %p326
      %p329 = scmp.ne.s32.totalorder %s312, %s328
      %p330 = scmp.eq.s32.totalorder %s38, 0
      %p331 = por %p329, %p330
      %s332 = ssub.s32 %s32, %s39
      %p333 = scmp.eq.s32.totalorder %s332, 0
      %s335 = sadd.s32 %s334, 1
      %s336 = scalar_select %p333, %s334, %s335
      %p339 = pneg %p333
      %p340 = scmp.eq.s32.totalorder %s32, 1
      %p341 = por %p339, %p340
      %p342 = scmp.ne.s32.totalorder %s334, %s337
      %p343 = scmp.eq.s32.totalorder %s32, 0
      %p344 = por %p342, %p343
      %p345 = scmp.ne.s32.totalorder %s334, %s337
      %p346 = scmp.eq.s32.totalorder %s37, 1
      %p347 = por %p345, %p346
      %p348 = scmp.ne.s32.totalorder %s337, %s338
      %p349 = scmp.eq.s32.totalorder %s37, 0
      %p350 = por %p348, %p349
      %p351 = scmp.ne.s32.totalorder %s337, %s338
      %p352 = scmp.eq.s32.totalorder %s38, 1
      %p353 = por %p351, %p352
      %p355 = scmp.ne.s32.totalorder %s338, %s354
      %p356 = scmp.eq.s32.totalorder %s38, 0
      %p357 = por %p355, %p356
      %s358 = ssub.s32 %s32, %s39
      %p359 = scmp.eq.s32.totalorder %s358, 0
      %s361 = sadd.s32 %s360, 1
      %s362 = scalar_select %p359, %s360, %s361
      %p365 = pneg %p359
      %p366 = scmp.eq.s32.totalorder %s32, 1
      %p367 = por %p365, %p366
      %p368 = scmp.ne.s32.totalorder %s360, %s363
      %p369 = scmp.eq.s32.totalorder %s32, 0
      %p370 = por %p368, %p369
      %p371 = scmp.ne.s32.totalorder %s360, %s363
      %p372 = scmp.eq.s32.totalorder %s37, 1
      %p373 = por %p371, %p372
      %p374 = scmp.ne.s32.totalorder %s363, %s364
      %p375 = scmp.eq.s32.totalorder %s37, 0
      %p376 = por %p374, %p375
      %p377 = scmp.ne.s32.totalorder %s363, %s364
      %p378 = scmp.eq.s32.totalorder %s38, 1
      %p379 = por %p377, %p378
      %p381 = scmp.ne.s32.totalorder %s364, %s380
      %p382 = scmp.eq.s32.totalorder %s38, 0
      %p383 = por %p381, %p382
      %s384 = ssub.s32 %s32, %s39
      %p385 = scmp.eq.s32.totalorder %s384, 0
      %s387 = sadd.s32 %s386, 1
      %s388 = scalar_select %p385, %s386, %s387
      %p391 = pneg %p385
      %p392 = scmp.eq.s32.totalorder %s32, 1
      %p393 = por %p391, %p392
      %p394 = scmp.ne.s32.totalorder %s386, %s389
      %p395 = scmp.eq.s32.totalorder %s32, 0
      %p396 = por %p394, %p395
      %p397 = scmp.ne.s32.totalorder %s386, %s389
      %p398 = scmp.eq.s32.totalorder %s37, 1
      %p399 = por %p397, %p398
      %p400 = scmp.ne.s32.totalorder %s389, %s390
      %p401 = scmp.eq.s32.totalorder %s37, 0
      %p402 = por %p400, %p401
      %p403 = scmp.ne.s32.totalorder %s389, %s390
      %p404 = scmp.eq.s32.totalorder %s38, 1
      %p405 = por %p403, %p404
      %p407 = scmp.ne.s32.totalorder %s390, %s406
      %p408 = scmp.eq.s32.totalorder %s38, 0
      %p409 = por %p407, %p408
      %s410 = ssub.s32 %s32, %s39
      %p411 = scmp.eq.s32.totalorder %s410, 0
      %s413 = sadd.s32 %s412, 1
      %s414 = scalar_select %p411, %s412, %s413
      %p417 = pneg %p411
      %p418 = scmp.eq.s32.totalorder %s32, 1
      %p419 = por %p417, %p418
      %p420 = scmp.ne.s32.totalorder %s412, %s415
      %p421 = scmp.eq.s32.totalorder %s32, 0
      %p422 = por %p420, %p421
      %p423 = scmp.ne.s32.totalorder %s412, %s415
      %p424 = scmp.eq.s32.totalorder %s37, 1
      %p425 = por %p423, %p424
      %p426 = scmp.ne.s32.totalorder %s415, %s416
      %p427 = scmp.eq.s32.totalorder %s37, 0
      %p428 = por %p426, %p427
      %p429 = scmp.ne.s32.totalorder %s415, %s416
      %p430 = scmp.eq.s32.totalorder %s38, 1
      %p431 = por %p429, %p430
      %p433 = scmp.ne.s32.totalorder %s416, %s432
      %p434 = scmp.eq.s32.totalorder %s38, 0
      %p435 = por %p433, %p434
      %s437 = sadd.s32 %s436, 1
      %p440 = scmp.eq.s32.totalorder %s32, 1
      %p441 = scmp.ne.s32.totalorder %s436, %s438
      %p442 = scmp.eq.s32.totalorder %s32, 0
      %p443 = por %p441, %p442
      %p444 = scmp.ne.s32.totalorder %s436, %s438
      %p445 = scmp.eq.s32.totalorder %s37, 1
      %p446 = por %p444, %p445
      %p447 = scmp.ne.s32.totalorder %s438, %s439
      %p448 = scmp.eq.s32.totalorder %s37, 0
      %p449 = por %p447, %p448
      %p450 = scmp.ne.s32.totalorder %s438, %s439
      %p451 = scmp.eq.s32.totalorder %s38, 1
      %p452 = por %p450, %p451
      %p454 = scmp.ne.s32.totalorder %s439, %s453
      %p455 = scmp.eq.s32.totalorder %s38, 0
      %p456 = por %p454, %p455
      %s458 = sadd.s32 %s457, 1
      %p461 = scmp.eq.s32.totalorder %s32, 1
      %p462 = scmp.ne.s32.totalorder %s457, %s459
      %p463 = scmp.eq.s32.totalorder %s32, 0
      %p464 = por %p462, %p463
      %p465 = scmp.ne.s32.totalorder %s457, %s459
      %p466 = scmp.eq.s32.totalorder %s37, 1
      %p467 = por %p465, %p466
      %p468 = scmp.ne.s32.totalorder %s459, %s460
      %p469 = scmp.eq.s32.totalorder %s37, 0
      %p470 = por %p468, %p469
      %p471 = scmp.ne.s32.totalorder %s459, %s460
      %p472 = scmp.eq.s32.totalorder %s38, 1
      %p473 = por %p471, %p472
      %p475 = scmp.ne.s32.totalorder %s460, %s474
      %p476 = scmp.eq.s32.totalorder %s38, 0
      %p477 = por %p475, %p476
      %s479 = sadd.s32 %s478, 1
      %p482 = scmp.eq.s32.totalorder %s32, 1
      %p483 = scmp.ne.s32.totalorder %s478, %s480
      %p484 = scmp.eq.s32.totalorder %s32, 0
      %p485 = por %p483, %p484
      %p486 = scmp.ne.s32.totalorder %s478, %s480
      %p487 = scmp.eq.s32.totalorder %s37, 1
      %p488 = por %p486, %p487
      %p489 = scmp.ne.s32.totalorder %s480, %s481
      %p490 = scmp.eq.s32.totalorder %s37, 0
      %p491 = por %p489, %p490
      %p492 = scmp.ne.s32.totalorder %s480, %s481
      %p493 = scmp.eq.s32.totalorder %s38, 1
      %p494 = por %p492, %p493
      %p496 = scmp.ne.s32.totalorder %s481, %s495
      %p497 = scmp.eq.s32.totalorder %s38, 0
      %p498 = por %p496, %p497
      %s500 = sadd.s32 %s499, 1
      %p503 = scmp.eq.s32.totalorder %s32, 1
      %p504 = scmp.ne.s32.totalorder %s499, %s501
      %p505 = scmp.eq.s32.totalorder %s32, 0
      %p506 = por %p504, %p505
      %p507 = scmp.ne.s32.totalorder %s499, %s501
      %p508 = scmp.eq.s32.totalorder %s37, 1
      %p509 = por %p507, %p508
      %p510 = scmp.ne.s32.totalorder %s501, %s502
      %p511 = scmp.eq.s32.totalorder %s37, 0
      %p512 = por %p510, %p511
      %p513 = scmp.ne.s32.totalorder %s501, %s502
      %p514 = scmp.eq.s32.totalorder %s38, 1
      %p515 = por %p513, %p514
      %p517 = scmp.ne.s32.totalorder %s502, %s516
      %p518 = scmp.eq.s32.totalorder %s38, 0
      %p519 = por %p517, %p518
      %p520 = scmp.le.s32.totalorder 1, %s32
      %p521 = scmp.lt.s32.totalorder %s32, 3
      %p522 = pnand %p520, %p521
      %p523 = pneg %p522
      // Predicated region
      $region9: #{gpt_forward.1} parent=5 // pred_check
        _
      $region10: #{gpt_forward.1} parent=5 // pred_check_branch
        %525 = sbr.rel (%p522) target = $region12
      $region11: #{gpt_forward.1} parent=5 // pred_region
        %s526 = ssub.s32 %s32, 1
        // Predicated region
        $region13: #{gpt_forward.1} parent=11 // pred_check
          %p527 = pneg %p53
        $region14: #{gpt_forward.1} parent=11 // pred_check_branch
          %529 = sbr.rel (%p527) target = $region16
        $region15: #{gpt_forward.1} parent=11 // pred_region
          _
        $region16: #{gpt_forward.1} parent=11 // pred_fallthru
          _
        // Predicated region
        $region17: #{gpt_forward.1} parent=11 // pred_check
          %p530 = pneg %p74
        $region18: #{gpt_forward.1} parent=11 // pred_check_branch
          %532 = sbr.rel (%p530) target = $region20
        $region19: #{gpt_forward.1} parent=11 // pred_region
          _
        $region20: #{gpt_forward.1} parent=11 // pred_fallthru
          _
        // Predicated region
        $region21: #{gpt_forward.1} parent=11 // pred_check
          %p533 = pneg %p95
        $region22: #{gpt_forward.1} parent=11 // pred_check_branch
          %535 = sbr.rel (%p533) target = $region24
        $region23: #{gpt_forward.1} parent=11 // pred_region
          _
        $region24: #{gpt_forward.1} parent=11 // pred_fallthru
          _
        // Predicated region
        $region25: #{gpt_forward.1} parent=11 // pred_check
          %p536 = pneg %p116
        $region26: #{gpt_forward.1} parent=11 // pred_check_branch
          %538 = sbr.rel (%p536) target = $region28
        $region27: #{gpt_forward.1} parent=11 // pred_region
          _
        $region28: #{gpt_forward.1} parent=11 // pred_fallthru
          _
        // Predicated region
        $region29: #{gpt_forward.1} parent=11 // pred_check
          %p539 = pneg %p449
        $region30: #{gpt_forward.1} parent=11 // pred_check_branch
          %541 = sbr.rel (%p539) target = $region32
        $region31: #{gpt_forward.1} parent=11 // pred_region
          _
        $region32: #{gpt_forward.1} parent=11 // pred_fallthru
          _
        // Predicated region
        $region33: #{gpt_forward.1} parent=11 // pred_check
          %p542 = pneg %p470
        $region34: #{gpt_forward.1} parent=11 // pred_check_branch
          %544 = sbr.rel (%p542) target = $region36
        $region35: #{gpt_forward.1} parent=11 // pred_region
          %s546 = ssub.s32 16, 16
          %547 = vsyncadd [#allocation8], %s546
          %s549 = sshll.u32 [#allocation9], 4
          %s550 = int_to_ptr.vmem [resolvable:$true] %s549
          %552 = dma.hbm_to_vmem [thread:$0]  %s17, 16, %s550, [#allocation8]
        $region36: #{gpt_forward.1} parent=11 // pred_fallthru
          _
        // Predicated region
        $region37: #{gpt_forward.1} parent=11 // pred_check
          %p553 = pneg %p491
        $region38: #{gpt_forward.1} parent=11 // pred_check_branch
          %555 = sbr.rel (%p553) target = $region40
        $region39: #{gpt_forward.1} parent=11 // pred_region
          _
        $region40: #{gpt_forward.1} parent=11 // pred_fallthru
          _
      $region12: #{gpt_forward.1} parent=5 // pred_fallthru
        _
      %p556 = scmp.lt.s32.totalorder %s32, 2
      // Predicated region
      $region41: #{gpt_forward.1} parent=5 // pred_check
        %p557 = pneg %p556
      $region42: #{gpt_forward.1} parent=5 // pred_check_branch
        %559 = sbr.rel (%p557) target = $region44
      $region43: #{gpt_forward.1} parent=5 // pred_region
        // Predicated region
        $region45: #{gpt_forward.1} parent=43 // pred_check
          %p560 = pneg %p136
        $region46: #{gpt_forward.1} parent=43 // pred_check_branch
          %562 = sbr.rel (%p560) target = $region48
        $region47: #{gpt_forward.1} parent=43 // pred_region
          %p563 = scmp.lt.s32.totalorder %s32, 1
          %s564 = scalar_select %p563, %s32, 1
          %s565 = scalar_lea.vmem %s4, %s564
        $region48: #{gpt_forward.1} parent=43 // pred_fallthru
          _
        // Predicated region
        $region49: #{gpt_forward.1} parent=43 // pred_check
          %p566 = pneg %p162
        $region50: #{gpt_forward.1} parent=43 // pred_check_branch
          %568 = sbr.rel (%p566) target = $region52
        $region51: #{gpt_forward.1} parent=43 // pred_region
          %p569 = scmp.lt.s32.totalorder %s32, 1
          %s570 = scalar_select %p569, %s32, 1
          %s571 = scalar_lea.vmem %s5, %s570
        $region52: #{gpt_forward.1} parent=43 // pred_fallthru
          _
        // Predicated region
        $region53: #{gpt_forward.1} parent=43 // pred_check
          %p572 = pneg %p188
        $region54: #{gpt_forward.1} parent=43 // pred_check_branch
          %574 = sbr.rel (%p572) target = $region56
        $region55: #{gpt_forward.1} parent=43 // pred_region
          %p575 = scmp.lt.s32.totalorder %s32, 1
          %s576 = scalar_select %p575, %s32, 1
          %s577 = smul.addr %s576, 16
          %s578 = smul.addr %s577, 8
          %s579 = scalar_lea.vmem %s6, %s578
        $region56: #{gpt_forward.1} parent=43 // pred_fallthru
          _
        // Predicated region
        $region57: #{gpt_forward.1} parent=43 // pred_check
          %p580 = pneg %p214
        $region58: #{gpt_forward.1} parent=43 // pred_check_branch
          %582 = sbr.rel (%p580) target = $region60
        $region59: #{gpt_forward.1} parent=43 // pred_region
          %p583 = scmp.lt.s32.totalorder %s32, 1
          %s584 = scalar_select %p583, %s32, 1
          %s585 = smul.addr %s584, 2
          %s586 = scalar_lea.vmem %s7, %s585
        $region60: #{gpt_forward.1} parent=43 // pred_fallthru
          _
        // Predicated region
        $region61: #{gpt_forward.1} parent=43 // pred_check
          %p587 = pneg %p240
        $region62: #{gpt_forward.1} parent=43 // pred_check_branch
          %589 = sbr.rel (%p587) target = $region64
        $region63: #{gpt_forward.1} parent=43 // pred_region
          %p590 = scmp.lt.s32.totalorder %s32, 1
          %s591 = scalar_select %p590, %s32, 1
          %s592 = smul.addr %s591, 8
          %s593 = smul.addr %s592, 8
          %s594 = scalar_lea.vmem %s8, %s593
        $region64: #{gpt_forward.1} parent=43 // pred_fallthru
          _
        // Predicated region
        $region65: #{gpt_forward.1} parent=43 // pred_check
          %p595 = pneg %p266
        $region66: #{gpt_forward.1} parent=43 // pred_check_branch
          %597 = sbr.rel (%p595) target = $region68
        $region67: #{gpt_forward.1} parent=43 // pred_region
          %p598 = scmp.lt.s32.totalorder %s32, 1
          %s599 = scalar_select %p598, %s32, 1
          %s600 = scalar_lea.vmem %s9, %s599
        $region68: #{gpt_forward.1} parent=43 // pred_fallthru
          _
        // Predicated region
        $region69: #{gpt_forward.1} parent=43 // pred_check
          %p601 = pneg %p292
        $region70: #{gpt_forward.1} parent=43 // pred_check_branch
          %603 = sbr.rel (%p601) target = $region72
        $region71: #{gpt_forward.1} parent=43 // pred_region
          %p604 = scmp.lt.s32.totalorder %s32, 1
          %s605 = scalar_select %p604, %s32, 1
          %s606 = scalar_lea.vmem %s10, %s605
        $region72: #{gpt_forward.1} parent=43 // pred_fallthru
          _
        // Predicated region
        $region73: #{gpt_forward.1} parent=43 // pred_check
          %p607 = pneg %p318
        $region74: #{gpt_forward.1} parent=43 // pred_check_branch
          %609 = sbr.rel (%p607) target = $region76
        $region75: #{gpt_forward.1} parent=43 // pred_region
          %s610 = sand.u32 %s308, 1
          %s611 = scalar_lea.sflag [#allocation5], %s610
          %s612 = sand.u32 %s308, 1
          %s613 = scalar_lea.vmem [#allocation4], %s612
          %s615 = ssub.s32 16, 16
          %616 = vsyncadd %s611, %s615
          %s617 = smul.addr %s32, 16
          %s618 = scalar_lea.hbm %s11, %s617
          %s620 = sshll.u32 %s613, 4
          %s621 = int_to_ptr.vmem [resolvable:$true] %s620
          %623 = dma.hbm_to_vmem [thread:$0]  %s618, 16, %s621, %s611
        $region76: #{gpt_forward.1} parent=43 // pred_fallthru
          _
        // Predicated region
        $region77: #{gpt_forward.1} parent=43 // pred_check
          %p624 = pneg %p344
        $region78: #{gpt_forward.1} parent=43 // pred_check_branch
          %626 = sbr.rel (%p624) target = $region80
        $region79: #{gpt_forward.1} parent=43 // pred_region
          %p627 = scmp.lt.s32.totalorder %s32, 1
          %s628 = scalar_select %p627, %s32, 1
          %s629 = smul.addr %s628, 16
          %s630 = smul.addr %s629, 8
          %s631 = scalar_lea.vmem %s12, %s630
        $region80: #{gpt_forward.1} parent=43 // pred_fallthru
          _
        // Predicated region
        $region81: #{gpt_forward.1} parent=43 // pred_check
          %p632 = pneg %p370
        $region82: #{gpt_forward.1} parent=43 // pred_check_branch
          %634 = sbr.rel (%p632) target = $region84
        $region83: #{gpt_forward.1} parent=43 // pred_region
          %p635 = scmp.lt.s32.totalorder %s32, 1
          %s636 = scalar_select %p635, %s32, 1
          %s637 = smul.addr %s636, 2
          %s638 = scalar_lea.vmem %s13, %s637
        $region84: #{gpt_forward.1} parent=43 // pred_fallthru
          _
        // Predicated region
        $region85: #{gpt_forward.1} parent=43 // pred_check
          %p639 = pneg %p396
        $region86: #{gpt_forward.1} parent=43 // pred_check_branch
          %641 = sbr.rel (%p639) target = $region88
        $region87: #{gpt_forward.1} parent=43 // pred_region
          %p642 = scmp.lt.s32.totalorder %s32, 1
          %s643 = scalar_select %p642, %s32, 1
          %s644 = smul.addr %s643, 32
          %s645 = smul.addr %s644, 8
          %s646 = scalar_lea.vmem %s14, %s645
        $region88: #{gpt_forward.1} parent=43 // pred_fallthru
          _
        // Predicated region
        $region89: #{gpt_forward.1} parent=43 // pred_check
          %p647 = pneg %p422
        $region90: #{gpt_forward.1} parent=43 // pred_check_branch
          %649 = sbr.rel (%p647) target = $region92
        $region91: #{gpt_forward.1} parent=43 // pred_region
          %s650 = sand.u32 %s32, 1
          %s651 = scalar_lea.sflag [#allocation8], %s650
          %s652 = sand.u32 %s412, 1
          %s653 = scalar_lea.vmem [#allocation7], %s652
          %s655 = ssub.s32 16, 16
          %656 = vsyncadd %s651, %s655
          %s657 = smul.addr %s32, 16
          %s658 = scalar_lea.hbm %s15, %s657
          %s660 = sshll.u32 %s653, 4
          %s661 = int_to_ptr.vmem [resolvable:$true] %s660
          %663 = dma.hbm_to_vmem [thread:$0]  %s658, 16, %s661, %s651
        $region92: #{gpt_forward.1} parent=43 // pred_fallthru
          _
      $region44: #{gpt_forward.1} parent=5 // pred_fallthru
        _
      %p664 = scmp.le.s32.totalorder 1, %s32
      %p665 = scmp.lt.s32.totalorder %s32, 3
      %p666 = pnand %p664, %p665
      %p667 = pneg %p666
      // Predicated region
      $region93: #{gpt_forward.1} parent=5 // pred_check
        _
      $region94: #{gpt_forward.1} parent=5 // pred_check_branch
        %669 = sbr.rel (%p666) target = $region96
      $region95: #{gpt_forward.1} parent=5 // pred_region
        %s670 = ssub.s32 %s32, 1
        %s671 = sand.u32 %s311, 1
        %s672 = scalar_lea.sflag [#allocation5], %s671
        %s673 = sand.u32 %s311, 1
        %s674 = scalar_lea.vmem [#allocation4], %s673
        // Predicated region
        $region97: #{gpt_forward.1} parent=95 // pred_check
          %p675 = pneg %p324
        $region98: #{gpt_forward.1} parent=95 // pred_check_branch
          %677 = sbr.rel (%p675) target = $region100
        $region99: #{gpt_forward.1} parent=95 // pred_region
          %678 = dma.done %s672, 16
        $region100: #{gpt_forward.1} parent=95 // pred_fallthru
          _
        %s679 = sand.u32 %s37, 1
        %s680 = scalar_lea.sflag [#allocation8], %s679
        %s681 = sand.u32 %s415, 1
        %s682 = scalar_lea.vmem [#allocation7], %s681
        // Predicated region
        $region101: #{gpt_forward.1} parent=95 // pred_check
          %p683 = pneg %p428
        $region102: #{gpt_forward.1} parent=95 // pred_check_branch
          %685 = sbr.rel (%p683) target = $region104
        $region103: #{gpt_forward.1} parent=95 // pred_region
          %686 = dma.done %s680, 16
        $region104: #{gpt_forward.1} parent=95 // pred_fallthru
          _
        // Predicated region
        $region105: #{gpt_forward.1} parent=95 // pred_check
          %p687 = pneg %p470
        $region106: #{gpt_forward.1} parent=95 // pred_check_branch
          %689 = sbr.rel (%p687) target = $region108
        $region107: #{gpt_forward.1} parent=95 // pred_region
          %690 = dma.done [#allocation8], 16
        $region108: #{gpt_forward.1} parent=95 // pred_fallthru
          _
        %p691 = pneg %p53
        %p692 = pneg %p50
        %p693 = pneg %p74
        %p694 = pneg %p71
        %p695 = pneg %p95
        %p696 = pneg %p92
        %p697 = pneg %p116
        %p698 = pneg %p113
        %p699 = scmp.lt.s32.totalorder %s37, 1
        %s700 = scalar_select %p699, %s37, 1
        %s701 = scalar_lea.vmem %s4, %s700
        %p702 = pneg %p142
        %p703 = pneg %p139
        %p704 = scmp.lt.s32.totalorder %s37, 1
        %s705 = scalar_select %p704, %s37, 1
        %s706 = scalar_lea.vmem %s5, %s705
        %p707 = pneg %p168
        %p708 = pneg %p165
        %p709 = scmp.lt.s32.totalorder %s37, 1
        %s710 = scalar_select %p709, %s37, 1
        %s711 = smul.addr %s710, 16
        %s712 = smul.addr %s711, 8
        %s713 = scalar_lea.vmem %s6, %s712
        %p714 = pneg %p194
        %p715 = pneg %p191
        %p716 = scmp.lt.s32.totalorder %s37, 1
        %s717 = scalar_select %p716, %s37, 1
        %s718 = smul.addr %s717, 2
        %s719 = scalar_lea.vmem %s7, %s718
        %p720 = pneg %p220
        %p721 = pneg %p217
        %p722 = scmp.lt.s32.totalorder %s37, 1
        %s723 = scalar_select %p722, %s37, 1
        %s724 = smul.addr %s723, 8
        %s725 = smul.addr %s724, 8
        %s726 = scalar_lea.vmem %s8, %s725
        %p727 = pneg %p246
        %p728 = pneg %p243
        %p729 = scmp.lt.s32.totalorder %s37, 1
        %s730 = scalar_select %p729, %s37, 1
        %s731 = scalar_lea.vmem %s9, %s730
        %p732 = pneg %p272
        %p733 = pneg %p269
        %p734 = scmp.lt.s32.totalorder %s37, 1
        %s735 = scalar_select %p734, %s37, 1
        %s736 = scalar_lea.vmem %s10, %s735
        %p737 = pneg %p298
        %p738 = pneg %p295
        %s739 = sand.u32 %s311, 1
        %s740 = scalar_lea.sflag [#allocation5], %s739
        %s741 = sand.u32 %s311, 1
        %s742 = scalar_lea.vmem [#allocation4], %s741
        %p743 = pneg %p324
        %p744 = pneg %p321
        %p745 = scmp.lt.s32.totalorder %s37, 1
        %s746 = scalar_select %p745, %s37, 1
        %s747 = smul.addr %s746, 16
        %s748 = smul.addr %s747, 8
        %s749 = scalar_lea.vmem %s12, %s748
        %p750 = pneg %p350
        %p751 = pneg %p347
        %p752 = scmp.lt.s32.totalorder %s37, 1
        %s753 = scalar_select %p752, %s37, 1
        %s754 = smul.addr %s753, 2
        %s755 = scalar_lea.vmem %s13, %s754
        %p756 = pneg %p376
        %p757 = pneg %p373
        %p758 = scmp.lt.s32.totalorder %s37, 1
        %s759 = scalar_select %p758, %s37, 1
        %s760 = smul.addr %s759, 32
        %s761 = smul.addr %s760, 8
        %s762 = scalar_lea.vmem %s14, %s761
        %p763 = pneg %p402
        %p764 = pneg %p399
        %s765 = sand.u32 %s37, 1
        %s766 = scalar_lea.sflag [#allocation8], %s765
        %s767 = sand.u32 %s415, 1
        %s768 = scalar_lea.vmem [#allocation7], %s767
        %p769 = pneg %p428
        %p770 = pneg %p425
        %p771 = pneg %p449
        %p772 = pneg %p446
        %p773 = pneg %p470
        %p774 = pneg %p467
        %p775 = pneg %p491
        %p776 = pneg %p488
        %p777 = pneg %p512
        %p778 = pneg %p509
        %p779 = scmp.lt.s32.totalorder %s37, 1
        %s780 = scalar_select %p779, %s37, 1
        %s781 = scalar_lea.vmem %s4, %s780
        %p782 = scmp.lt.s32.totalorder %s37, 1
        %s783 = scalar_select %p782, %s37, 1
        %s784 = scalar_lea.vmem %s5, %s783
        %p785 = scmp.lt.s32.totalorder %s37, 1
        %s786 = scalar_select %p785, %s37, 1
        %s787 = smul.addr %s786, 16
        %s788 = smul.addr %s787, 8
        %s789 = scalar_lea.vmem %s6, %s788
        %p790 = scmp.lt.s32.totalorder %s37, 1
        %s791 = scalar_select %p790, %s37, 1
        %s792 = smul.addr %s791, 2
        %s793 = scalar_lea.vmem %s7, %s792
        %p794 = scmp.lt.s32.totalorder %s37, 1
        %s795 = scalar_select %p794, %s37, 1
        %s796 = smul.addr %s795, 8
        %s797 = smul.addr %s796, 8
        %s798 = scalar_lea.vmem %s8, %s797
        %p799 = scmp.lt.s32.totalorder %s37, 1
        %s800 = scalar_select %p799, %s37, 1
        %s801 = scalar_lea.vmem %s9, %s800
        %p802 = scmp.lt.s32.totalorder %s37, 1
        %s803 = scalar_select %p802, %s37, 1
        %s804 = scalar_lea.vmem %s10, %s803
        %p805 = scmp.lt.s32.totalorder %s37, 1
        %s806 = scalar_select %p805, %s37, 1
        %s807 = smul.addr %s806, 16
        %s808 = smul.addr %s807, 8
        %s809 = scalar_lea.vmem %s12, %s808
        %p810 = scmp.lt.s32.totalorder %s37, 1
        %s811 = scalar_select %p810, %s37, 1
        %s812 = smul.addr %s811, 2
        %s813 = scalar_lea.vmem %s13, %s812
        %p814 = scmp.lt.s32.totalorder %s37, 1
        %s815 = scalar_select %p814, %s37, 1
        %s816 = smul.addr %s815, 32
        %s817 = smul.addr %s816, 8
        %s818 = scalar_lea.vmem %s14, %s817
        %p819 = scmp.eq.s32.totalorder %s37, 0
        // Predicated region
        $region109: #{gpt_forward.1} parent=95 // pred_check
          %p820 = pneg %p819
        $region110: #{gpt_forward.1} parent=95 // pred_check_branch
          %822 = sbr.rel (%p820) target = $region112
        $region111: #{gpt_forward.1} parent=95 // pred_region
          %v823 = vld [vmem:[%s0] sm:$0xff]
          %v824 = vld [vmem:[%s0 + $0x8] sm:$0xff]
          %v825 = vld [vmem:[%s0 + $0x10] sm:$0xff]
          %v826 = vld [vmem:[%s0 + $0x18] sm:$0xff]
          %v827 = vlaneseq
          %v828 = vand.u32 %v827, 127
          %829 = vset.pattern.permute.xlu0 0
          %830 = vperm.xlu0 %829, %v823
          %v831 = vpop.permute.xlu0 %830
          %832 = vset.pattern.permute.xlu0 0
          %833 = vperm.xlu0 %832, %v824
          %v834 = vpop.permute.xlu0 %833
          %835 = vset.pattern.permute.xlu0 0
          %836 = vperm.xlu0 %835, %v825
          %v837 = vpop.permute.xlu0 %836
          %838 = vset.pattern.permute.xlu0 0
          %839 = vperm.xlu0 %838, %v826
          %v840 = vpop.permute.xlu0 %839
          %vm841 = vcmp.eq.s32.totalorder %v831, %v828
          %vm842 = vcmp.eq.s32.totalorder %v834, %v828
          %vm843 = vcmp.eq.s32.totalorder %v837, %v828
          %vm844 = vcmp.eq.s32.totalorder %v840, %v828
          %v845 = vsel %vm841, 1, 0
          %v846 = vsel %vm842, 1, 0
          %v847 = vsel %vm843, 1, 0
          %v848 = vsel %vm844, 1, 0
          %v849 = vcvt.s32.f32 %v845
          %v850 = vcvt.s32.f32 %v846
          %v851 = vcvt.s32.f32 %v847
          %v852 = vcvt.s32.f32 %v848
          %v853 = vld [vmem:[%s2] sm:$0xff]
          %v854 = vld [vmem:[%s2 + $0x8] sm:$0xff]
          %v855 = vld [vmem:[%s2 + $0x10] sm:$0xff]
          %v856 = vld [vmem:[%s2 + $0x18] sm:$0xff]
          %v857 = vld [vmem:[%s2 + $0x20] sm:$0xff]
          %v858 = vld [vmem:[%s2 + $0x28] sm:$0xff]
          %v859 = vld [vmem:[%s2 + $0x30] sm:$0xff]
          %v860 = vld [vmem:[%s2 + $0x38] sm:$0xff]
          %v861 = vld [vmem:[%s2 + $0x40] sm:$0xff]
          %v862 = vld [vmem:[%s2 + $0x48] sm:$0xff]
          %v863 = vld [vmem:[%s2 + $0x50] sm:$0xff]
          %v864 = vld [vmem:[%s2 + $0x58] sm:$0xff]
          %v865 = vld [vmem:[%s2 + $0x60] sm:$0xff]
          %v866 = vld [vmem:[%s2 + $0x68] sm:$0xff]
          %v867 = vld [vmem:[%s2 + $0x70] sm:$0xff]
          %v868 = vld [vmem:[%s2 + $0x78] sm:$0xff]
          %869 = vmatprep.subr.mxu0 0.0
          %870 = vmatpush1.msra.mxu0 %v853
          %871 = vmatprep.subr.mxu0 0.0
          %872 = vmatpush1.msra.mxu0 %v854
          %873 = vmatprep.subr.mxu0 0.0
          %874 = vmatpush1.msra.mxu0 %v855
          %875 = vmatprep.subr.mxu0 0.0
          %876 = vmatpush1.msra.mxu0 %v856
          %877 = vmatprep.subr.mxu0 0.0
          %878 = vmatpush1.msra.mxu0 %v857
          %879 = vmatprep.subr.mxu0 0.0
          %880 = vmatpush1.msra.mxu0 %v858
          %881 = vmatprep.subr.mxu0 0.0
          %882 = vmatpush1.msra.mxu0 %v859
          %883 = vmatprep.subr.mxu0 0.0
          %884 = vmatpush1.msra.mxu0 %v860
          %885 = vmatprep.subr.mxu0 0.0
          %886 = vmatpush1.msra.mxu0 %v861
          %887 = vmatprep.subr.mxu0 0.0
          %888 = vmatpush1.msra.mxu0 %v862
          %889 = vmatprep.subr.mxu0 0.0
          %890 = vmatpush1.msra.mxu0 %v863
          %891 = vmatprep.subr.mxu0 0.0
          %892 = vmatpush1.msra.mxu0 %v864
          %893 = vmatprep.subr.mxu0 0.0
          %894 = vmatpush1.msra.mxu0 %v865
          %895 = vmatprep.subr.mxu0 0.0
          %896 = vmatpush1.msra.mxu0 %v866
          %897 = vmatprep.subr.mxu0 0.0
          %898 = vmatpush1.msra.mxu0 %v867
          %899 = vmatprep.subr.mxu0 0.0
          %900 = vmatpush1.msra.mxu0 %v868
          %901 = vmatprep.subr.mxu0 0.0
          %902 = vmatpush1.msra.mxu0 0.0
          %903 = vmatprep.subr.mxu0 0.0
          %904 = vmatpush1.msra.mxu0 0.0
          %905 = vmatprep.subr.mxu0 0.0
          %906 = vmatpush1.msra.mxu0 0.0
          %907 = vmatprep.subr.mxu0 0.0
          %908 = vmatpush1.msra.mxu0 0.0
          %909 = vmatprep.subr.mxu0 0.0
          %910 = vmatpush1.msra.mxu0 0.0
          %911 = vmatprep.subr.mxu0 0.0
          %912 = vmatpush1.msra.mxu0 0.0
          %913 = vmatprep.subr.mxu0 0.0
          %914 = vmatpush1.msra.mxu0 0.0
          %915 = vmatprep.subr.mxu0 0.0
          %916 = vmatpush1.msra.mxu0 0.0
          %917 = vmatprep.subr.mxu0 0.0
          %918 = vmatpush1.msra.mxu0 0.0
          %919 = vmatprep.subr.mxu0 0.0
          %920 = vmatpush1.msra.mxu0 0.0
          %921 = vmatprep.subr.mxu0 0.0
          %922 = vmatpush1.msra.mxu0 0.0
          %923 = vmatprep.subr.mxu0 0.0
          %924 = vmatpush1.msra.mxu0 0.0
          %925 = vmatprep.subr.mxu0 0.0
          %926 = vmatpush1.msra.mxu0 0.0
          %927 = vmatprep.subr.mxu0 0.0
          %928 = vmatpush1.msra.mxu0 0.0
          %929 = vmatprep.subr.mxu0 0.0
          %930 = vmatpush1.msra.mxu0 0.0
          %931 = vmatprep.subr.mxu0 0.0
          %932 = vmatpush1.msra.mxu0 0.0
          %933 = vmatprep.mubr.f32.mxu0 0.0
          %934 = vmatmul.mubr.f32.gmra.mrb[0].mxu0 %v849
          %v935 = vpop.f32.mrb[0].mxu0
          %v936 = vadd.f32 0.0, %v935
          %v937 = vpop.f32.mrb[0].mxu0
          %938 = vmatprep.mubr.f32.mxu0 0.0
          %939 = vmatmul.mubr.f32.gmra.mrb[0].mxu0 %v850
          %v940 = vpop.f32.mrb[0].mxu0
          %v941 = vadd.f32 0.0, %v940
          %v942 = vpop.f32.mrb[0].mxu0
          %943 = vmatprep.mubr.f32.mxu0 0.0
          %944 = vmatmul.mubr.f32.gmra.mrb[0].mxu0 %v851
          %v945 = vpop.f32.mrb[0].mxu0
          %v946 = vadd.f32 0.0, %v945
          %v947 = vpop.f32.mrb[0].mxu0
          %948 = vmatprep.mubr.f32.mxu0 0.0
          %949 = vmatmul.mubr.f32.gmra.mrb[0].mxu0 %v852
          %v950 = vpop.f32.mrb[0].mxu0
          %v951 = vadd.f32 0.0, %v950
          %v952 = vpop.f32.mrb[0].mxu0
          %953 = vdwg.mxu0
          %v954 = vld [vmem:[%s3] sm:$0xff]
          %v955 = vld [vmem:[%s3 + $0x8] sm:$0xff]
          %v956 = vadd.f32 %v936, %v954
          %v957 = vadd.f32 %v941, %v955
          %v958 = vadd.f32 %v946, %v954
          %v959 = vadd.f32 %v951, %v955
          %vm960 = vcmask 523264
          %961 = vst.msk [vmem:[#allocation2] sm:$0xff] %vm960, %v956
          %962 = vst.msk [vmem:[#allocation2 + $0x8] sm:$0xff] %vm960, %v957
          %963 = vst.msk [vmem:[#allocation2 + $0x10] sm:$0xff] %vm960, %v958
          %964 = vst.msk [vmem:[#allocation2 + $0x18] sm:$0xff] %vm960, %v959
          %v965 = vlaneseq
          %v966 = vshrl.u32 %v965, 7
          %v967 = vadd.s32 %v966, 8
          %v968 = vadd.s32 %v966, 16
          %v969 = vadd.s32 %v966, 24
          %v970 = vadd.s32 %v966, 32
          %v971 = vadd.s32 %v966, 40
          %v972 = vadd.s32 %v966, 48
          %v973 = vadd.s32 %v966, 56
          %v974 = vadd.s32 %v966, 64
          %v975 = vadd.s32 %v966, 72
          %v976 = vadd.s32 %v966, 80
          %v977 = vadd.s32 %v966, 88
          %v978 = vadd.s32 %v966, 96
          %v979 = vadd.s32 %v966, 104
          %v980 = vadd.s32 %v966, 112
          %v981 = vadd.s32 %v966, 120
          %v982 = vshra.s32 %v966, 4
          %v983 = vshra.s32 %v967, 4
          %v984 = vshra.s32 %v968, 4
          %v985 = vshra.s32 %v969, 4
          %v986 = vshra.s32 %v970, 4
          %v987 = vshra.s32 %v971, 4
          %v988 = vshra.s32 %v972, 4
          %v989 = vshra.s32 %v973, 4
          %v990 = vshra.s32 %v974, 4
          %v991 = vshra.s32 %v975, 4
          %v992 = vshra.s32 %v976, 4
          %v993 = vshra.s32 %v977, 4
          %v994 = vshra.s32 %v978, 4
          %v995 = vshra.s32 %v979, 4
          %v996 = vshra.s32 %v980, 4
          %v997 = vshra.s32 %v981, 4
          %v998 = vshra.s32 %v828, 4
          %vm999 = vcmp.eq.s32.totalorder %v982, %v998
          %vm1000 = vcmp.eq.s32.totalorder %v983, %v998
          %vm1001 = vcmp.eq.s32.totalorder %v984, %v998
          %vm1002 = vcmp.eq.s32.totalorder %v985, %v998
          %vm1003 = vcmp.eq.s32.totalorder %v986, %v998
          %vm1004 = vcmp.eq.s32.totalorder %v987, %v998
          %vm1005 = vcmp.eq.s32.totalorder %v988, %v998
          %vm1006 = vcmp.eq.s32.totalorder %v989, %v998
          %vm1007 = vcmp.eq.s32.totalorder %v990, %v998
          %vm1008 = vcmp.eq.s32.totalorder %v991, %v998
          %vm1009 = vcmp.eq.s32.totalorder %v992, %v998
          %vm1010 = vcmp.eq.s32.totalorder %v993, %v998
          %vm1011 = vcmp.eq.s32.totalorder %v994, %v998
          %vm1012 = vcmp.eq.s32.totalorder %v995, %v998
          %vm1013 = vcmp.eq.s32.totalorder %v996, %v998
          %vm1014 = vcmp.eq.s32.totalorder %v997, %v998
          %v1015 = vand.u32 %v828, 15
          %v1016 = vand.u32 %v966, 15
          %v1017 = vand.u32 %v967, 15
          %v1018 = vand.u32 %v968, 15
          %v1019 = vand.u32 %v969, 15
          %v1020 = vand.u32 %v970, 15
          %v1021 = vand.u32 %v971, 15
          %v1022 = vand.u32 %v972, 15
          %v1023 = vand.u32 %v973, 15
          %v1024 = vand.u32 %v974, 15
          %v1025 = vand.u32 %v975, 15
          %v1026 = vand.u32 %v976, 15
          %v1027 = vand.u32 %v977, 15
          %v1028 = vand.u32 %v978, 15
          %v1029 = vand.u32 %v979, 15
          %v1030 = vand.u32 %v980, 15
          %v1031 = vand.u32 %v981, 15
          %vm1032 = vcmp.le.s32.totalorder %v1015, %v1016
          %vm1033 = vcmp.le.s32.totalorder %v1015, %v1017
          %vm1034 = vcmp.le.s32.totalorder %v1015, %v1018
          %vm1035 = vcmp.le.s32.totalorder %v1015, %v1019
          %vm1036 = vcmp.le.s32.totalorder %v1015, %v1020
          %vm1037 = vcmp.le.s32.totalorder %v1015, %v1021
          %vm1038 = vcmp.le.s32.totalorder %v1015, %v1022
          %vm1039 = vcmp.le.s32.totalorder %v1015, %v1023
          %vm1040 = vcmp.le.s32.totalorder %v1015, %v1024
          %vm1041 = vcmp.le.s32.totalorder %v1015, %v1025
          %vm1042 = vcmp.le.s32.totalorder %v1015, %v1026
          %vm1043 = vcmp.le.s32.totalorder %v1015, %v1027
          %vm1044 = vcmp.le.s32.totalorder %v1015, %v1028
          %vm1045 = vcmp.le.s32.totalorder %v1015, %v1029
          %vm1046 = vcmp.le.s32.totalorder %v1015, %v1030
          %vm1047 = vcmp.le.s32.totalorder %v1015, %v1031
          %v1048 = vld [vmem:[%s1] sm:$0x1]
          %v1049 = vsub.f32 1.0, %v1048
          %v1050 = vmul.f32 %v1049, -10000.0
          %v1051 = vld [vmem:[%s1 + $0x1] sm:$0x1]
          %v1052 = vsub.f32 1.0, %v1051
          %v1053 = vmul.f32 %v1052, -10000.0
          %1055 = vrot.lane.b32.xlu0 %v1050, 16
          %v1056 = vpop.permute.xlu0 %1055
          %1058 = vrot.lane.b32.xlu0 %v1050, 32
          %v1059 = vpop.permute.xlu0 %1058
          %1061 = vrot.lane.b32.xlu0 %v1050, 48
          %v1062 = vpop.permute.xlu0 %1061
          %1065 = vrot.lane.b32.xlu0 %v1053, 64
          %v1066 = vpop.permute.xlu0 %1065
          %1068 = vrot.lane.b32.xlu0 %v1053, 80
          %v1069 = vpop.permute.xlu0 %1068
          %1071 = vrot.lane.b32.xlu0 %v1053, 96
          %v1072 = vpop.permute.xlu0 %1071
          %1074 = vrot.lane.b32.xlu0 %v1053, 112
          %v1075 = vpop.permute.xlu0 %1074
          %vm1077 = vcmask 130048
          %v1078 = vsel %vm1077, %v1050, %v1056
          %vm1079 = vcmask 261120
          %v1080 = vsel %vm1079, %v1078, %v1059
          %vm1081 = vcmask 392192
          %v1082 = vsel %vm1081, %v1080, %v1062
          %v1083 = vsel %vm960, %v1082, %v1066
          %vm1084 = vcmask 654336
          %v1085 = vsel %vm1084, %v1083, %v1069
          %vm1086 = vcmask 785408
          %v1087 = vsel %vm1086, %v1085, %v1072
          %vm1088 = vcmask 916480
          %v1089 = vsel %vm1088, %v1087, %v1075
          %vm1090 = vmand %vm999, %vm1032
          %vm1091 = vmand %vm1000, %vm1033
          %vm1092 = vmand %vm1001, %vm1034
          %vm1093 = vmand %vm1002, %vm1035
          %vm1094 = vmand %vm1003, %vm1036
          %vm1095 = vmand %vm1004, %vm1037
          %vm1096 = vmand %vm1005, %vm1038
          %vm1097 = vmand %vm1006, %vm1039
          %vm1098 = vmand %vm1007, %vm1040
          %vm1099 = vmand %vm1008, %vm1041
          %vm1100 = vmand %vm1009, %vm1042
          %vm1101 = vmand %vm1010, %vm1043
          %vm1102 = vmand %vm1011, %vm1044
          %vm1103 = vmand %vm1012, %vm1045
          %vm1104 = vmand %vm1013, %vm1046
          %vm1105 = vmand %vm1014, %vm1047
          %v1106 = vlaneseq
          %v1107 = vshrl.u32 %v1106, 7
          %v1108 = vsub.s32 0, %v1107
          %v1109 = vrot.slane %v1089, %v1108
          %v1110 = vsel %vm1090, %v1109, -10000.0
          %v1111 = vsel %vm1091, %v1109, -10000.0
          %v1112 = vsel %vm1092, %v1109, -10000.0
          %v1113 = vsel %vm1093, %v1109, -10000.0
          %v1114 = vsel %vm1094, %v1109, -10000.0
          %v1115 = vsel %vm1095, %v1109, -10000.0
          %v1116 = vsel %vm1096, %v1109, -10000.0
          %v1117 = vsel %vm1097, %v1109, -10000.0
          %v1118 = vsel %vm1098, %v1109, -10000.0
          %v1119 = vsel %vm1099, %v1109, -10000.0
          %v1120 = vsel %vm1100, %v1109, -10000.0
          %v1121 = vsel %vm1101, %v1109, -10000.0
          %v1122 = vsel %vm1102, %v1109, -10000.0
          %v1123 = vsel %vm1103, %v1109, -10000.0
          %v1124 = vsel %vm1104, %v1109, -10000.0
          %v1125 = vsel %vm1105, %v1109, -10000.0
          %1126 = vst [vmem:[#allocation3] sm:$0xff] %v1110
          %1127 = vst [vmem:[#allocation3 + $0x8] sm:$0xff] %v1111
          %1128 = vst [vmem:[#allocation3 + $0x10] sm:$0xff] %v1112
          %1129 = vst [vmem:[#allocation3 + $0x18] sm:$0xff] %v1113
          %1130 = vst [vmem:[#allocation3 + $0x20] sm:$0xff] %v1114
          %1131 = vst [vmem:[#allocation3 + $0x28] sm:$0xff] %v1115
          %1132 = vst [vmem:[#allocation3 + $0x30] sm:$0xff] %v1116
          %1133 = vst [vmem:[#allocation3 + $0x38] sm:$0xff] %v1117
          %1134 = vst [vmem:[#allocation3 + $0x40] sm:$0xff] %v1118
          %1135 = vst [vmem:[#allocation3 + $0x48] sm:$0xff] %v1119
          %1136 = vst [vmem:[#allocation3 + $0x50] sm:$0xff] %v1120
          %1137 = vst [vmem:[#allocation3 + $0x58] sm:$0xff] %v1121
          %1138 = vst [vmem:[#allocation3 + $0x60] sm:$0xff] %v1122
          %1139 = vst [vmem:[#allocation3 + $0x68] sm:$0xff] %v1123
          %1140 = vst [vmem:[#allocation3 + $0x70] sm:$0xff] %v1124
          %1141 = vst [vmem:[#allocation3 + $0x78] sm:$0xff] %v1125
        $region112: #{gpt_forward.1} parent=95 // pred_fallthru
          _
        %v1142 = vld [vmem:[#allocation2] sm:$0xff]
        %v1143 = vld [vmem:[#allocation2 + $0x8] sm:$0xff]
        %v1144 = vld [vmem:[#allocation2 + $0x10] sm:$0xff]
        %v1145 = vld [vmem:[#allocation2 + $0x18] sm:$0xff]
        %v1146 = vld [vmem:[%s781] sm:$0x1]
        %v1147 = vld [vmem:[%s784] sm:$0x1]
        %vm1148 = vcmask 523264
        %v1149 = vsel %vm1148, %v1142, 0.0
        %1150 = vadd.xlane.f32.xlu0 %v1149
        %v1151 = vpop.xlane.xlu0 %1150
        %v1152 = vsel %vm1148, %v1143, 0.0
        %1153 = vadd.xlane.f32.xlu0 %v1152
        %v1154 = vpop.xlane.xlu0 %1153
        %v1155 = vsel %vm1148, %v1144, 0.0
        %1156 = vadd.xlane.f32.xlu0 %v1155
        %v1157 = vpop.xlane.xlu0 %1156
        %v1158 = vsel %vm1148, %v1145, 0.0
        %1159 = vadd.xlane.f32.xlu0 %v1158
        %v1160 = vpop.xlane.xlu0 %1159
        %v1161 = vrcp.pop 64.0
        %v1162 = vmul.f32 %v1151, %v1161
        %v1163 = vmul.f32 %v1154, %v1161
        %v1164 = vmul.f32 %v1157, %v1161
        %v1165 = vmul.f32 %v1160, %v1161
        %v1166 = vsub.f32 %v1142, %v1162
        %v1167 = vsub.f32 %v1143, %v1163
        %v1168 = vsub.f32 %v1144, %v1164
        %v1169 = vsub.f32 %v1145, %v1165
        %v1170 = vmul.f32 %v1166, %v1166
        %v1171 = vmul.f32 %v1167, %v1167
        %v1172 = vmul.f32 %v1168, %v1168
        %v1173 = vmul.f32 %v1169, %v1169
        %v1174 = vsel %vm1148, %v1170, 0.0
        %1175 = vadd.xlane.f32.xlu0 %v1174
        %v1176 = vpop.xlane.xlu0 %1175
        %v1177 = vsel %vm1148, %v1171, 0.0
        %1178 = vadd.xlane.f32.xlu0 %v1177
        %v1179 = vpop.xlane.xlu0 %1178
        %v1180 = vsel %vm1148, %v1172, 0.0
        %1181 = vadd.xlane.f32.xlu0 %v1180
        %v1182 = vpop.xlane.xlu0 %1181
        %v1183 = vsel %vm1148, %v1173, 0.0
        %1184 = vadd.xlane.f32.xlu0 %v1183
        %v1185 = vpop.xlane.xlu0 %1184
        %v1186 = vmul.f32 %v1176, %v1161
        %v1187 = vmul.f32 %v1179, %v1161
        %v1188 = vmul.f32 %v1182, %v1161
        %v1189 = vmul.f32 %v1185, %v1161
        %v1190 = vadd.f32 %v1186, 1e-05
        %v1191 = vadd.f32 %v1187, 1e-05
        %v1192 = vadd.f32 %v1188, 1e-05
        %v1193 = vadd.f32 %v1189, 1e-05
        %v1194 = vrsqrt.pop %v1190
        %v1195 = vrsqrt.pop %v1191
        %v1196 = vrsqrt.pop %v1192
        %v1197 = vrsqrt.pop %v1193
        %v1198 = vmul.f32 %v1166, %v1194
        %v1199 = vmul.f32 %v1167, %v1195
        %v1200 = vmul.f32 %v1168, %v1196
        %v1201 = vmul.f32 %v1169, %v1197
        %v1203 = vlaneseq
        %v1204 = vshrl.u32 %v1203, 7
        %v1205 = vsub.s32 0, %v1204
        %v1206 = vrot.slane %v1146, %v1205
        %v1208 = vmul.f32 %v1198, %v1206
        %v1209 = vmul.f32 %v1199, %v1206
        %v1210 = vmul.f32 %v1200, %v1206
        %v1211 = vmul.f32 %v1201, %v1206
        %v1213 = vlaneseq
        %v1214 = vshrl.u32 %v1213, 7
        %v1215 = vsub.s32 0, %v1214
        %v1216 = vrot.slane %v1147, %v1215
        %v1218 = vadd.f32 %v1208, %v1216
        %v1219 = vadd.f32 %v1209, %v1216
        %v1220 = vadd.f32 %v1210, %v1216
        %v1221 = vadd.f32 %v1211, %v1216
        %v1222 = vld [vmem:[%s789] sm:$0xff]
        %v1223 = vld [vmem:[%s789 + $0x8] sm:$0xff]
        %v1224 = vld [vmem:[%s789 + $0x10] sm:$0xff]
        %v1225 = vld [vmem:[%s789 + $0x18] sm:$0xff]
        %v1226 = vld [vmem:[%s789 + $0x20] sm:$0xff]
        %v1227 = vld [vmem:[%s789 + $0x28] sm:$0xff]
        %v1228 = vld [vmem:[%s789 + $0x30] sm:$0xff]
        %v1229 = vld [vmem:[%s789 + $0x38] sm:$0xff]
        %v1230 = vld [vmem:[%s789 + $0x40] sm:$0xff]
        %v1231 = vld [vmem:[%s789 + $0x48] sm:$0xff]
        %v1232 = vld [vmem:[%s789 + $0x50] sm:$0xff]
        %v1233 = vld [vmem:[%s789 + $0x58] sm:$0xff]
        %v1234 = vld [vmem:[%s789 + $0x60] sm:$0xff]
        %v1235 = vld [vmem:[%s789 + $0x68] sm:$0xff]
        %v1236 = vld [vmem:[%s789 + $0x70] sm:$0xff]
        %v1237 = vld [vmem:[%s789 + $0x78] sm:$0xff]
        %v1238 = vld [vmem:[%s793] sm:$0x3]
        %v1240 = vlaneseq
        %v1241 = vshrl.u32 %v1240, 7
        %v1242 = vsub.s32 0, %v1241
        %v1243 = vrot.slane %v1238, %v1242
        %v1244 = vlaneseq
        %v1245 = vshrl.u32 %v1244, 7
        %v1246 = vsub.s32 1, %v1245
        %v1247 = vrot.slane %v1238, %v1246
        %v1251 = vsel %vm1148, %v1218, 0
        %v1254 = vsel %vm1148, %v1219, 0
        %v1257 = vsel %vm1148, %v1220, 0
        %v1260 = vsel %vm1148, %v1221, 0
        %1262 = vmatprep.subr.mxu0 %v1223
        %1263 = vmatpush1.msra.mxu0 %v1222
        %1264 = vmatprep.subr.mxu0 %v1225
        %1265 = vmatpush1.msra.mxu0 %v1224
        %1266 = vmatprep.subr.mxu0 %v1227
        %1267 = vmatpush1.msra.mxu0 %v1226
        %1268 = vmatprep.subr.mxu0 %v1229
        %1269 = vmatpush1.msra.mxu0 %v1228
        %1270 = vmatprep.subr.mxu0 %v1231
        %1271 = vmatpush1.msra.mxu0 %v1230
        %1272 = vmatprep.subr.mxu0 %v1233
        %1273 = vmatpush1.msra.mxu0 %v1232
        %1274 = vmatprep.subr.mxu0 %v1235
        %1275 = vmatpush1.msra.mxu0 %v1234
        %1276 = vmatprep.subr.mxu0 %v1237
        %1277 = vmatpush1.msra.mxu0 %v1236
        %1278 = vmatprep.subr.mxu0 0.0
        %1279 = vmatpush1.msra.mxu0 0.0
        %1280 = vmatprep.subr.mxu0 0.0
        %1281 = vmatpush1.msra.mxu0 0.0
        %1282 = vmatprep.subr.mxu0 0.0
        %1283 = vmatpush1.msra.mxu0 0.0
        %1284 = vmatprep.subr.mxu0 0.0
        %1285 = vmatpush1.msra.mxu0 0.0
        %1286 = vmatprep.subr.mxu0 0.0
        %1287 = vmatpush1.msra.mxu0 0.0
        %1288 = vmatprep.subr.mxu0 0.0
        %1289 = vmatpush1.msra.mxu0 0.0
        %1290 = vmatprep.subr.mxu0 0.0
        %1291 = vmatpush1.msra.mxu0 0.0
        %1292 = vmatprep.subr.mxu0 0.0
        %1293 = vmatpush1.msra.mxu0 0.0
        %1294 = vmatprep.subr.mxu0 0.0
        %1295 = vmatpush1.msra.mxu0 0.0
        %1296 = vmatprep.subr.mxu0 0.0
        %1297 = vmatpush1.msra.mxu0 0.0
        %1298 = vmatprep.subr.mxu0 0.0
        %1299 = vmatpush1.msra.mxu0 0.0
        %1300 = vmatprep.subr.mxu0 0.0
        %1301 = vmatpush1.msra.mxu0 0.0
        %1302 = vmatprep.subr.mxu0 0.0
        %1303 = vmatpush1.msra.mxu0 0.0
        %1304 = vmatprep.subr.mxu0 0.0
        %1305 = vmatpush1.msra.mxu0 0.0
        %1306 = vmatprep.subr.mxu0 0.0
        %1307 = vmatpush1.msra.mxu0 0.0
        %1308 = vmatprep.subr.mxu0 0.0
        %1309 = vmatpush1.msra.mxu0 0.0
        %1310 = vmatprep.subr.mxu0 0.0
        %1311 = vmatpush1.msra.mxu0 0.0
        %1312 = vmatprep.subr.mxu0 0.0
        %1313 = vmatpush1.msra.mxu0 0.0
        %1314 = vmatprep.subr.mxu0 0.0
        %1315 = vmatpush1.msra.mxu0 0.0
        %1316 = vmatprep.subr.mxu0 0.0
        %1317 = vmatpush1.msra.mxu0 0.0
        %1318 = vmatprep.subr.mxu0 0.0
        %1319 = vmatpush1.msra.mxu0 0.0
        %1320 = vmatprep.subr.mxu0 0.0
        %1321 = vmatpush1.msra.mxu0 0.0
        %1322 = vmatprep.subr.mxu0 0.0
        %1323 = vmatpush1.msra.mxu0 0.0
        %1324 = vmatprep.subr.mxu0 0.0
        %1325 = vmatpush1.msra.mxu0 0.0
        %1326 = vmatprep.mubr.f32.mxu0 0.0
        %1327 = vmatmul.mubr.f32.gmra.mrb[0].mxu0 %v1251
        %v1328 = vpop.f32.mrb[0].mxu0
        %v1329 = vadd.f32 %v1243, %v1328
        %v1330 = vpop.f32.mrb[0].mxu0
        %v1331 = vadd.f32 %v1247, %v1330
        %1332 = vmatprep.mubr.f32.mxu0 0.0
        %1333 = vmatmul.mubr.f32.gmra.mrb[0].mxu0 %v1254
        %v1334 = vpop.f32.mrb[0].mxu0
        %v1335 = vadd.f32 %v1243, %v1334
        %v1336 = vpop.f32.mrb[0].mxu0
        %v1337 = vadd.f32 %v1247, %v1336
        %1338 = vmatprep.mubr.f32.mxu0 0.0
        %1339 = vmatmul.mubr.f32.gmra.mrb[0].mxu0 %v1257
        %v1340 = vpop.f32.mrb[0].mxu0
        %v1341 = vadd.f32 %v1243, %v1340
        %v1342 = vpop.f32.mrb[0].mxu0
        %v1343 = vadd.f32 %v1247, %v1342
        %1344 = vmatprep.mubr.f32.mxu0 0.0
        %1345 = vmatmul.mubr.f32.gmra.mrb[0].mxu0 %v1260
        %v1346 = vpop.f32.mrb[0].mxu0
        %v1347 = vadd.f32 %v1243, %v1346
        %v1348 = vpop.f32.mrb[0].mxu0
        %v1349 = vadd.f32 %v1247, %v1348
        %1350 = vdwg.mxu0
        %1355 = vrot.lane.b32.xlu0 %v1329, 112
        %v1356 = vpop.permute.xlu0 %1355
        %1357 = vrot.lane.b32.xlu0 %v1335, 112
        %v1358 = vpop.permute.xlu0 %1357
        %1359 = vrot.lane.b32.xlu0 %v1341, 112
        %v1360 = vpop.permute.xlu0 %1359
        %1361 = vrot.lane.b32.xlu0 %v1347, 112
        %v1362 = vpop.permute.xlu0 %1361
        %1363 = vrot.lane.b32.xlu0 %v1329, 96
        %v1364 = vpop.permute.xlu0 %1363
        %1365 = vrot.lane.b32.xlu0 %v1335, 96
        %v1366 = vpop.permute.xlu0 %1365
        %1367 = vrot.lane.b32.xlu0 %v1341, 96
        %v1368 = vpop.permute.xlu0 %1367
        %1369 = vrot.lane.b32.xlu0 %v1347, 96
        %v1370 = vpop.permute.xlu0 %1369
        %1371 = vrot.lane.b32.xlu0 %v1329, 80
        %v1372 = vpop.permute.xlu0 %1371
        %1373 = vrot.lane.b32.xlu0 %v1335, 80
        %v1374 = vpop.permute.xlu0 %1373
        %1375 = vrot.lane.b32.xlu0 %v1341, 80
        %v1376 = vpop.permute.xlu0 %1375
        %1377 = vrot.lane.b32.xlu0 %v1347, 80
        %v1378 = vpop.permute.xlu0 %1377
        %1383 = vrot.lane.b32.xlu0 %v1331, 112
        %v1384 = vpop.permute.xlu0 %1383
        %1385 = vrot.lane.b32.xlu0 %v1337, 112
        %v1386 = vpop.permute.xlu0 %1385
        %1387 = vrot.lane.b32.xlu0 %v1343, 112
        %v1388 = vpop.permute.xlu0 %1387
        %1389 = vrot.lane.b32.xlu0 %v1349, 112
        %v1390 = vpop.permute.xlu0 %1389
        %1395 = vrot.lane.b32.xlu0 %v1331, 96
        %v1396 = vpop.permute.xlu0 %1395
        %1397 = vrot.lane.b32.xlu0 %v1337, 96
        %v1398 = vpop.permute.xlu0 %1397
        %1399 = vrot.lane.b32.xlu0 %v1343, 96
        %v1400 = vpop.permute.xlu0 %1399
        %1401 = vrot.lane.b32.xlu0 %v1349, 96
        %v1402 = vpop.permute.xlu0 %1401
        %1407 = vrot.lane.b32.xlu0 %v1331, 80
        %v1408 = vpop.permute.xlu0 %1407
        %1409 = vrot.lane.b32.xlu0 %v1337, 80
        %v1410 = vpop.permute.xlu0 %1409
        %1411 = vrot.lane.b32.xlu0 %v1343, 80
        %v1412 = vpop.permute.xlu0 %1411
        %1413 = vrot.lane.b32.xlu0 %v1349, 80
        %v1414 = vpop.permute.xlu0 %1413
        %1419 = vrot.lane.b32.xlu0 %v1329, 64
        %v1420 = vpop.permute.xlu0 %1419
        %1421 = vrot.lane.b32.xlu0 %v1335, 64
        %v1422 = vpop.permute.xlu0 %1421
        %1423 = vrot.lane.b32.xlu0 %v1356, 64
        %v1424 = vpop.permute.xlu0 %1423
        %1425 = vrot.lane.b32.xlu0 %v1358, 64
        %v1426 = vpop.permute.xlu0 %1425
        %1427 = vrot.lane.b32.xlu0 %v1364, 64
        %v1428 = vpop.permute.xlu0 %1427
        %1429 = vrot.lane.b32.xlu0 %v1366, 64
        %v1430 = vpop.permute.xlu0 %1429
        %1431 = vrot.lane.b32.xlu0 %v1372, 64
        %v1432 = vpop.permute.xlu0 %1431
        %1433 = vrot.lane.b32.xlu0 %v1374, 64
        %v1434 = vpop.permute.xlu0 %1433
        %1435 = vrot.lane.b32.xlu0 %v1341, 64
        %v1436 = vpop.permute.xlu0 %1435
        %1437 = vrot.lane.b32.xlu0 %v1347, 64
        %v1438 = vpop.permute.xlu0 %1437
        %1439 = vrot.lane.b32.xlu0 %v1360, 64
        %v1440 = vpop.permute.xlu0 %1439
        %1441 = vrot.lane.b32.xlu0 %v1362, 64
        %v1442 = vpop.permute.xlu0 %1441
        %1443 = vrot.lane.b32.xlu0 %v1368, 64
        %v1444 = vpop.permute.xlu0 %1443
        %1445 = vrot.lane.b32.xlu0 %v1370, 64
        %v1446 = vpop.permute.xlu0 %1445
        %1447 = vrot.lane.b32.xlu0 %v1376, 64
        %v1448 = vpop.permute.xlu0 %1447
        %1449 = vrot.lane.b32.xlu0 %v1378, 64
        %v1450 = vpop.permute.xlu0 %1449
        %vm1451 = vcmask 130048
        %v1452 = vsel %vm1451, %v1329, 0
        %v1454 = vsel %vm1451, %v1335, 0
        %v1456 = vsel %vm1451, %v1356, 0
        %v1458 = vsel %vm1451, %v1358, 0
        %v1460 = vsel %vm1451, %v1364, 0
        %v1462 = vsel %vm1451, %v1366, 0
        %v1464 = vsel %vm1451, %v1372, 0
        %v1466 = vsel %vm1451, %v1374, 0
        %v1468 = vsel %vm1451, %v1341, 0
        %v1470 = vsel %vm1451, %v1347, 0
        %v1472 = vsel %vm1451, %v1360, 0
        %v1474 = vsel %vm1451, %v1362, 0
        %v1476 = vsel %vm1451, %v1368, 0
        %v1478 = vsel %vm1451, %v1370, 0
        %v1480 = vsel %vm1451, %v1376, 0
        %v1482 = vsel %vm1451, %v1378, 0
        %v1484 = vsel %vm1451, %v1420, 0
        %v1486 = vsel %vm1451, %v1422, 0
        %v1488 = vsel %vm1451, %v1424, 0
        %v1490 = vsel %vm1451, %v1426, 0
        %v1492 = vsel %vm1451, %v1428, 0
        %v1494 = vsel %vm1451, %v1430, 0
        %v1496 = vsel %vm1451, %v1432, 0
        %v1498 = vsel %vm1451, %v1434, 0
        %v1500 = vsel %vm1451, %v1436, 0
        %v1502 = vsel %vm1451, %v1438, 0
        %v1504 = vsel %vm1451, %v1440, 0
        %v1506 = vsel %vm1451, %v1442, 0
        %v1508 = vsel %vm1451, %v1444, 0
        %v1510 = vsel %vm1451, %v1446, 0
        %v1512 = vsel %vm1451, %v1448, 0
        %v1514 = vsel %vm1451, %v1450, 0
        %1516 = vmatprep.subr.mxu0 0.0
        %1517 = vmatpush1.xpose.msra.mxu0 %v1484
        %1518 = vmatprep.subr.mxu0 0.0
        %1519 = vmatpush1.xpose.msra.mxu0 %v1486
        %1520 = vmatprep.subr.mxu0 0.0
        %1521 = vmatpush1.xpose.msra.mxu0 %v1488
        %1522 = vmatprep.subr.mxu0 0.0
        %1523 = vmatpush1.xpose.msra.mxu0 %v1490
        %1524 = vmatprep.subr.mxu0 0.0
        %1525 = vmatpush1.xpose.msra.mxu0 %v1492
        %1526 = vmatprep.subr.mxu0 0.0
        %1527 = vmatpush1.xpose.msra.mxu0 %v1494
        %1528 = vmatprep.subr.mxu0 0.0
        %1529 = vmatpush1.xpose.msra.mxu0 %v1496
        %1530 = vmatprep.subr.mxu0 0.0
        %1531 = vmatpush1.xpose.msra.mxu0 %v1498
        %1532 = vmatprep.subr.mxu0 0.0
        %1533 = vmatpush1.xpose.msra.mxu0 %v1500
        %1534 = vmatprep.subr.mxu0 0.0
        %1535 = vmatpush1.xpose.msra.mxu0 %v1502
        %1536 = vmatprep.subr.mxu0 0.0
        %1537 = vmatpush1.xpose.msra.mxu0 %v1504
        %1538 = vmatprep.subr.mxu0 0.0
        %1539 = vmatpush1.xpose.msra.mxu0 %v1506
        %1540 = vmatprep.subr.mxu0 0.0
        %1541 = vmatpush1.xpose.msra.mxu0 %v1508
        %1542 = vmatprep.subr.mxu0 0.0
        %1543 = vmatpush1.xpose.msra.mxu0 %v1510
        %1544 = vmatprep.subr.mxu0 0.0
        %1545 = vmatpush1.xpose.msra.mxu0 %v1512
        %1546 = vmatprep.subr.mxu0 0.0
        %1547 = vmatpush1.xpose.msra.mxu0 %v1514
        %1548 = vmatprep.subr.mxu0 0.0
        %1549 = vmatpush1.xpose.msra.mxu0 0.0
        %1550 = vmatprep.subr.mxu0 0.0
        %1551 = vmatpush1.xpose.msra.mxu0 0.0
        %1552 = vmatprep.subr.mxu0 0.0
        %1553 = vmatpush1.xpose.msra.mxu0 0.0
        %1554 = vmatprep.subr.mxu0 0.0
        %1555 = vmatpush1.xpose.msra.mxu0 0.0
        %1556 = vmatprep.subr.mxu0 0.0
        %1557 = vmatpush1.xpose.msra.mxu0 0.0
        %1558 = vmatprep.subr.mxu0 0.0
        %1559 = vmatpush1.xpose.msra.mxu0 0.0
        %1560 = vmatprep.subr.mxu0 0.0
        %1561 = vmatpush1.xpose.msra.mxu0 0.0
        %1562 = vmatprep.subr.mxu0 0.0
        %1563 = vmatpush1.xpose.msra.mxu0 0.0
        %1564 = vmatprep.subr.mxu0 0.0
        %1565 = vmatpush1.xpose.msra.mxu0 0.0
        %1566 = vmatprep.subr.mxu0 0.0
        %1567 = vmatpush1.xpose.msra.mxu0 0.0
        %1568 = vmatprep.subr.mxu0 0.0
        %1569 = vmatpush1.xpose.msra.mxu0 0.0
        %1570 = vmatprep.subr.mxu0 0.0
        %1571 = vmatpush1.xpose.msra.mxu0 0.0
        %1572 = vmatprep.subr.mxu0 0.0
        %1573 = vmatpush1.xpose.msra.mxu0 0.0
        %1574 = vmatprep.subr.mxu0 0.0
        %1575 = vmatpush1.xpose.msra.mxu0 0.0
        %1576 = vmatprep.subr.mxu0 0.0
        %1577 = vmatpush1.xpose.msra.mxu0 0.0
        %1578 = vmatprep.subr.mxu0 0.0
        %1579 = vmatpush1.xpose.msra.mxu0 0.0
        %1580 = vmatprep.mubr.f32.mxu0 0.0
        %1581 = vmatmul.mubr.f32.gmra.mrb[0].mxu0 %v1452
        %v1582 = vpop.f32.mrb[0].mxu0
        %v1583 = vadd.f32 0.0, %v1582
        %v1584 = vpop.f32.mrb[0].mxu0
        %1585 = vmatprep.mubr.f32.mxu0 0.0
        %1586 = vmatmul.mubr.f32.gmra.mrb[0].mxu0 %v1454
        %v1587 = vpop.f32.mrb[0].mxu0
        %v1588 = vadd.f32 0.0, %v1587
        %v1589 = vpop.f32.mrb[0].mxu0
        %1590 = vmatprep.mubr.f32.mxu0 0.0
        %1591 = vmatmul.mubr.f32.gmra.mrb[0].mxu0 %v1456
        %v1592 = vpop.f32.mrb[0].mxu0
        %v1593 = vadd.f32 0.0, %v1592
        %v1594 = vpop.f32.mrb[0].mxu0
        %1595 = vmatprep.mubr.f32.mxu0 0.0
        %1596 = vmatmul.mubr.f32.gmra.mrb[0].mxu0 %v1458
        %v1597 = vpop.f32.mrb[0].mxu0
        %v1598 = vadd.f32 0.0, %v1597
        %v1599 = vpop.f32.mrb[0].mxu0
        %1600 = vmatprep.mubr.f32.mxu0 0.0
        %1601 = vmatmul.mubr.f32.gmra.mrb[0].mxu0 %v1460
        %v1602 = vpop.f32.mrb[0].mxu0
        %v1603 = vadd.f32 0.0, %v1602
        %v1604 = vpop.f32.mrb[0].mxu0
        %1605 = vmatprep.mubr.f32.mxu0 0.0
        %1606 = vmatmul.mubr.f32.gmra.mrb[0].mxu0 %v1462
        %v1607 = vpop.f32.mrb[0].mxu0
        %v1608 = vadd.f32 0.0, %v1607
        %v1609 = vpop.f32.mrb[0].mxu0
        %1610 = vmatprep.mubr.f32.mxu0 0.0
        %1611 = vmatmul.mubr.f32.gmra.mrb[0].mxu0 %v1464
        %v1612 = vpop.f32.mrb[0].mxu0
        %v1613 = vadd.f32 0.0, %v1612
        %v1614 = vpop.f32.mrb[0].mxu0
        %1615 = vmatprep.mubr.f32.mxu0 0.0
        %1616 = vmatmul.mubr.f32.gmra.mrb[0].mxu0 %v1466
        %v1617 = vpop.f32.mrb[0].mxu0
        %v1618 = vadd.f32 0.0, %v1617
        %v1619 = vpop.f32.mrb[0].mxu0
        %1620 = vmatprep.mubr.f32.mxu0 0.0
        %1621 = vmatmul.mubr.f32.gmra.mrb[0].mxu0 %v1468
        %v1622 = vpop.f32.mrb[0].mxu0
        %v1623 = vadd.f32 0.0, %v1622
        %v1624 = vpop.f32.mrb[0].mxu0
        %1625 = vmatprep.mubr.f32.mxu0 0.0
        %1626 = vmatmul.mubr.f32.gmra.mrb[0].mxu0 %v1470
        %v1627 = vpop.f32.mrb[0].mxu0
        %v1628 = vadd.f32 0.0, %v1627
        %v1629 = vpop.f32.mrb[0].mxu0
        %1630 = vmatprep.mubr.f32.mxu0 0.0
        %1631 = vmatmul.mubr.f32.gmra.mrb[0].mxu0 %v1472
        %v1632 = vpop.f32.mrb[0].mxu0
        %v1633 = vadd.f32 0.0, %v1632
        %v1634 = vpop.f32.mrb[0].mxu0
        %1635 = vmatprep.mubr.f32.mxu0 0.0
        %1636 = vmatmul.mubr.f32.gmra.mrb[0].mxu0 %v1474
        %v1637 = vpop.f32.mrb[0].mxu0
        %v1638 = vadd.f32 0.0, %v1637
        %v1639 = vpop.f32.mrb[0].mxu0
        %1640 = vmatprep.mubr.f32.mxu0 0.0
        %1641 = vmatmul.mubr.f32.gmra.mrb[0].mxu0 %v1476
        %v1642 = vpop.f32.mrb[0].mxu0
        %v1643 = vadd.f32 0.0, %v1642
        %v1644 = vpop.f32.mrb[0].mxu0
        %1645 = vmatprep.mubr.f32.mxu0 0.0
        %1646 = vmatmul.mubr.f32.gmra.mrb[0].mxu0 %v1478
        %v1647 = vpop.f32.mrb[0].mxu0
        %v1648 = vadd.f32 0.0, %v1647
        %v1649 = vpop.f32.mrb[0].mxu0
        %1650 = vmatprep.mubr.f32.mxu0 0.0
        %1651 = vmatmul.mubr.f32.gmra.mrb[0].mxu0 %v1480
        %v1652 = vpop.f32.mrb[0].mxu0
        %v1653 = vadd.f32 0.0, %v1652
        %v1654 = vpop.f32.mrb[0].mxu0
        %1655 = vmatprep.mubr.f32.mxu0 0.0
        %1656 = vmatmul.mubr.f32.gmra.mrb[0].mxu0 %v1482
        %v1657 = vpop.f32.mrb[0].mxu0
        %v1658 = vadd.f32 0.0, %v1657
        %v1659 = vpop.f32.mrb[0].mxu0
        %1660 = vdwg.mxu0
        %v1661 = vmul.f32 %v1583, 0.25
        %v1662 = vmul.f32 %v1588, 0.25
        %v1663 = vmul.f32 %v1593, 0.25
        %v1664 = vmul.f32 %v1598, 0.25
        %v1665 = vmul.f32 %v1603, 0.25
        %v1666 = vmul.f32 %v1608, 0.25
        %v1667 = vmul.f32 %v1613, 0.25
        %v1668 = vmul.f32 %v1618, 0.25
        %v1669 = vmul.f32 %v1623, 0.25
        %v1670 = vmul.f32 %v1628, 0.25
        %v1671 = vmul.f32 %v1633, 0.25
        %v1672 = vmul.f32 %v1638, 0.25
        %v1673 = vmul.f32 %v1643, 0.25
        %v1674 = vmul.f32 %v1648, 0.25
        %v1675 = vmul.f32 %v1653, 0.25
        %v1676 = vmul.f32 %v1658, 0.25
        %v1677 = vld [vmem:[#allocation3] sm:$0xff]
        %v1678 = vld [vmem:[#allocation3 + $0x8] sm:$0xff]
        %v1679 = vld [vmem:[#allocation3 + $0x10] sm:$0xff]
        %v1680 = vld [vmem:[#allocation3 + $0x18] sm:$0xff]
        %v1681 = vld [vmem:[#allocation3 + $0x20] sm:$0xff]
        %v1682 = vld [vmem:[#allocation3 + $0x28] sm:$0xff]
        %v1683 = vld [vmem:[#allocation3 + $0x30] sm:$0xff]
        %v1684 = vld [vmem:[#allocation3 + $0x38] sm:$0xff]
        %v1685 = vld [vmem:[#allocation3 + $0x40] sm:$0xff]
        %v1686 = vld [vmem:[#allocation3 + $0x48] sm:$0xff]
        %v1687 = vld [vmem:[#allocation3 + $0x50] sm:$0xff]
        %v1688 = vld [vmem:[#allocation3 + $0x58] sm:$0xff]
        %v1689 = vld [vmem:[#allocation3 + $0x60] sm:$0xff]
        %v1690 = vld [vmem:[#allocation3 + $0x68] sm:$0xff]
        %v1691 = vld [vmem:[#allocation3 + $0x70] sm:$0xff]
        %v1692 = vld [vmem:[#allocation3 + $0x78] sm:$0xff]
        %v1693 = vadd.f32 %v1661, %v1677
        %v1694 = vadd.f32 %v1662, %v1678
        %v1695 = vadd.f32 %v1663, %v1679
        %v1696 = vadd.f32 %v1664, %v1680
        %v1697 = vadd.f32 %v1665, %v1681
        %v1698 = vadd.f32 %v1666, %v1682
        %v1699 = vadd.f32 %v1667, %v1683
        %v1700 = vadd.f32 %v1668, %v1684
        %v1701 = vadd.f32 %v1669, %v1685
        %v1702 = vadd.f32 %v1670, %v1686
        %v1703 = vadd.f32 %v1671, %v1687
        %v1704 = vadd.f32 %v1672, %v1688
        %v1705 = vadd.f32 %v1673, %v1689
        %v1706 = vadd.f32 %v1674, %v1690
        %v1707 = vadd.f32 %v1675, %v1691
        %v1708 = vadd.f32 %v1676, %v1692
        %1709 = vmax.xlane.f32.xlu0 %v1693
        %v1710 = vpop.xlane.xlu0 %1709
        %1711 = vmax.xlane.f32.xlu0 %v1694
        %v1712 = vpop.xlane.xlu0 %1711
        %1713 = vmax.xlane.f32.xlu0 %v1695
        %v1714 = vpop.xlane.xlu0 %1713
        %1715 = vmax.xlane.f32.xlu0 %v1696
        %v1716 = vpop.xlane.xlu0 %1715
        %1717 = vmax.xlane.f32.xlu0 %v1697
        %v1718 = vpop.xlane.xlu0 %1717
        %1719 = vmax.xlane.f32.xlu0 %v1698
        %v1720 = vpop.xlane.xlu0 %1719
        %1721 = vmax.xlane.f32.xlu0 %v1699
        %v1722 = vpop.xlane.xlu0 %1721
        %1723 = vmax.xlane.f32.xlu0 %v1700
        %v1724 = vpop.xlane.xlu0 %1723
        %1725 = vmax.xlane.f32.xlu0 %v1701
        %v1726 = vpop.xlane.xlu0 %1725
        %1727 = vmax.xlane.f32.xlu0 %v1702
        %v1728 = vpop.xlane.xlu0 %1727
        %1729 = vmax.xlane.f32.xlu0 %v1703
        %v1730 = vpop.xlane.xlu0 %1729
        %1731 = vmax.xlane.f32.xlu0 %v1704
        %v1732 = vpop.xlane.xlu0 %1731
        %1733 = vmax.xlane.f32.xlu0 %v1705
        %v1734 = vpop.xlane.xlu0 %1733
        %1735 = vmax.xlane.f32.xlu0 %v1706
        %v1736 = vpop.xlane.xlu0 %1735
        %1737 = vmax.xlane.f32.xlu0 %v1707
        %v1738 = vpop.xlane.xlu0 %1737
        %1739 = vmax.xlane.f32.xlu0 %v1708
        %v1740 = vpop.xlane.xlu0 %1739
        %v1741 = vsub.f32 %v1693, %v1710
        %v1742 = vsub.f32 %v1694, %v1712
        %v1743 = vsub.f32 %v1695, %v1714
        %v1744 = vsub.f32 %v1696, %v1716
        %v1745 = vsub.f32 %v1697, %v1718
        %v1746 = vsub.f32 %v1698, %v1720
        %v1747 = vsub.f32 %v1699, %v1722
        %v1748 = vsub.f32 %v1700, %v1724
        %v1749 = vsub.f32 %v1701, %v1726
        %v1750 = vsub.f32 %v1702, %v1728
        %v1751 = vsub.f32 %v1703, %v1730
        %v1752 = vsub.f32 %v1704, %v1732
        %v1753 = vsub.f32 %v1705, %v1734
        %v1754 = vsub.f32 %v1706, %v1736
        %v1755 = vsub.f32 %v1707, %v1738
        %v1756 = vsub.f32 %v1708, %v1740
        %v1757 = vmul.f32 %v1741, 1.442695
        %v1758 = vpow.pop %v1757
        %v1759 = vmul.f32 %v1742, 1.442695
        %v1760 = vpow.pop %v1759
        %v1761 = vmul.f32 %v1743, 1.442695
        %v1762 = vpow.pop %v1761
        %v1763 = vmul.f32 %v1744, 1.442695
        %v1764 = vpow.pop %v1763
        %v1765 = vmul.f32 %v1745, 1.442695
        %v1766 = vpow.pop %v1765
        %v1767 = vmul.f32 %v1746, 1.442695
        %v1768 = vpow.pop %v1767
        %v1769 = vmul.f32 %v1747, 1.442695
        %v1770 = vpow.pop %v1769
        %v1771 = vmul.f32 %v1748, 1.442695
        %v1772 = vpow.pop %v1771
        %v1773 = vmul.f32 %v1749, 1.442695
        %v1774 = vpow.pop %v1773
        %v1775 = vmul.f32 %v1750, 1.442695
        %v1776 = vpow.pop %v1775
        %v1777 = vmul.f32 %v1751, 1.442695
        %v1778 = vpow.pop %v1777
        %v1779 = vmul.f32 %v1752, 1.442695
        %v1780 = vpow.pop %v1779
        %v1781 = vmul.f32 %v1753, 1.442695
        %v1782 = vpow.pop %v1781
        %v1783 = vmul.f32 %v1754, 1.442695
        %v1784 = vpow.pop %v1783
        %v1785 = vmul.f32 %v1755, 1.442695
        %v1786 = vpow.pop %v1785
        %v1787 = vmul.f32 %v1756, 1.442695
        %v1788 = vpow.pop %v1787
        %1789 = vadd.xlane.f32.xlu0 %v1758
        %v1790 = vpop.xlane.xlu0 %1789
        %1791 = vadd.xlane.f32.xlu0 %v1760
        %v1792 = vpop.xlane.xlu0 %1791
        %1793 = vadd.xlane.f32.xlu0 %v1762
        %v1794 = vpop.xlane.xlu0 %1793
        %1795 = vadd.xlane.f32.xlu0 %v1764
        %v1796 = vpop.xlane.xlu0 %1795
        %1797 = vadd.xlane.f32.xlu0 %v1766
        %v1798 = vpop.xlane.xlu0 %1797
        %1799 = vadd.xlane.f32.xlu0 %v1768
        %v1800 = vpop.xlane.xlu0 %1799
        %1801 = vadd.xlane.f32.xlu0 %v1770
        %v1802 = vpop.xlane.xlu0 %1801
        %1803 = vadd.xlane.f32.xlu0 %v1772
        %v1804 = vpop.xlane.xlu0 %1803
        %1805 = vadd.xlane.f32.xlu0 %v1774
        %v1806 = vpop.xlane.xlu0 %1805
        %1807 = vadd.xlane.f32.xlu0 %v1776
        %v1808 = vpop.xlane.xlu0 %1807
        %1809 = vadd.xlane.f32.xlu0 %v1778
        %v1810 = vpop.xlane.xlu0 %1809
        %1811 = vadd.xlane.f32.xlu0 %v1780
        %v1812 = vpop.xlane.xlu0 %1811
        %1813 = vadd.xlane.f32.xlu0 %v1782
        %v1814 = vpop.xlane.xlu0 %1813
        %1815 = vadd.xlane.f32.xlu0 %v1784
        %v1816 = vpop.xlane.xlu0 %1815
        %1817 = vadd.xlane.f32.xlu0 %v1786
        %v1818 = vpop.xlane.xlu0 %1817
        %1819 = vadd.xlane.f32.xlu0 %v1788
        %v1820 = vpop.xlane.xlu0 %1819
        %v1821 = vrcp.pop %v1790
        %v1822 = vrcp.pop %v1792
        %v1823 = vrcp.pop %v1794
        %v1824 = vrcp.pop %v1796
        %v1825 = vrcp.pop %v1798
        %v1826 = vrcp.pop %v1800
        %v1827 = vrcp.pop %v1802
        %v1828 = vrcp.pop %v1804
        %v1829 = vrcp.pop %v1806
        %v1830 = vrcp.pop %v1808
        %v1831 = vrcp.pop %v1810
        %v1832 = vrcp.pop %v1812
        %v1833 = vrcp.pop %v1814
        %v1834 = vrcp.pop %v1816
        %v1835 = vrcp.pop %v1818
        %v1836 = vrcp.pop %v1820
        %v1837 = vmul.f32 %v1758, %v1821
        %v1838 = vmul.f32 %v1760, %v1822
        %v1839 = vmul.f32 %v1762, %v1823
        %v1840 = vmul.f32 %v1764, %v1824
        %v1841 = vmul.f32 %v1766, %v1825
        %v1842 = vmul.f32 %v1768, %v1826
        %v1843 = vmul.f32 %v1770, %v1827
        %v1844 = vmul.f32 %v1772, %v1828
        %v1845 = vmul.f32 %v1774, %v1829
        %v1846 = vmul.f32 %v1776, %v1830
        %v1847 = vmul.f32 %v1778, %v1831
        %v1848 = vmul.f32 %v1780, %v1832
        %v1849 = vmul.f32 %v1782, %v1833
        %v1850 = vmul.f32 %v1784, %v1834
        %v1851 = vmul.f32 %v1786, %v1835
        %v1852 = vmul.f32 %v1788, %v1836
        %1853 = vmatprep.subr.mxu0 0.0
        %1854 = vmatpush1.msra.mxu0 %v1331
        %1855 = vmatprep.subr.mxu0 0.0
        %1856 = vmatpush1.msra.mxu0 %v1337
        %1857 = vmatprep.subr.mxu0 0.0
        %1858 = vmatpush1.msra.mxu0 %v1384
        %1859 = vmatprep.subr.mxu0 0.0
        %1860 = vmatpush1.msra.mxu0 %v1386
        %1861 = vmatprep.subr.mxu0 0.0
        %1862 = vmatpush1.msra.mxu0 %v1396
        %1863 = vmatprep.subr.mxu0 0.0
        %1864 = vmatpush1.msra.mxu0 %v1398
        %1865 = vmatprep.subr.mxu0 0.0
        %1866 = vmatpush1.msra.mxu0 %v1408
        %1867 = vmatprep.subr.mxu0 0.0
        %1868 = vmatpush1.msra.mxu0 %v1410
        %1869 = vmatprep.subr.mxu0 0.0
        %1870 = vmatpush1.msra.mxu0 %v1343
        %1871 = vmatprep.subr.mxu0 0.0
        %1872 = vmatpush1.msra.mxu0 %v1349
        %1873 = vmatprep.subr.mxu0 0.0
        %1874 = vmatpush1.msra.mxu0 %v1388
        %1875 = vmatprep.subr.mxu0 0.0
        %1876 = vmatpush1.msra.mxu0 %v1390
        %1877 = vmatprep.subr.mxu0 0.0
        %1878 = vmatpush1.msra.mxu0 %v1400
        %1879 = vmatprep.subr.mxu0 0.0
        %1880 = vmatpush1.msra.mxu0 %v1402
        %1881 = vmatprep.subr.mxu0 0.0
        %1882 = vmatpush1.msra.mxu0 %v1412
        %1883 = vmatprep.subr.mxu0 0.0
        %1884 = vmatpush1.msra.mxu0 %v1414
        %1885 = vmatprep.subr.mxu0 0.0
        %1886 = vmatpush1.msra.mxu0 0.0
        %1887 = vmatprep.subr.mxu0 0.0
        %1888 = vmatpush1.msra.mxu0 0.0
        %1889 = vmatprep.subr.mxu0 0.0
        %1890 = vmatpush1.msra.mxu0 0.0
        %1891 = vmatprep.subr.mxu0 0.0
        %1892 = vmatpush1.msra.mxu0 0.0
        %1893 = vmatprep.subr.mxu0 0.0
        %1894 = vmatpush1.msra.mxu0 0.0
        %1895 = vmatprep.subr.mxu0 0.0
        %1896 = vmatpush1.msra.mxu0 0.0
        %1897 = vmatprep.subr.mxu0 0.0
        %1898 = vmatpush1.msra.mxu0 0.0
        %1899 = vmatprep.subr.mxu0 0.0
        %1900 = vmatpush1.msra.mxu0 0.0
        %1901 = vmatprep.subr.mxu0 0.0
        %1902 = vmatpush1.msra.mxu0 0.0
        %1903 = vmatprep.subr.mxu0 0.0
        %1904 = vmatpush1.msra.mxu0 0.0
        %1905 = vmatprep.subr.mxu0 0.0
        %1906 = vmatpush1.msra.mxu0 0.0
        %1907 = vmatprep.subr.mxu0 0.0
        %1908 = vmatpush1.msra.mxu0 0.0
        %1909 = vmatprep.subr.mxu0 0.0
        %1910 = vmatpush1.msra.mxu0 0.0
        %1911 = vmatprep.subr.mxu0 0.0
        %1912 = vmatpush1.msra.mxu0 0.0
        %1913 = vmatprep.subr.mxu0 0.0
        %1914 = vmatpush1.msra.mxu0 0.0
        %1915 = vmatprep.subr.mxu0 0.0
        %1916 = vmatpush1.msra.mxu0 0.0
        %1917 = vmatprep.mubr.f32.mxu0 0.0
        %1918 = vmatmul.mubr.f32.gmra.mrb[0].mxu0 %v1837
        %v1919 = vpop.f32.mrb[0].mxu0
        %v1920 = vadd.f32 0.0, %v1919
        %v1921 = vpop.f32.mrb[0].mxu0
        %1922 = vmatprep.mubr.f32.mxu0 0.0
        %1923 = vmatmul.mubr.f32.gmra.mrb[0].mxu0 %v1838
        %v1924 = vpop.f32.mrb[0].mxu0
        %v1925 = vadd.f32 0.0, %v1924
        %v1926 = vpop.f32.mrb[0].mxu0
        %1927 = vmatprep.mubr.f32.mxu0 0.0
        %1928 = vmatmul.mubr.f32.gmra.mrb[0].mxu0 %v1839
        %v1929 = vpop.f32.mrb[0].mxu0
        %v1930 = vadd.f32 0.0, %v1929
        %v1931 = vpop.f32.mrb[0].mxu0
        %1932 = vmatprep.mubr.f32.mxu0 0.0
        %1933 = vmatmul.mubr.f32.gmra.mrb[0].mxu0 %v1840
        %v1934 = vpop.f32.mrb[0].mxu0
        %v1935 = vadd.f32 0.0, %v1934
        %v1936 = vpop.f32.mrb[0].mxu0
        %1937 = vmatprep.mubr.f32.mxu0 0.0
        %1938 = vmatmul.mubr.f32.gmra.mrb[0].mxu0 %v1841
        %v1939 = vpop.f32.mrb[0].mxu0
        %v1940 = vadd.f32 0.0, %v1939
        %v1941 = vpop.f32.mrb[0].mxu0
        %1942 = vmatprep.mubr.f32.mxu0 0.0
        %1943 = vmatmul.mubr.f32.gmra.mrb[0].mxu0 %v1842
        %v1944 = vpop.f32.mrb[0].mxu0
        %v1945 = vadd.f32 0.0, %v1944
        %v1946 = vpop.f32.mrb[0].mxu0
        %1947 = vmatprep.mubr.f32.mxu0 0.0
        %1948 = vmatmul.mubr.f32.gmra.mrb[0].mxu0 %v1843
        %v1949 = vpop.f32.mrb[0].mxu0
        %v1950 = vadd.f32 0.0, %v1949
        %v1951 = vpop.f32.mrb[0].mxu0
        %1952 = vmatprep.mubr.f32.mxu0 0.0
        %1953 = vmatmul.mubr.f32.gmra.mrb[0].mxu0 %v1844
        %v1954 = vpop.f32.mrb[0].mxu0
        %v1955 = vadd.f32 0.0, %v1954
        %v1956 = vpop.f32.mrb[0].mxu0
        %1957 = vmatprep.mubr.f32.mxu0 0.0
        %1958 = vmatmul.mubr.f32.gmra.mrb[0].mxu0 %v1845
        %v1959 = vpop.f32.mrb[0].mxu0
        %v1960 = vadd.f32 0.0, %v1959
        %v1961 = vpop.f32.mrb[0].mxu0
        %1962 = vmatprep.mubr.f32.mxu0 0.0
        %1963 = vmatmul.mubr.f32.gmra.mrb[0].mxu0 %v1846
        %v1964 = vpop.f32.mrb[0].mxu0
        %v1965 = vadd.f32 0.0, %v1964
        %v1966 = vpop.f32.mrb[0].mxu0
        %1967 = vmatprep.mubr.f32.mxu0 0.0
        %1968 = vmatmul.mubr.f32.gmra.mrb[0].mxu0 %v1847
        %v1969 = vpop.f32.mrb[0].mxu0
        %v1970 = vadd.f32 0.0, %v1969
        %v1971 = vpop.f32.mrb[0].mxu0
        %1972 = vmatprep.mubr.f32.mxu0 0.0
        %1973 = vmatmul.mubr.f32.gmra.mrb[0].mxu0 %v1848
        %v1974 = vpop.f32.mrb[0].mxu0
        %v1975 = vadd.f32 0.0, %v1974
        %v1976 = vpop.f32.mrb[0].mxu0
        %1977 = vmatprep.mubr.f32.mxu0 0.0
        %1978 = vmatmul.mubr.f32.gmra.mrb[0].mxu0 %v1849
        %v1979 = vpop.f32.mrb[0].mxu0
        %v1980 = vadd.f32 0.0, %v1979
        %v1981 = vpop.f32.mrb[0].mxu0
        %1982 = vmatprep.mubr.f32.mxu0 0.0
        %1983 = vmatmul.mubr.f32.gmra.mrb[0].mxu0 %v1850
        %v1984 = vpop.f32.mrb[0].mxu0
        %v1985 = vadd.f32 0.0, %v1984
        %v1986 = vpop.f32.mrb[0].mxu0
        %1987 = vmatprep.mubr.f32.mxu0 0.0
        %1988 = vmatmul.mubr.f32.gmra.mrb[0].mxu0 %v1851
        %v1989 = vpop.f32.mrb[0].mxu0
        %v1990 = vadd.f32 0.0, %v1989
        %v1991 = vpop.f32.mrb[0].mxu0
        %1992 = vmatprep.mubr.f32.mxu0 0.0
        %1993 = vmatmul.mubr.f32.gmra.mrb[0].mxu0 %v1852
        %v1994 = vpop.f32.mrb[0].mxu0
        %v1995 = vadd.f32 0.0, %v1994
        %v1996 = vpop.f32.mrb[0].mxu0
        %1997 = vdwg.mxu0
        %2002 = vrot.lane.b32.xlu0 %v1930, 16
        %v2003 = vpop.permute.xlu0 %2002
        %2004 = vrot.lane.b32.xlu0 %v1935, 16
        %v2005 = vpop.permute.xlu0 %2004
        %2006 = vrot.lane.b32.xlu0 %v1970, 16
        %v2007 = vpop.permute.xlu0 %2006
        %2008 = vrot.lane.b32.xlu0 %v1975, 16
        %v2009 = vpop.permute.xlu0 %2008
        %2018 = vrot.lane.b32.xlu0 %v1940, 32
        %v2019 = vpop.permute.xlu0 %2018
        %2020 = vrot.lane.b32.xlu0 %v1945, 32
        %v2021 = vpop.permute.xlu0 %2020
        %2022 = vrot.lane.b32.xlu0 %v1980, 32
        %v2023 = vpop.permute.xlu0 %2022
        %2024 = vrot.lane.b32.xlu0 %v1985, 32
        %v2025 = vpop.permute.xlu0 %2024
        %2034 = vrot.lane.b32.xlu0 %v1950, 48
        %v2035 = vpop.permute.xlu0 %2034
        %2036 = vrot.lane.b32.xlu0 %v1955, 48
        %v2037 = vpop.permute.xlu0 %2036
        %2038 = vrot.lane.b32.xlu0 %v1990, 48
        %v2039 = vpop.permute.xlu0 %2038
        %2040 = vrot.lane.b32.xlu0 %v1995, 48
        %v2041 = vpop.permute.xlu0 %2040
        %v2046 = vsel %vm1451, %v1920, %v2003
        %v2047 = vsel %vm1451, %v1925, %v2005
        %v2048 = vsel %vm1451, %v1960, %v2007
        %v2049 = vsel %vm1451, %v1965, %v2009
        %vm2050 = vcmask 261120
        %v2051 = vsel %vm2050, %v2046, %v2019
        %v2052 = vsel %vm2050, %v2047, %v2021
        %v2053 = vsel %vm2050, %v2048, %v2023
        %v2054 = vsel %vm2050, %v2049, %v2025
        %vm2055 = vcmask 392192
        %v2056 = vsel %vm2055, %v2051, %v2035
        %v2057 = vsel %vm2055, %v2052, %v2037
        %v2058 = vsel %vm2055, %v2053, %v2039
        %v2059 = vsel %vm2055, %v2054, %v2041
        %v2060 = vld [vmem:[%s798] sm:$0xff]
        %v2061 = vld [vmem:[%s798 + $0x8] sm:$0xff]
        %v2062 = vld [vmem:[%s798 + $0x10] sm:$0xff]
        %v2063 = vld [vmem:[%s798 + $0x18] sm:$0xff]
        %v2064 = vld [vmem:[%s798 + $0x20] sm:$0xff]
        %v2065 = vld [vmem:[%s798 + $0x28] sm:$0xff]
        %v2066 = vld [vmem:[%s798 + $0x30] sm:$0xff]
        %v2067 = vld [vmem:[%s798 + $0x38] sm:$0xff]
        %v2068 = vld [vmem:[%s801] sm:$0x1]
        %v2070 = vlaneseq
        %v2071 = vshrl.u32 %v2070, 7
        %v2072 = vsub.s32 0, %v2071
        %v2073 = vrot.slane %v2068, %v2072
        %v2076 = vsel %vm1148, %v2056, 0
        %v2079 = vsel %vm1148, %v2057, 0
        %v2082 = vsel %vm1148, %v2058, 0
        %v2085 = vsel %vm1148, %v2059, 0
        %2087 = vmatprep.subr.mxu0 0.0
        %2088 = vmatpush1.msra.mxu0 %v2060
        %2089 = vmatprep.subr.mxu0 0.0
        %2090 = vmatpush1.msra.mxu0 %v2061
        %2091 = vmatprep.subr.mxu0 0.0
        %2092 = vmatpush1.msra.mxu0 %v2062
        %2093 = vmatprep.subr.mxu0 0.0
        %2094 = vmatpush1.msra.mxu0 %v2063
        %2095 = vmatprep.subr.mxu0 0.0
        %2096 = vmatpush1.msra.mxu0 %v2064
        %2097 = vmatprep.subr.mxu0 0.0
        %2098 = vmatpush1.msra.mxu0 %v2065
        %2099 = vmatprep.subr.mxu0 0.0
        %2100 = vmatpush1.msra.mxu0 %v2066
        %2101 = vmatprep.subr.mxu0 0.0
        %2102 = vmatpush1.msra.mxu0 %v2067
        %2103 = vmatprep.subr.mxu0 0.0
        %2104 = vmatpush1.msra.mxu0 0.0
        %2105 = vmatprep.subr.mxu0 0.0
        %2106 = vmatpush1.msra.mxu0 0.0
        %2107 = vmatprep.subr.mxu0 0.0
        %2108 = vmatpush1.msra.mxu0 0.0
        %2109 = vmatprep.subr.mxu0 0.0
        %2110 = vmatpush1.msra.mxu0 0.0
        %2111 = vmatprep.subr.mxu0 0.0
        %2112 = vmatpush1.msra.mxu0 0.0
        %2113 = vmatprep.subr.mxu0 0.0
        %2114 = vmatpush1.msra.mxu0 0.0
        %2115 = vmatprep.subr.mxu0 0.0
        %2116 = vmatpush1.msra.mxu0 0.0
        %2117 = vmatprep.subr.mxu0 0.0
        %2118 = vmatpush1.msra.mxu0 0.0
        %2119 = vmatprep.subr.mxu0 0.0
        %2120 = vmatpush1.msra.mxu0 0.0
        %2121 = vmatprep.subr.mxu0 0.0
        %2122 = vmatpush1.msra.mxu0 0.0
        %2123 = vmatprep.subr.mxu0 0.0
        %2124 = vmatpush1.msra.mxu0 0.0
        %2125 = vmatprep.subr.mxu0 0.0
        %2126 = vmatpush1.msra.mxu0 0.0
        %2127 = vmatprep.subr.mxu0 0.0
        %2128 = vmatpush1.msra.mxu0 0.0
        %2129 = vmatprep.subr.mxu0 0.0
        %2130 = vmatpush1.msra.mxu0 0.0
        %2131 = vmatprep.subr.mxu0 0.0
        %2132 = vmatpush1.msra.mxu0 0.0
        %2133 = vmatprep.subr.mxu0 0.0
        %2134 = vmatpush1.msra.mxu0 0.0
        %2135 = vmatprep.subr.mxu0 0.0
        %2136 = vmatpush1.msra.mxu0 0.0
        %2137 = vmatprep.subr.mxu0 0.0
        %2138 = vmatpush1.msra.mxu0 0.0
        %2139 = vmatprep.subr.mxu0 0.0
        %2140 = vmatpush1.msra.mxu0 0.0
        %2141 = vmatprep.subr.mxu0 0.0
        %2142 = vmatpush1.msra.mxu0 0.0
        %2143 = vmatprep.subr.mxu0 0.0
        %2144 = vmatpush1.msra.mxu0 0.0
        %2145 = vmatprep.subr.mxu0 0.0
        %2146 = vmatpush1.msra.mxu0 0.0
        %2147 = vmatprep.subr.mxu0 0.0
        %2148 = vmatpush1.msra.mxu0 0.0
        %2149 = vmatprep.subr.mxu0 0.0
        %2150 = vmatpush1.msra.mxu0 0.0
        %2151 = vmatprep.mubr.f32.mxu0 0.0
        %2152 = vmatmul.mubr.f32.gmra.mrb[0].mxu0 %v2076
        %v2153 = vpop.f32.mrb[0].mxu0
        %v2154 = vadd.f32 %v2073, %v2153
        %v2155 = vpop.f32.mrb[0].mxu0
        %2156 = vmatprep.mubr.f32.mxu0 0.0
        %2157 = vmatmul.mubr.f32.gmra.mrb[0].mxu0 %v2079
        %v2158 = vpop.f32.mrb[0].mxu0
        %v2159 = vadd.f32 %v2073, %v2158
        %v2160 = vpop.f32.mrb[0].mxu0
        %2161 = vmatprep.mubr.f32.mxu0 0.0
        %2162 = vmatmul.mubr.f32.gmra.mrb[0].mxu0 %v2082
        %v2163 = vpop.f32.mrb[0].mxu0
        %v2164 = vadd.f32 %v2073, %v2163
        %v2165 = vpop.f32.mrb[0].mxu0
        %2166 = vmatprep.mubr.f32.mxu0 0.0
        %2167 = vmatmul.mubr.f32.gmra.mrb[0].mxu0 %v2085
        %v2168 = vpop.f32.mrb[0].mxu0
        %v2169 = vadd.f32 %v2073, %v2168
        %v2170 = vpop.f32.mrb[0].mxu0
        %2171 = vdwg.mxu0
        %v2172 = vadd.f32 %v1142, %v2154
        %v2173 = vadd.f32 %v1143, %v2159
        %v2174 = vadd.f32 %v1144, %v2164
        %v2175 = vadd.f32 %v1145, %v2169
        %v2176 = vld [vmem:[%s804] sm:$0x1]
        %v2177 = vld [vmem:[%s674] sm:$0x1]
        %v2178 = vsel %vm1148, %v2172, 0.0
        %2179 = vadd.xlane.f32.xlu0 %v2178
        %v2180 = vpop.xlane.xlu0 %2179
        %v2181 = vsel %vm1148, %v2173, 0.0
        %2182 = vadd.xlane.f32.xlu0 %v2181
        %v2183 = vpop.xlane.xlu0 %2182
        %v2184 = vsel %vm1148, %v2174, 0.0
        %2185 = vadd.xlane.f32.xlu0 %v2184
        %v2186 = vpop.xlane.xlu0 %2185
        %v2187 = vsel %vm1148, %v2175, 0.0
        %2188 = vadd.xlane.f32.xlu0 %v2187
        %v2189 = vpop.xlane.xlu0 %2188
        %v2190 = vmul.f32 %v2180, %v1161
        %v2191 = vmul.f32 %v2183, %v1161
        %v2192 = vmul.f32 %v2186, %v1161
        %v2193 = vmul.f32 %v2189, %v1161
        %v2194 = vsub.f32 %v2172, %v2190
        %v2195 = vsub.f32 %v2173, %v2191
        %v2196 = vsub.f32 %v2174, %v2192
        %v2197 = vsub.f32 %v2175, %v2193
        %v2198 = vmul.f32 %v2194, %v2194
        %v2199 = vmul.f32 %v2195, %v2195
        %v2200 = vmul.f32 %v2196, %v2196
        %v2201 = vmul.f32 %v2197, %v2197
        %v2202 = vsel %vm1148, %v2198, 0.0
        %2203 = vadd.xlane.f32.xlu0 %v2202
        %v2204 = vpop.xlane.xlu0 %2203
        %v2205 = vsel %vm1148, %v2199, 0.0
        %2206 = vadd.xlane.f32.xlu0 %v2205
        %v2207 = vpop.xlane.xlu0 %2206
        %v2208 = vsel %vm1148, %v2200, 0.0
        %2209 = vadd.xlane.f32.xlu0 %v2208
        %v2210 = vpop.xlane.xlu0 %2209
        %v2211 = vsel %vm1148, %v2201, 0.0
        %2212 = vadd.xlane.f32.xlu0 %v2211
        %v2213 = vpop.xlane.xlu0 %2212
        %v2214 = vmul.f32 %v2204, %v1161
        %v2215 = vmul.f32 %v2207, %v1161
        %v2216 = vmul.f32 %v2210, %v1161
        %v2217 = vmul.f32 %v2213, %v1161
        %v2218 = vadd.f32 %v2214, 1e-05
        %v2219 = vadd.f32 %v2215, 1e-05
        %v2220 = vadd.f32 %v2216, 1e-05
        %v2221 = vadd.f32 %v2217, 1e-05
        %v2222 = vrsqrt.pop %v2218
        %v2223 = vrsqrt.pop %v2219
        %v2224 = vrsqrt.pop %v2220
        %v2225 = vrsqrt.pop %v2221
        %v2226 = vmul.f32 %v2194, %v2222
        %v2227 = vmul.f32 %v2195, %v2223
        %v2228 = vmul.f32 %v2196, %v2224
        %v2229 = vmul.f32 %v2197, %v2225
        %v2231 = vlaneseq
        %v2232 = vshrl.u32 %v2231, 7
        %v2233 = vsub.s32 0, %v2232
        %v2234 = vrot.slane %v2176, %v2233
        %v2236 = vmul.f32 %v2226, %v2234
        %v2237 = vmul.f32 %v2227, %v2234
        %v2238 = vmul.f32 %v2228, %v2234
        %v2239 = vmul.f32 %v2229, %v2234
        %v2241 = vlaneseq
        %v2242 = vshrl.u32 %v2241, 7
        %v2243 = vsub.s32 0, %v2242
        %v2244 = vrot.slane %v2177, %v2243
        %v2246 = vadd.f32 %v2236, %v2244
        %v2247 = vadd.f32 %v2237, %v2244
        %v2248 = vadd.f32 %v2238, %v2244
        %v2249 = vadd.f32 %v2239, %v2244
        %v2250 = vld [vmem:[%s809] sm:$0xff]
        %v2251 = vld [vmem:[%s809 + $0x8] sm:$0xff]
        %v2252 = vld [vmem:[%s809 + $0x10] sm:$0xff]
        %v2253 = vld [vmem:[%s809 + $0x18] sm:$0xff]
        %v2254 = vld [vmem:[%s809 + $0x20] sm:$0xff]
        %v2255 = vld [vmem:[%s809 + $0x28] sm:$0xff]
        %v2256 = vld [vmem:[%s809 + $0x30] sm:$0xff]
        %v2257 = vld [vmem:[%s809 + $0x38] sm:$0xff]
        %v2258 = vld [vmem:[%s809 + $0x40] sm:$0xff]
        %v2259 = vld [vmem:[%s809 + $0x48] sm:$0xff]
        %v2260 = vld [vmem:[%s809 + $0x50] sm:$0xff]
        %v2261 = vld [vmem:[%s809 + $0x58] sm:$0xff]
        %v2262 = vld [vmem:[%s809 + $0x60] sm:$0xff]
        %v2263 = vld [vmem:[%s809 + $0x68] sm:$0xff]
        %v2264 = vld [vmem:[%s809 + $0x70] sm:$0xff]
        %v2265 = vld [vmem:[%s809 + $0x78] sm:$0xff]
        %v2266 = vld [vmem:[%s813] sm:$0x3]
        %v2268 = vlaneseq
        %v2269 = vshrl.u32 %v2268, 7
        %v2270 = vsub.s32 0, %v2269
        %v2271 = vrot.slane %v2266, %v2270
        %v2272 = vlaneseq
        %v2273 = vshrl.u32 %v2272, 7
        %v2274 = vsub.s32 1, %v2273
        %v2275 = vrot.slane %v2266, %v2274
        %v2279 = vsel %vm1148, %v2246, 0
        %v2282 = vsel %vm1148, %v2247, 0
        %v2285 = vsel %vm1148, %v2248, 0
        %v2288 = vsel %vm1148, %v2249, 0
        %2290 = vmatprep.subr.mxu0 %v2251
        %2291 = vmatpush1.msra.mxu0 %v2250
        %2292 = vmatprep.subr.mxu0 %v2253
        %2293 = vmatpush1.msra.mxu0 %v2252
        %2294 = vmatprep.subr.mxu0 %v2255
        %2295 = vmatpush1.msra.mxu0 %v2254
        %2296 = vmatprep.subr.mxu0 %v2257
        %2297 = vmatpush1.msra.mxu0 %v2256
        %2298 = vmatprep.subr.mxu0 %v2259
        %2299 = vmatpush1.msra.mxu0 %v2258
        %2300 = vmatprep.subr.mxu0 %v2261
        %2301 = vmatpush1.msra.mxu0 %v2260
        %2302 = vmatprep.subr.mxu0 %v2263
        %2303 = vmatpush1.msra.mxu0 %v2262
        %2304 = vmatprep.subr.mxu0 %v2265
        %2305 = vmatpush1.msra.mxu0 %v2264
        %2306 = vmatprep.subr.mxu0 0.0
        %2307 = vmatpush1.msra.mxu0 0.0
        %2308 = vmatprep.subr.mxu0 0.0
        %2309 = vmatpush1.msra.mxu0 0.0
        %2310 = vmatprep.subr.mxu0 0.0
        %2311 = vmatpush1.msra.mxu0 0.0
        %2312 = vmatprep.subr.mxu0 0.0
        %2313 = vmatpush1.msra.mxu0 0.0
        %2314 = vmatprep.subr.mxu0 0.0
        %2315 = vmatpush1.msra.mxu0 0.0
        %2316 = vmatprep.subr.mxu0 0.0
        %2317 = vmatpush1.msra.mxu0 0.0
        %2318 = vmatprep.subr.mxu0 0.0
        %2319 = vmatpush1.msra.mxu0 0.0
        %2320 = vmatprep.subr.mxu0 0.0
        %2321 = vmatpush1.msra.mxu0 0.0
        %2322 = vmatprep.subr.mxu0 0.0
        %2323 = vmatpush1.msra.mxu0 0.0
        %2324 = vmatprep.subr.mxu0 0.0
        %2325 = vmatpush1.msra.mxu0 0.0
        %2326 = vmatprep.subr.mxu0 0.0
        %2327 = vmatpush1.msra.mxu0 0.0
        %2328 = vmatprep.subr.mxu0 0.0
        %2329 = vmatpush1.msra.mxu0 0.0
        %2330 = vmatprep.subr.mxu0 0.0
        %2331 = vmatpush1.msra.mxu0 0.0
        %2332 = vmatprep.subr.mxu0 0.0
        %2333 = vmatpush1.msra.mxu0 0.0
        %2334 = vmatprep.subr.mxu0 0.0
        %2335 = vmatpush1.msra.mxu0 0.0
        %2336 = vmatprep.subr.mxu0 0.0
        %2337 = vmatpush1.msra.mxu0 0.0
        %2338 = vmatprep.subr.mxu0 0.0
        %2339 = vmatpush1.msra.mxu0 0.0
        %2340 = vmatprep.subr.mxu0 0.0
        %2341 = vmatpush1.msra.mxu0 0.0
        %2342 = vmatprep.subr.mxu0 0.0
        %2343 = vmatpush1.msra.mxu0 0.0
        %2344 = vmatprep.subr.mxu0 0.0
        %2345 = vmatpush1.msra.mxu0 0.0
        %2346 = vmatprep.subr.mxu0 0.0
        %2347 = vmatpush1.msra.mxu0 0.0
        %2348 = vmatprep.subr.mxu0 0.0
        %2349 = vmatpush1.msra.mxu0 0.0
        %2350 = vmatprep.subr.mxu0 0.0
        %2351 = vmatpush1.msra.mxu0 0.0
        %2352 = vmatprep.subr.mxu0 0.0
        %2353 = vmatpush1.msra.mxu0 0.0
        %2354 = vmatprep.mubr.f32.mxu0 0.0
        %2355 = vmatmul.mubr.f32.gmra.mrb[0].mxu0 %v2279
        %v2356 = vpop.f32.mrb[0].mxu0
        %v2357 = vadd.f32 %v2271, %v2356
        %v2358 = vpop.f32.mrb[0].mxu0
        %v2359 = vadd.f32 %v2275, %v2358
        %2360 = vmatprep.mubr.f32.mxu0 0.0
        %2361 = vmatmul.mubr.f32.gmra.mrb[0].mxu0 %v2282
        %v2362 = vpop.f32.mrb[0].mxu0
        %v2363 = vadd.f32 %v2271, %v2362
        %v2364 = vpop.f32.mrb[0].mxu0
        %v2365 = vadd.f32 %v2275, %v2364
        %2366 = vmatprep.mubr.f32.mxu0 0.0
        %2367 = vmatmul.mubr.f32.gmra.mrb[0].mxu0 %v2285
        %v2368 = vpop.f32.mrb[0].mxu0
        %v2369 = vadd.f32 %v2271, %v2368
        %v2370 = vpop.f32.mrb[0].mxu0
        %v2371 = vadd.f32 %v2275, %v2370
        %2372 = vmatprep.mubr.f32.mxu0 0.0
        %2373 = vmatmul.mubr.f32.gmra.mrb[0].mxu0 %v2288
        %v2374 = vpop.f32.mrb[0].mxu0
        %v2375 = vadd.f32 %v2271, %v2374
        %v2376 = vpop.f32.mrb[0].mxu0
        %v2377 = vadd.f32 %v2275, %v2376
        %2378 = vdwg.mxu0
        %v2379 = vmul.f32 %v2357, 0.5
        %v2380 = vmul.f32 %v2359, 0.5
        %v2381 = vmul.f32 %v2363, 0.5
        %v2382 = vmul.f32 %v2365, 0.5
        %v2383 = vmul.f32 %v2369, 0.5
        %v2384 = vmul.f32 %v2371, 0.5
        %v2385 = vmul.f32 %v2375, 0.5
        %v2386 = vmul.f32 %v2377, 0.5
        %v2387 = vmul.f32 %v2357, 0.70710677
        %v2388 = vmul.f32 %v2359, 0.70710677
        %v2389 = vmul.f32 %v2363, 0.70710677
        %v2390 = vmul.f32 %v2365, 0.70710677
        %v2391 = vmul.f32 %v2369, 0.70710677
        %v2392 = vmul.f32 %v2371, 0.70710677
        %v2393 = vmul.f32 %v2375, 0.70710677
        %v2394 = vmul.f32 %v2377, 0.70710677
        %v2395 = verf.f32.pop %v2387
        %v2396 = verf.f32.pop %v2388
        %v2397 = verf.f32.pop %v2389
        %v2398 = verf.f32.pop %v2390
        %v2399 = verf.f32.pop %v2391
        %v2400 = verf.f32.pop %v2392
        %v2401 = verf.f32.pop %v2393
        %v2402 = verf.f32.pop %v2394
        %v2403 = vadd.f32 %v2395, 1.0
        %v2404 = vadd.f32 %v2396, 1.0
        %v2405 = vadd.f32 %v2397, 1.0
        %v2406 = vadd.f32 %v2398, 1.0
        %v2407 = vadd.f32 %v2399, 1.0
        %v2408 = vadd.f32 %v2400, 1.0
        %v2409 = vadd.f32 %v2401, 1.0
        %v2410 = vadd.f32 %v2402, 1.0
        %v2411 = vmul.f32 %v2379, %v2403
        %v2412 = vmul.f32 %v2380, %v2404
        %v2413 = vmul.f32 %v2381, %v2405
        %v2414 = vmul.f32 %v2382, %v2406
        %v2415 = vmul.f32 %v2383, %v2407
        %v2416 = vmul.f32 %v2384, %v2408
        %v2417 = vmul.f32 %v2385, %v2409
        %v2418 = vmul.f32 %v2386, %v2410
        %v2419 = vld [vmem:[%s818] sm:$0xff]
        %v2420 = vld [vmem:[%s818 + $0x8] sm:$0xff]
        %v2421 = vld [vmem:[%s818 + $0x10] sm:$0xff]
        %v2422 = vld [vmem:[%s818 + $0x18] sm:$0xff]
        %v2423 = vld [vmem:[%s818 + $0x20] sm:$0xff]
        %v2424 = vld [vmem:[%s818 + $0x28] sm:$0xff]
        %v2425 = vld [vmem:[%s818 + $0x30] sm:$0xff]
        %v2426 = vld [vmem:[%s818 + $0x38] sm:$0xff]
        %v2427 = vld [vmem:[%s818 + $0x40] sm:$0xff]
        %v2428 = vld [vmem:[%s818 + $0x48] sm:$0xff]
        %v2429 = vld [vmem:[%s818 + $0x50] sm:$0xff]
        %v2430 = vld [vmem:[%s818 + $0x58] sm:$0xff]
        %v2431 = vld [vmem:[%s818 + $0x60] sm:$0xff]
        %v2432 = vld [vmem:[%s818 + $0x68] sm:$0xff]
        %v2433 = vld [vmem:[%s818 + $0x70] sm:$0xff]
        %v2434 = vld [vmem:[%s818 + $0x78] sm:$0xff]
        %v2435 = vld [vmem:[%s818 + $0x80] sm:$0xff]
        %v2436 = vld [vmem:[%s818 + $0x88] sm:$0xff]
        %v2437 = vld [vmem:[%s818 + $0x90] sm:$0xff]
        %v2438 = vld [vmem:[%s818 + $0x98] sm:$0xff]
        %v2439 = vld [vmem:[%s818 + $0xa0] sm:$0xff]
        %v2440 = vld [vmem:[%s818 + $0xa8] sm:$0xff]
        %v2441 = vld [vmem:[%s818 + $0xb0] sm:$0xff]
        %v2442 = vld [vmem:[%s818 + $0xb8] sm:$0xff]
        %v2443 = vld [vmem:[%s818 + $0xc0] sm:$0xff]
        %v2444 = vld [vmem:[%s818 + $0xc8] sm:$0xff]
        %v2445 = vld [vmem:[%s818 + $0xd0] sm:$0xff]
        %v2446 = vld [vmem:[%s818 + $0xd8] sm:$0xff]
        %v2447 = vld [vmem:[%s818 + $0xe0] sm:$0xff]
        %v2448 = vld [vmem:[%s818 + $0xe8] sm:$0xff]
        %v2449 = vld [vmem:[%s818 + $0xf0] sm:$0xff]
        %v2450 = vld [vmem:[%s818 + $0xf8] sm:$0xff]
        %v2451 = vld [vmem:[%s682] sm:$0x1]
        %v2453 = vlaneseq
        %v2454 = vshrl.u32 %v2453, 7
        %v2455 = vsub.s32 0, %v2454
        %v2456 = vrot.slane %v2451, %v2455
        %2458 = vmatprep.subr.mxu0 0.0
        %2459 = vmatpush1.msra.mxu0 %v2419
        %2460 = vmatprep.subr.mxu0 0.0
        %2461 = vmatpush1.msra.mxu0 %v2420
        %2462 = vmatprep.subr.mxu0 0.0
        %2463 = vmatpush1.msra.mxu0 %v2421
        %2464 = vmatprep.subr.mxu0 0.0
        %2465 = vmatpush1.msra.mxu0 %v2422
        %2466 = vmatprep.subr.mxu0 0.0
        %2467 = vmatpush1.msra.mxu0 %v2423
        %2468 = vmatprep.subr.mxu0 0.0
        %2469 = vmatpush1.msra.mxu0 %v2424
        %2470 = vmatprep.subr.mxu0 0.0
        %2471 = vmatpush1.msra.mxu0 %v2425
        %2472 = vmatprep.subr.mxu0 0.0
        %2473 = vmatpush1.msra.mxu0 %v2426
        %2474 = vmatprep.subr.mxu0 0.0
        %2475 = vmatpush1.msra.mxu0 %v2427
        %2476 = vmatprep.subr.mxu0 0.0
        %2477 = vmatpush1.msra.mxu0 %v2428
        %2478 = vmatprep.subr.mxu0 0.0
        %2479 = vmatpush1.msra.mxu0 %v2429
        %2480 = vmatprep.subr.mxu0 0.0
        %2481 = vmatpush1.msra.mxu0 %v2430
        %2482 = vmatprep.subr.mxu0 0.0
        %2483 = vmatpush1.msra.mxu0 %v2431
        %2484 = vmatprep.subr.mxu0 0.0
        %2485 = vmatpush1.msra.mxu0 %v2432
        %2486 = vmatprep.subr.mxu0 0.0
        %2487 = vmatpush1.msra.mxu0 %v2433
        %2488 = vmatprep.subr.mxu0 0.0
        %2489 = vmatpush1.msra.mxu0 %v2434
        %2490 = vmatprep.subr.mxu0 0.0
        %2491 = vmatpush1.msra.mxu0 %v2435
        %2492 = vmatprep.subr.mxu0 0.0
        %2493 = vmatpush1.msra.mxu0 %v2436
        %2494 = vmatprep.subr.mxu0 0.0
        %2495 = vmatpush1.msra.mxu0 %v2437
        %2496 = vmatprep.subr.mxu0 0.0
        %2497 = vmatpush1.msra.mxu0 %v2438
        %2498 = vmatprep.subr.mxu0 0.0
        %2499 = vmatpush1.msra.mxu0 %v2439
        %2500 = vmatprep.subr.mxu0 0.0
        %2501 = vmatpush1.msra.mxu0 %v2440
        %2502 = vmatprep.subr.mxu0 0.0
        %2503 = vmatpush1.msra.mxu0 %v2441
        %2504 = vmatprep.subr.mxu0 0.0
        %2505 = vmatpush1.msra.mxu0 %v2442
        %2506 = vmatprep.subr.mxu0 0.0
        %2507 = vmatpush1.msra.mxu0 %v2443
        %2508 = vmatprep.subr.mxu0 0.0
        %2509 = vmatpush1.msra.mxu0 %v2444
        %2510 = vmatprep.subr.mxu0 0.0
        %2511 = vmatpush1.msra.mxu0 %v2445
        %2512 = vmatprep.subr.mxu0 0.0
        %2513 = vmatpush1.msra.mxu0 %v2446
        %2514 = vmatprep.subr.mxu0 0.0
        %2515 = vmatpush1.msra.mxu0 %v2447
        %2516 = vmatprep.subr.mxu0 0.0
        %2517 = vmatpush1.msra.mxu0 %v2448
        %2518 = vmatprep.subr.mxu0 0.0
        %2519 = vmatpush1.msra.mxu0 %v2449
        %2520 = vmatprep.subr.mxu0 0.0
        %2521 = vmatpush1.msra.mxu0 %v2450
        %2522 = vmatprep.mubr.f32.mxu0 %v2412
        %2523 = vmatmul.mubr.f32.gmra.mrb[0].mxu0 %v2411
        %v2524 = vpop.f32.mrb[0].mxu0
        %v2525 = vadd.f32 %v2456, %v2524
        %v2526 = vpop.f32.mrb[0].mxu0
        %2527 = vmatprep.mubr.f32.mxu0 %v2414
        %2528 = vmatmul.mubr.f32.gmra.mrb[0].mxu0 %v2413
        %v2529 = vpop.f32.mrb[0].mxu0
        %v2530 = vadd.f32 %v2456, %v2529
        %v2531 = vpop.f32.mrb[0].mxu0
        %2532 = vmatprep.mubr.f32.mxu0 %v2416
        %2533 = vmatmul.mubr.f32.gmra.mrb[0].mxu0 %v2415
        %v2534 = vpop.f32.mrb[0].mxu0
        %v2535 = vadd.f32 %v2456, %v2534
        %v2536 = vpop.f32.mrb[0].mxu0
        %2537 = vmatprep.mubr.f32.mxu0 %v2418
        %2538 = vmatmul.mubr.f32.gmra.mrb[0].mxu0 %v2417
        %v2539 = vpop.f32.mrb[0].mxu0
        %v2540 = vadd.f32 %v2456, %v2539
        %v2541 = vpop.f32.mrb[0].mxu0
        %2542 = vdwg.mxu0
        %v2543 = vadd.f32 %v2172, %v2525
        %v2544 = vadd.f32 %v2173, %v2530
        %v2545 = vadd.f32 %v2174, %v2535
        %v2546 = vadd.f32 %v2175, %v2540
        %2547 = vst.msk [vmem:[#allocation2] sm:$0xff] %vm1148, %v2543
        %2548 = vst.msk [vmem:[#allocation2 + $0x8] sm:$0xff] %vm1148, %v2544
        %2549 = vst.msk [vmem:[#allocation2 + $0x10] sm:$0xff] %vm1148, %v2545
        %2550 = vst.msk [vmem:[#allocation2 + $0x18] sm:$0xff] %vm1148, %v2546
        %p2551 = scmp.eq.s32.totalorder %s37, 1
        // Predicated region
        $region113: #{gpt_forward.1} parent=95 // pred_check
          %p2552 = pneg %p2551
        $region114: #{gpt_forward.1} parent=95 // pred_check_branch
          %2554 = sbr.rel (%p2552) target = $region116
        $region115: #{gpt_forward.1} parent=95 // pred_region
          %v2555 = vld [vmem:[%s16] sm:$0x1]
          %v2556 = vld [vmem:[#allocation9] sm:$0x1]
          %v2557 = vsel %vm1148, %v2543, 0.0
          %2558 = vadd.xlane.f32.xlu0 %v2557
          %v2559 = vpop.xlane.xlu0 %2558
          %v2560 = vsel %vm1148, %v2544, 0.0
          %2561 = vadd.xlane.f32.xlu0 %v2560
          %v2562 = vpop.xlane.xlu0 %2561
          %v2563 = vsel %vm1148, %v2545, 0.0
          %2564 = vadd.xlane.f32.xlu0 %v2563
          %v2565 = vpop.xlane.xlu0 %2564
          %v2566 = vsel %vm1148, %v2546, 0.0
          %2567 = vadd.xlane.f32.xlu0 %v2566
          %v2568 = vpop.xlane.xlu0 %2567
          %v2569 = vmul.f32 %v2559, %v1161
          %v2570 = vmul.f32 %v2562, %v1161
          %v2571 = vmul.f32 %v2565, %v1161
          %v2572 = vmul.f32 %v2568, %v1161
          %v2573 = vsub.f32 %v2543, %v2569
          %v2574 = vsub.f32 %v2544, %v2570
          %v2575 = vsub.f32 %v2545, %v2571
          %v2576 = vsub.f32 %v2546, %v2572
          %v2577 = vmul.f32 %v2573, %v2573
          %v2578 = vmul.f32 %v2574, %v2574
          %v2579 = vmul.f32 %v2575, %v2575
          %v2580 = vmul.f32 %v2576, %v2576
          %v2581 = vsel %vm1148, %v2577, 0.0
          %2582 = vadd.xlane.f32.xlu0 %v2581
          %v2583 = vpop.xlane.xlu0 %2582
          %v2584 = vsel %vm1148, %v2578, 0.0
          %2585 = vadd.xlane.f32.xlu0 %v2584
          %v2586 = vpop.xlane.xlu0 %2585
          %v2587 = vsel %vm1148, %v2579, 0.0
          %2588 = vadd.xlane.f32.xlu0 %v2587
          %v2589 = vpop.xlane.xlu0 %2588
          %v2590 = vsel %vm1148, %v2580, 0.0
          %2591 = vadd.xlane.f32.xlu0 %v2590
          %v2592 = vpop.xlane.xlu0 %2591
          %v2593 = vmul.f32 %v2583, %v1161
          %v2594 = vmul.f32 %v2586, %v1161
          %v2595 = vmul.f32 %v2589, %v1161
          %v2596 = vmul.f32 %v2592, %v1161
          %v2597 = vadd.f32 %v2593, 1e-05
          %v2598 = vadd.f32 %v2594, 1e-05
          %v2599 = vadd.f32 %v2595, 1e-05
          %v2600 = vadd.f32 %v2596, 1e-05
          %v2601 = vrsqrt.pop %v2597
          %v2602 = vrsqrt.pop %v2598
          %v2603 = vrsqrt.pop %v2599
          %v2604 = vrsqrt.pop %v2600
          %v2605 = vmul.f32 %v2573, %v2601
          %v2606 = vmul.f32 %v2574, %v2602
          %v2607 = vmul.f32 %v2575, %v2603
          %v2608 = vmul.f32 %v2576, %v2604
          %v2610 = vlaneseq
          %v2611 = vshrl.u32 %v2610, 7
          %v2612 = vsub.s32 0, %v2611
          %v2613 = vrot.slane %v2555, %v2612
          %v2615 = vmul.f32 %v2605, %v2613
          %v2616 = vmul.f32 %v2606, %v2613
          %v2617 = vmul.f32 %v2607, %v2613
          %v2618 = vmul.f32 %v2608, %v2613
          %v2620 = vlaneseq
          %v2621 = vshrl.u32 %v2620, 7
          %v2622 = vsub.s32 0, %v2621
          %v2623 = vrot.slane %v2556, %v2622
          %v2625 = vadd.f32 %v2615, %v2623
          %v2626 = vadd.f32 %v2616, %v2623
          %v2627 = vadd.f32 %v2617, %v2623
          %v2628 = vadd.f32 %v2618, %v2623
          %v2629 = vld [vmem:[%s18] sm:$0xff]
          %v2630 = vld [vmem:[%s18 + $0x8] sm:$0xff]
          %v2631 = vld [vmem:[%s18 + $0x10] sm:$0xff]
          %v2632 = vld [vmem:[%s18 + $0x18] sm:$0xff]
          %v2633 = vld [vmem:[%s18 + $0x20] sm:$0xff]
          %v2634 = vld [vmem:[%s18 + $0x28] sm:$0xff]
          %v2635 = vld [vmem:[%s18 + $0x30] sm:$0xff]
          %v2636 = vld [vmem:[%s18 + $0x38] sm:$0xff]
          %v2638 = vsel %vm1148, %v2625, 0
          %v2641 = vsel %vm1148, %v2626, 0
          %v2644 = vsel %vm1148, %v2627, 0
          %v2647 = vsel %vm1148, %v2628, 0
          %2649 = vmatprep.subr.mxu0 0.0
          %2650 = vmatpush1.msra.mxu0 %v2629
          %2651 = vmatprep.subr.mxu0 0.0
          %2652 = vmatpush1.msra.mxu0 %v2630
          %2653 = vmatprep.subr.mxu0 0.0
          %2654 = vmatpush1.msra.mxu0 %v2631
          %2655 = vmatprep.subr.mxu0 0.0
          %2656 = vmatpush1.msra.mxu0 %v2632
          %2657 = vmatprep.subr.mxu0 0.0
          %2658 = vmatpush1.msra.mxu0 %v2633
          %2659 = vmatprep.subr.mxu0 0.0
          %2660 = vmatpush1.msra.mxu0 %v2634
          %2661 = vmatprep.subr.mxu0 0.0
          %2662 = vmatpush1.msra.mxu0 %v2635
          %2663 = vmatprep.subr.mxu0 0.0
          %2664 = vmatpush1.msra.mxu0 %v2636
          %2665 = vmatprep.subr.mxu0 0.0
          %2666 = vmatpush1.msra.mxu0 0.0
          %2667 = vmatprep.subr.mxu0 0.0
          %2668 = vmatpush1.msra.mxu0 0.0
          %2669 = vmatprep.subr.mxu0 0.0
          %2670 = vmatpush1.msra.mxu0 0.0
          %2671 = vmatprep.subr.mxu0 0.0
          %2672 = vmatpush1.msra.mxu0 0.0
          %2673 = vmatprep.subr.mxu0 0.0
          %2674 = vmatpush1.msra.mxu0 0.0
          %2675 = vmatprep.subr.mxu0 0.0
          %2676 = vmatpush1.msra.mxu0 0.0
          %2677 = vmatprep.subr.mxu0 0.0
          %2678 = vmatpush1.msra.mxu0 0.0
          %2679 = vmatprep.subr.mxu0 0.0
          %2680 = vmatpush1.msra.mxu0 0.0
          %2681 = vmatprep.subr.mxu0 0.0
          %2682 = vmatpush1.msra.mxu0 0.0
          %2683 = vmatprep.subr.mxu0 0.0
          %2684 = vmatpush1.msra.mxu0 0.0
          %2685 = vmatprep.subr.mxu0 0.0
          %2686 = vmatpush1.msra.mxu0 0.0
          %2687 = vmatprep.subr.mxu0 0.0
          %2688 = vmatpush1.msra.mxu0 0.0
          %2689 = vmatprep.subr.mxu0 0.0
          %2690 = vmatpush1.msra.mxu0 0.0
          %2691 = vmatprep.subr.mxu0 0.0
          %2692 = vmatpush1.msra.mxu0 0.0
          %2693 = vmatprep.subr.mxu0 0.0
          %2694 = vmatpush1.msra.mxu0 0.0
          %2695 = vmatprep.subr.mxu0 0.0
          %2696 = vmatpush1.msra.mxu0 0.0
          %2697 = vmatprep.subr.mxu0 0.0
          %2698 = vmatpush1.msra.mxu0 0.0
          %2699 = vmatprep.subr.mxu0 0.0
          %2700 = vmatpush1.msra.mxu0 0.0
          %2701 = vmatprep.subr.mxu0 0.0
          %2702 = vmatpush1.msra.mxu0 0.0
          %2703 = vmatprep.subr.mxu0 0.0
          %2704 = vmatpush1.msra.mxu0 0.0
          %2705 = vmatprep.subr.mxu0 0.0
          %2706 = vmatpush1.msra.mxu0 0.0
          %2707 = vmatprep.subr.mxu0 0.0
          %2708 = vmatpush1.msra.mxu0 0.0
          %2709 = vmatprep.subr.mxu0 0.0
          %2710 = vmatpush1.msra.mxu0 0.0
          %2711 = vmatprep.subr.mxu0 0.0
          %2712 = vmatpush1.msra.mxu0 0.0
          %2713 = vmatprep.mubr.f32.mxu0 0.0
          %2714 = vmatmul.mubr.f32.gmra.mrb[0].mxu0 %v2638
          %v2715 = vpop.f32.mrb[0].mxu0
          %v2716 = vadd.f32 0.0, %v2715
          %v2717 = vpop.f32.mrb[0].mxu0
          %2718 = vmatprep.mubr.f32.mxu0 0.0
          %2719 = vmatmul.mubr.f32.gmra.mrb[0].mxu0 %v2641
          %v2720 = vpop.f32.mrb[0].mxu0
          %v2721 = vadd.f32 0.0, %v2720
          %v2722 = vpop.f32.mrb[0].mxu0
          %2723 = vmatprep.mubr.f32.mxu0 0.0
          %2724 = vmatmul.mubr.f32.gmra.mrb[0].mxu0 %v2644
          %v2725 = vpop.f32.mrb[0].mxu0
          %v2726 = vadd.f32 0.0, %v2725
          %v2727 = vpop.f32.mrb[0].mxu0
          %2728 = vmatprep.mubr.f32.mxu0 0.0
          %2729 = vmatmul.mubr.f32.gmra.mrb[0].mxu0 %v2647
          %v2730 = vpop.f32.mrb[0].mxu0
          %v2731 = vadd.f32 0.0, %v2730
          %v2732 = vpop.f32.mrb[0].mxu0
          %2733 = vdwg.mxu0
          %2734 = vst [vmem:[#allocation10] sm:$0xff] %v2716
          %2735 = vst [vmem:[#allocation10 + $0x8] sm:$0xff] %v2721
          %2736 = vst [vmem:[#allocation10 + $0x10] sm:$0xff] %v2726
          %2737 = vst [vmem:[#allocation10 + $0x18] sm:$0xff] %v2731
        $region116: #{gpt_forward.1} parent=95 // pred_fallthru
          _
        // Predicated region
        $region117: #{gpt_forward.1} parent=95 // pred_check
          %p2738 = pneg %p509
        $region118: #{gpt_forward.1} parent=95 // pred_check_branch
          %2740 = sbr.rel (%p2738) target = $region120
        $region119: #{gpt_forward.1} parent=95 // pred_region
          %s2742 = ssub.s32 512, 512
          %2743 = vsyncadd [#allocation6], %s2742
          %s2744 = sshll.u32 [#allocation10], 4
          %s2745 = int_to_ptr.vmem [resolvable:$true] %s2744
          %2750 = dma.vmem_to_hbm [thread:$0]  %s2745, 512, %s19, [#allocation6], 128, 128, 8
        $region120: #{gpt_forward.1} parent=95 // pred_fallthru
          _
        // Predicated region
        $region121: #{gpt_forward.1} parent=95 // pred_check
          %p2751 = pneg %p509
        $region122: #{gpt_forward.1} parent=95 // pred_check_branch
          %2753 = sbr.rel (%p2751) target = $region124
        $region123: #{gpt_forward.1} parent=95 // pred_region
          %2754 = dma.done [#allocation6], 512
        $region124: #{gpt_forward.1} parent=95 // pred_fallthru
          _
      $region96: #{gpt_forward.1} parent=5 // pred_fallthru
        _
      %p2755 = scmp.le.s32.totalorder 2, %s32
      // Predicated region
      $region125: #{gpt_forward.1} parent=5 // pred_check
        %p2756 = pneg %p2755
      $region126: #{gpt_forward.1} parent=5 // pred_check_branch
        %2758 = sbr.rel (%p2756) target = $region128
      $region127: #{gpt_forward.1} parent=5 // pred_region
        %s2759 = ssub.s32 %s32, 2
      $region128: #{gpt_forward.1} parent=5 // pred_fallthru
        _
    $region6: #{gpt_forward.1} parent=1 // loop_footer
      %s36 = sadd.s32 1, %s32
    $region7: #{gpt_forward.1} parent=1 // loop_footer_branch
      %31 = sbr.rel target = $region3
    $region8: #{gpt_forward.1} parent=1 // loop_exit
      _
    %2760 = vsyncpa [#allocation5], 1
    %s2761 = scalar_lea.sflag [#allocation5], 1
    %2762 = vsyncpa %s2761, 1
    %2763 = vsyncpa [#allocation8], 1
    %s2764 = scalar_lea.sflag [#allocation8], 1
    %2765 = vsyncpa %s2764, 1
    %2766 = vsyncpa [#allocation6], 1
    %s2767 = scalar_lea.sflag [#allocation6], 1
    %2768 = vsyncpa %s2767, 1

</llo_original>
